<compile_context>
chip_gen: v6e
topology: v6e:2x2x1
jax: 0.10.0
libtpu: 0.0.40
codegen_flags: <defaults>
</compile_context>

<pallas_src>
import math
import functools

import jax
import jax.numpy as jnp
from jax.experimental import pallas as pl
from jax.experimental.pallas import tpu as pltpu


_NEG_INF = -1e9  # large finite negative: avoids NaN from (-inf) - (-inf)


# ----------------------------- budgets / tiling -----------------------------

def _vmem_limit_bytes():
    try:
        info = pltpu.get_tpu_info()
        cap = getattr(info, "vmem_capacity_bytes", 0)
        if cap:
            return int(min(cap // 2, 96 * 1024 * 1024))
    except Exception:
        pass
    return 48 * 1024 * 1024


_VMEM_LIMIT = _vmem_limit_bytes()
_ROW_TARGET = 512 if _VMEM_LIMIT >= 64 * 1024 * 1024 else 256


def _mosaic(*sems):
    return pltpu.CompilerParams(dimension_semantics=tuple(sems),
                                vmem_limit_bytes=_VMEM_LIMIT)


def _pick_tile(dim, candidates):
    for t in candidates:
        if t <= dim and dim % t == 0:
            return t
    return dim


def _row_tile(m):
    if m <= _ROW_TARGET:
        return m
    return _pick_tile(m, (_ROW_TARGET, 512, 256, 128, 64, 32, 16, 8))


def _col_tile(n):
    if n <= _ROW_TARGET:
        return n
    return _pick_tile(n, (_ROW_TARGET, 512, 384, 256, 128))


def _k_tile(k):
    if k <= 512:
        return k
    return _pick_tile(k, (512, 256, 128))


def _seq_tile(length):
    if length <= 256:
        return length
    return _pick_tile(length, (256, 128, 64, 32, 16, 8))


# --------------------------- generic linear (K-tiled) -----------------------

def _linear_kernel(x_ref, w_ref, b_ref, o_ref, acc_ref):
    k = pl.program_id(2)

    @pl.when(k == 0)
    def _():
        acc_ref[...] = jnp.zeros_like(acc_ref)

    acc_ref[...] += jnp.dot(x_ref[...], w_ref[...],
                            preferred_element_type=jnp.float32)

    @pl.when(k == pl.num_programs(2) - 1)
    def _():
        o_ref[...] = (acc_ref[...] + b_ref[...]).astype(o_ref.dtype)


def linear(x2d, w_t, b=None):
    """x2d: (M, K); w_t: (K, N) pre-transposed; b: (N,) or None."""
    M, K = x2d.shape
    N = w_t.shape[1]
    if b is None:
        b = jnp.zeros((N,), x2d.dtype)
    tm, tn, tk = _row_tile(M), _col_tile(N), _k_tile(K)
    grid = (M // tm, N // tn, K // tk)
    return pl.pallas_call(
        _linear_kernel,
        grid=grid,
        out_shape=jax.ShapeDtypeStruct((M, N), x2d.dtype),
        in_specs=[pl.BlockSpec((tm, tk), lambda i, j, k: (i, k)),
                  pl.BlockSpec((tk, tn), lambda i, j, k: (k, j)),
                  pl.BlockSpec((1, tn), lambda i, j, k: (0, j))],
        out_specs=pl.BlockSpec((tm, tn), lambda i, j, k: (i, j)),
        scratch_shapes=[pltpu.VMEM((tm, tn), jnp.float32)],
        compiler_params=_mosaic("parallel", "parallel", "arbitrary"),
    )(x2d, w_t, b.reshape(1, N))


# --------------------- fused self-attention + add + LN ----------------------

def _self_attn_block_kernel(xq_ref, xf_ref, pb_ref, wq_ref, bq_ref,
                            wkv_ref, bkv_ref, wo_ref, bo_ref, g_ref, b_ref,
                            o_ref, *, num_heads, scale):
    xq = xq_ref[0].astype(jnp.float32)            # (tq, E) query rows
    xf = xf_ref[0].astype(jnp.float32)            # (L, E) full sequence
    tq, E = xq.shape
    L = xf.shape[0]
    H = num_heads
    Dh = E // H

    # Fused in-kernel projections (lane-dense, no head transposes).
    q = jnp.dot(xq, wq_ref[...], preferred_element_type=jnp.float32) + bq_ref[...]
    kv = jnp.dot(xf, wkv_ref[...], preferred_element_type=jnp.float32) + bkv_ref[...]

    # Causal + key-padding additive bias (offset by the q-tile start row).
    q0 = pl.program_id(1) * tq
    row = jax.lax.broadcasted_iota(jnp.int32, (tq, L), 0) + q0
    col = jax.lax.broadcasted_iota(jnp.int32, (tq, L), 1)
    bias = jnp.where(col > row, jnp.float32(_NEG_INF), jnp.float32(0.0)) + pb_ref[0]

    acc = jnp.zeros((tq, E), jnp.float32)
    for h in range(H):                             # static, unrolled head loop
        qh = q[:, h * Dh:(h + 1) * Dh] * scale
        kh = kv[:, h * Dh:(h + 1) * Dh]
        vh = kv[:, E + h * Dh:E + (h + 1) * Dh]
        s = jax.lax.dot_general(qh, kh, (((1,), (1,)), ((), ())),
                                preferred_element_type=jnp.float32) + bias
        s = s - jnp.max(s, axis=-1, keepdims=True)
        p = jnp.exp(s)
        p = p * pl.reciprocal(jnp.sum(p, axis=-1, keepdims=True), approx=True)
        oh = jnp.dot(p, vh, preferred_element_type=jnp.float32)      # (tq, Dh)
        # Fold the head straight into the output projection (no concat/reshape).
        acc = acc + jnp.dot(oh, wo_ref[h * Dh:(h + 1) * Dh, :],
                            preferred_element_type=jnp.float32)

    # out-proj bias + residual + LayerNorm, all fused.
    y = acc + bo_ref[...] + xq
    mu = jnp.mean(y, axis=-1, keepdims=True)
    var = jnp.mean((y - mu) ** 2, axis=-1, keepdims=True)
    o_ref[0] = ((y - mu) * jax.lax.rsqrt(var + 1e-5) * g_ref[...]
                + b_ref[...]).astype(o_ref.dtype)


def self_attn_block(x, pad_bias, p, ln_g, ln_b, num_heads):
    N, L, E = x.shape
    tq = _seq_tile(L)
    scale = 1.0 / math.sqrt(E // num_heads)
    kern = functools.partial(_self_attn_block_kernel,
                             num_heads=num_heads, scale=scale)
    return pl.pallas_call(
        kern,
        grid=(N, L // tq),
        out_shape=jax.ShapeDtypeStruct((N, L, E), x.dtype),
        in_specs=[
            pl.BlockSpec((1, tq, E), lambda n, q: (n, q, 0)),   # query rows
            pl.BlockSpec((1, L, E), lambda n, q: (n, 0, 0)),    # full seq (K/V)
            pl.BlockSpec((1, 1, L), lambda n, q: (n, 0, 0)),    # pad bias
            pl.BlockSpec((E, E), lambda n, q: (0, 0)),          # Wq
            pl.BlockSpec((1, E), lambda n, q: (0, 0)),          # bq
            pl.BlockSpec((E, 2 * E), lambda n, q: (0, 0)),      # Wkv
            pl.BlockSpec((1, 2 * E), lambda n, q: (0, 0)),      # bkv
            pl.BlockSpec((E, E), lambda n, q: (0, 0)),          # Wo
            pl.BlockSpec((1, E), lambda n, q: (0, 0)),          # bo
            pl.BlockSpec((1, E), lambda n, q: (0, 0)),          # ln gamma
            pl.BlockSpec((1, E), lambda n, q: (0, 0)),          # ln beta
        ],
        out_specs=pl.BlockSpec((1, tq, E), lambda n, q: (n, q, 0)),
        compiler_params=_mosaic("parallel", "parallel"),
    )(x, x, pad_bias,
      p["q_w_t"], p["q_b"].reshape(1, -1),
      p["kv_w_t"], p["kv_b"].reshape(1, -1),
      p["out_w_t"], p["out_b"].reshape(1, -1),
      ln_g.reshape(1, -1), ln_b.reshape(1, -1))


# -------------------- fused cross-attention + add + LN ----------------------

def _cross_attn_block_kernel(xq_ref, enc_ref, wq_ref, bq_ref, wkv_ref, bkv_ref,
                             wo_ref, bo_ref, g_ref, b_ref, o_ref, w_ref,
                             *, num_heads, scale):
    xq = xq_ref[0].astype(jnp.float32)            # (tq, E)
    enc = enc_ref[0].astype(jnp.float32)          # (S, E)
    tq, E = xq.shape
    H = num_heads
    Dh = E // H

    q = jnp.dot(xq, wq_ref[...], preferred_element_type=jnp.float32) + bq_ref[...]
    kv = jnp.dot(enc, wkv_ref[...], preferred_element_type=jnp.float32) + bkv_ref[...]

    acc = jnp.zeros((tq, E), jnp.float32)
    for h in range(H):
        qh = q[:, h * Dh:(h + 1) * Dh] * scale
        kh = kv[:, h * Dh:(h + 1) * Dh]
        vh = kv[:, E + h * Dh:E + (h + 1) * Dh]
        s = jax.lax.dot_general(qh, kh, (((1,), (1,)), ((), ())),
                                preferred_element_type=jnp.float32)
        s = s - jnp.max(s, axis=-1, keepdims=True)
        e = jnp.exp(s)
        p = e / jnp.sum(e, axis=-1, keepdims=True)   # exact: exposed output
        w_ref[0, h] = p.astype(w_ref.dtype)
        oh = jnp.dot(p, vh, preferred_element_type=jnp.float32)
        acc = acc + jnp.dot(oh, wo_ref[h * Dh:(h + 1) * Dh, :],
                            preferred_element_type=jnp.float32)

    y = acc + bo_ref[...] + xq
    mu = jnp.mean(y, axis=-1, keepdims=True)
    var = jnp.mean((y - mu) ** 2, axis=-1, keepdims=True)
    o_ref[0] = ((y - mu) * jax.lax.rsqrt(var + 1e-5) * g_ref[...]
                + b_ref[...]).astype(o_ref.dtype)


def cross_attn_block(x, enc, p, ln_g, ln_b, num_heads):
    N, L, E = x.shape
    S = enc.shape[1]
    H = num_heads
    tq = _seq_tile(L)
    scale = 1.0 / math.sqrt(E // H)
    kern = functools.partial(_cross_attn_block_kernel, num_heads=H, scale=scale)
    out, attn_w = pl.pallas_call(
        kern,
        grid=(N, L // tq),
        out_shape=(jax.ShapeDtypeStruct((N, L, E), x.dtype),
                   jax.ShapeDtypeStruct((N, H, L, S), jnp.float32)),
        in_specs=[
            pl.BlockSpec((1, tq, E), lambda n, q: (n, q, 0)),
            pl.BlockSpec((1, S, E), lambda n, q: (n, 0, 0)),
            pl.BlockSpec((E, E), lambda n, q: (0, 0)),
            pl.BlockSpec((1, E), lambda n, q: (0, 0)),
            pl.BlockSpec((E, 2 * E), lambda n, q: (0, 0)),
            pl.BlockSpec((1, 2 * E), lambda n, q: (0, 0)),
            pl.BlockSpec((E, E), lambda n, q: (0, 0)),
            pl.BlockSpec((1, E), lambda n, q: (0, 0)),
            pl.BlockSpec((1, E), lambda n, q: (0, 0)),
            pl.BlockSpec((1, E), lambda n, q: (0, 0)),
        ],
        out_specs=(pl.BlockSpec((1, tq, E), lambda n, q: (n, q, 0)),
                   pl.BlockSpec((1, H, tq, S), lambda n, q: (n, 0, q, 0))),
        compiler_params=_mosaic("parallel", "parallel"),
    )(x, enc,
      p["q_w_t"], p["q_b"].reshape(1, -1),
      p["kv_w_t"], p["kv_b"].reshape(1, -1),
      p["out_w_t"], p["out_b"].reshape(1, -1),
      ln_g.reshape(1, -1), ln_b.reshape(1, -1))
    return out, attn_w


# ---------------------- fused FFN (F-tiled) + add + LN ----------------------

def _ffn_ln_kernel(x_ref, w1_ref, b1_ref, w2_ref, b2_ref, g_ref, b_ref,
                   o_ref, acc_ref):
    k = pl.program_id(1)

    @pl.when(k == 0)
    def _():
        acc_ref[...] = jnp.zeros_like(acc_ref)

    h = jnp.dot(x_ref[...], w1_ref[...],
                preferred_element_type=jnp.float32) + b1_ref[...]
    h = jnp.maximum(h, 0.0)
    acc_ref[...] += jnp.dot(h, w2_ref[...], preferred_element_type=jnp.float32)

    @pl.when(k == pl.num_programs(1) - 1)
    def _():
        y = acc_ref[...] + b2_ref[...] + x_ref[...].astype(jnp.float32)
        mu = jnp.mean(y, axis=-1, keepdims=True)
        var = jnp.mean((y - mu) ** 2, axis=-1, keepdims=True)
        o_ref[...] = ((y - mu) * jax.lax.rsqrt(var + 1e-5) * g_ref[...]
                      + b_ref[...]).astype(o_ref.dtype)


def ffn_add_ln(x2d, w1_t, b1, w2_t, b2, gamma, beta):
    M, E = x2d.shape
    F = w1_t.shape[1]
    tm, tf = _row_tile(M), _col_tile(F)
    return pl.pallas_call(
        _ffn_ln_kernel,
        grid=(M // tm, F // tf),
        out_shape=jax.ShapeDtypeStruct((M, E), x2d.dtype),
        in_specs=[pl.BlockSpec((tm, E), lambda i, k: (i, 0)),
                  pl.BlockSpec((E, tf), lambda i, k: (0, k)),
                  pl.BlockSpec((1, tf), lambda i, k: (0, k)),
                  pl.BlockSpec((tf, E), lambda i, k: (k, 0)),
                  pl.BlockSpec((1, E), lambda i, k: (0, 0)),
                  pl.BlockSpec((1, E), lambda i, k: (0, 0)),
                  pl.BlockSpec((1, E), lambda i, k: (0, 0))],
        out_specs=pl.BlockSpec((tm, E), lambda i, k: (i, 0)),
        scratch_shapes=[pltpu.VMEM((tm, E), jnp.float32)],
        compiler_params=_mosaic("parallel", "arbitrary"),
    )(x2d, w1_t, b1.reshape(1, F), w2_t, b2.reshape(1, E),
      gamma.reshape(1, E), beta.reshape(1, E))


# ------------------------------- model glue ---------------------------------

def decoder_layer(x, enc, pad_bias, p, num_heads):
    x = self_attn_block(x, pad_bias, p["self_attn"],
                        p["sa_ln_g"], p["sa_ln_b"], num_heads)
    x, attns = cross_attn_block(x, enc, p["cross_attn"],
                                p["mh_ln_g"], p["mh_ln_b"], num_heads)
    N, L, E = x.shape
    x = ffn_add_ln(x.reshape(N * L, E), p["ff_w1_t"], p["ff_b1"],
                   p["ff_w2_t"], p["ff_b2"],
                   p["ff_ln_g"], p["ff_ln_b"]).reshape(N, L, E)
    return x, attns


def decoder_forward(captions, enc_tokens, params, d_model, num_heads, pad_id):
    N, L = captions.shape
    # Key-padding additive bias (tiny (N,1,L) instead of dense (N*H,L,L) mask).
    pad_bias = jnp.where(captions == pad_id,
                         jnp.float32(_NEG_INF), jnp.float32(0.0)).reshape(N, 1, L)

    x = jnp.take(params["emb"], captions, axis=0)                    # (N, L, E)
    # Faithful to the reference: pos_emb is applied AFTER the permute, so the
    # positional table is (accidentally) indexed by the batch axis.
    x = x * math.sqrt(d_model) + params["pe"][:N][:, None, :]

    attns_all = []
    for lp in params["layers"]:
        x, attns = decoder_layer(x, enc_tokens, pad_bias, lp, num_heads)
        attns_all.append(attns)
    return x, jnp.stack(attns_all)


def transformer_forward(images, captions, params, *, d_model, num_heads,
                        vocab_size, pad_id, patch):
    # ---- encoder stand-in (patch embedding) ----
    B, C, Him, Wim = images.shape
    nP = (Him // patch) * (Wim // patch)
    patches = images.reshape(B, C, Him // patch, patch, Wim // patch, patch)
    patches = patches.transpose(0, 2, 4, 1, 3, 5).reshape(B, nP, C * patch * patch)
    enc = linear(patches.reshape(B * nP, C * patch * patch),
                 params["enc_w_t"], params["enc_b"]).reshape(B, nP, d_model)

    # ---- decoder (batch-first layout; reference permutes are no-ops here) ----
    tgt, attns = decoder_forward(captions, enc, params,
                                 d_model, num_heads, pad_id)          # (N, L, E)

    # ---- predictor: lane-dense padded matmul, slice logits afterwards ----
    N, L, E = tgt.shape
    logits = linear(tgt.reshape(N * L, E), params["pred_w_t"], None)
    preds = logits[:, :vocab_size].reshape(N, L, vocab_size)          # (N, L, V)
    return preds, attns


# ----------------------------- parameter init -------------------------------

def init_params(key, *, vocab_size, d_model, ff_dim, n_layers, max_len,
                pad_id, patch, in_chans):
    ks = iter(jax.random.split(key, 16 + 20 * n_layers))

    def nrm(shape, s=0.05):
        return jax.random.normal(next(ks), shape, jnp.float32) * s

    E = d_model
    params = {}

    emb = nrm((vocab_size, E), 0.1)
    params["emb"] = emb.at[pad_id].set(0.0)                 # padding_idx row = 0

    # sinusoidal positional encoding table
    position = jnp.arange(max_len, dtype=jnp.float32)[:, None]
    div_term = jnp.exp(jnp.arange(0, E, 2, dtype=jnp.float32)
                       * (-math.log(10000.0) / E))
    pe = jnp.zeros((max_len, E), jnp.float32)
    pe = pe.at[:, 0::2].set(jnp.sin(position * div_term))
    pe = pe.at[:, 1::2].set(jnp.cos(position * div_term))
    params["pe"] = pe

    def mha_params():
        # Pre-transposed and pre-split: q (E,E), kv (E,2E), out (E,E).
        return {"q_w_t": nrm((E, E)), "q_b": nrm((E,)),
                "kv_w_t": nrm((E, 2 * E)), "kv_b": nrm((2 * E,)),
                "out_w_t": nrm((E, E)), "out_b": nrm((E,))}

    layers = []
    for _ in range(n_layers):
        layers.append({
            "self_attn": mha_params(),
            "cross_attn": mha_params(),
            "sa_ln_g": jnp.ones((E,), jnp.float32),
            "sa_ln_b": jnp.zeros((E,), jnp.float32),
            "mh_ln_g": jnp.ones((E,), jnp.float32),
            "mh_ln_b": jnp.zeros((E,), jnp.float32),
            "ff_w1_t": nrm((E, ff_dim)), "ff_b1": nrm((ff_dim,)),
            "ff_w2_t": nrm((ff_dim, E)), "ff_b2": nrm((E,)),
            "ff_ln_g": jnp.ones((E,), jnp.float32),
            "ff_ln_b": jnp.zeros((E,), jnp.float32),
        })
    params["layers"] = layers

    params["enc_w_t"] = nrm((in_chans * patch * patch, E))
    params["enc_b"] = nrm((E,))

    # Predictor weight, zero-padded to a lane-dense (multiple-of-128) width.
    v_pad = ((vocab_size + 127) // 128) * 128
    pred_w = nrm((E, vocab_size))
    params["pred_w_t"] = jnp.pad(pred_w, ((0, 0), (0, v_pad - vocab_size)))
    return params


# ----------------------------------- main ------------------------------------

if __name__ == "__main__":
    VOCAB = 50
    D_MODEL = 32
    N_HEADS = 4
    FF_DIM = 64
    N_LAYERS = 2
    MAX_LEN = 64
    PAD_ID = 0
    PATCH = 8

    B, C, H, W = 2, 3, 16, 16
    SEQ = 8

    key = jax.random.PRNGKey(0)
    k_img, k_cap, k_par = jax.random.split(key, 3)

    images = jax.random.normal(k_img, (B, C, H, W), jnp.float32)
    captions = jax.random.randint(k_cap, (B, SEQ), 1, VOCAB).astype(jnp.int32)
    captions = captions.at[:, 0].set(1)              # BOS, never padded
    captions = captions.at[1, SEQ - 2:].set(PAD_ID)  # exercise the padding mask

    params = init_params(k_par, vocab_size=VOCAB, d_model=D_MODEL,
                         ff_dim=FF_DIM, n_layers=N_LAYERS, max_len=MAX_LEN,
                         pad_id=PAD_ID, patch=PATCH, in_chans=C)

    fwd = jax.jit(functools.partial(transformer_forward,
                                    d_model=D_MODEL, num_heads=N_HEADS,
                                    vocab_size=VOCAB, pad_id=PAD_ID,
                                    patch=PATCH))

    predictions, attns = fwd(images, captions, params)
    jax.block_until_ready((predictions, attns))

    assert predictions.shape == (B, SEQ, VOCAB), predictions.shape
    assert attns.shape == (N_LAYERS, B, N_HEADS, SEQ,
                           (H // PATCH) * (W // PATCH)), attns.shape
    assert bool(jnp.all(jnp.isfinite(predictions)))
    assert bool(jnp.all(jnp.isfinite(attns)))

    print("KERNEL_OK")
</pallas_src>

<mosaic_0001>
module attributes {stable_mosaic.version = 11 : i64} {
  func.func @_linear_kernel(%arg0: i32, %arg1: i32, %arg2: i32, %arg3: memref<8x192xf32, #tpu.memory_space<vmem>>, %arg4: memref<192x32xf32, #tpu.memory_space<vmem>>, %arg5: memref<1x32xf32, #tpu.memory_space<vmem>>, %arg6: memref<8x32xf32, #tpu.memory_space<vmem>>, %arg7: memref<8x32xf32, #tpu.memory_space<vmem>>) attributes {dimension_semantics = [#tpu.dimension_semantics<parallel>, #tpu.dimension_semantics<parallel>, #tpu.dimension_semantics<arbitrary>], iteration_bounds = array<i64: 1, 1, 1>, scalar_prefetch = 0 : i64, scratch_operands = 1 : i64, tpu.core_type = #tpu.core_type<tc>, window_params = [{transform_indices = @transform_0, window_bounds = array<i64: 8, 192>}, {transform_indices = @transform_1, window_bounds = array<i64: 192, 32>}, {transform_indices = @transform_2, window_bounds = array<i64: 1, 32>}, {transform_indices = @transform_3, window_bounds = array<i64: 8, 32>}]} {
    %c0_i32 = arith.constant 0 : i32
    %0 = arith.cmpi eq, %arg2, %c0_i32 : i32
    %1 = arith.extui %0 : i1 to i32
    %c0_i32_0 = arith.constant 0 : i32
    %2 = arith.cmpi ne, %1, %c0_i32_0 : i32
    scf.if %2 {
      %cst_10 = arith.constant 0.000000e+00 : f32
      %12 = vector.broadcast %cst_10 : f32 to vector<8x32xf32>
      %c0_11 = arith.constant 0 : index
      %c0_12 = arith.constant 0 : index
      %13 = vector.load %arg7[%c0_11, %c0_12] : memref<8x32xf32, #tpu.memory_space<vmem>>, vector<8x32xf32>
      tpu.vector_store %arg7[%c0_11, %c0_12], %12 {strides = array<i32>} : memref<8x32xf32, #tpu.memory_space<vmem>>, vector<8x32xf32>,
    } else {
    }
    %c0 = arith.constant 0 : index
    %c0_1 = arith.constant 0 : index
    %3 = vector.load %arg7[%c0, %c0_1] : memref<8x32xf32, #tpu.memory_space<vmem>>, vector<8x32xf32>
    %c0_2 = arith.constant 0 : index
    %c0_3 = arith.constant 0 : index
    %4 = vector.load %arg3[%c0_2, %c0_3] : memref<8x192xf32, #tpu.memory_space<vmem>>, vector<8x192xf32>
    %c0_4 = arith.constant 0 : index
    %c0_5 = arith.constant 0 : index
    %5 = vector.load %arg4[%c0_4, %c0_5] : memref<192x32xf32, #tpu.memory_space<vmem>>, vector<192x32xf32>
    %cst = arith.constant dense<0.000000e+00> : vector<8x32xf32>
    %6 = tpu.matmul %4, %5, %cst {dimension_numbers = #tpu.dot_dimension_numbers<[1], [0], [0], [1], [0, 0, 1, 1], [], []>} : vector<8x192xf32>, vector<192x32xf32>, vector<8x32xf32> -> vector<8x32xf32>
    %7 = arith.addf %3, %6 : vector<8x32xf32>
    %c0_6 = arith.constant 0 : index
    %c0_7 = arith.constant 0 : index
    %8 = vector.load %arg7[%c0_6, %c0_7] : memref<8x32xf32, #tpu.memory_space<vmem>>, vector<8x32xf32>
    tpu.vector_store %arg7[%c0_6, %c0_7], %7 {strides = array<i32>} : memref<8x32xf32, #tpu.memory_space<vmem>>, vector<8x32xf32>,
    %c0_i32_8 = arith.constant 0 : i32
    %9 = arith.cmpi eq, %arg2, %c0_i32_8 : i32
    %10 = arith.extui %9 : i1 to i32
    %c0_i32_9 = arith.constant 0 : i32
    %11 = arith.cmpi ne, %10, %c0_i32_9 : i32
    scf.if %11 {
      %c0_10 = arith.constant 0 : index
      %c0_11 = arith.constant 0 : index
      %12 = vector.load %arg7[%c0_10, %c0_11] : memref<8x32xf32, #tpu.memory_space<vmem>>, vector<8x32xf32>
      %c0_12 = arith.constant 0 : index
      %c0_13 = arith.constant 0 : index
      %13 = vector.load %arg5[%c0_12, %c0_13] : memref<1x32xf32, #tpu.memory_space<vmem>>, vector<1x32xf32>
      %14 = vector.broadcast %13 : vector<1x32xf32> to vector<8x32xf32>
      %15 = arith.addf %12, %14 : vector<8x32xf32>
      %c0_14 = arith.constant 0 : index
      %c0_15 = arith.constant 0 : index
      %16 = vector.load %arg6[%c0_14, %c0_15] : memref<8x32xf32, #tpu.memory_space<vmem>>, vector<8x32xf32>
      tpu.vector_store %arg6[%c0_14, %c0_15], %15 {strides = array<i32>} : memref<8x32xf32, #tpu.memory_space<vmem>>, vector<8x32xf32>,
    } else {
    }
    return
  }
  func.func @transform_0(%arg0: i32, %arg1: i32, %arg2: i32) -> (i32, i32) {
    %c0_i32 = arith.constant 0 : i32
    return %arg0, %arg2 : i32, i32
  }
  func.func @transform_1(%arg0: i32, %arg1: i32, %arg2: i32) -> (i32, i32) {
    %c0_i32 = arith.constant 0 : i32
    return %arg2, %arg1 : i32, i32
  }
  func.func @transform_2(%arg0: i32, %arg1: i32, %arg2: i32) -> (i32, i32) {
    %c0_i32 = arith.constant 0 : i32
    %c0_i32_0 = arith.constant 0 : i32
    return %c0_i32, %arg1 : i32, i32
  }
  func.func @transform_3(%arg0: i32, %arg1: i32, %arg2: i32) -> (i32, i32) {
    %c0_i32 = arith.constant 0 : i32
    return %arg0, %arg1 : i32, i32
  }
}

module attributes {stable_mosaic.version = 11 : i64} {
  func.func @_self_attn_block_kernel(%arg0: i32, %arg1: i32, %arg2: memref<1x8x32xf32, #tpu.memory_space<vmem>>, %arg3: memref<1x8x32xf32, #tpu.memory_space<vmem>>, %arg4: memref<1x1x8xf32, #tpu.memory_space<vmem>>, %arg5: memref<32x32xf32, #tpu.memory_space<vmem>>, %arg6: memref<1x32xf32, #tpu.memory_space<vmem>>, %arg7: memref<32x64xf32, #tpu.memory_space<vmem>>, %arg8: memref<1x64xf32, #tpu.memory_space<vmem>>, %arg9: memref<32x32xf32, #tpu.memory_space<vmem>>, %arg10: memref<1x32xf32, #tpu.memory_space<vmem>>, %arg11: memref<1x32xf32, #tpu.memory_space<vmem>>, %arg12: memref<1x32xf32, #tpu.memory_space<vmem>>, %arg13: memref<1x8x32xf32, #tpu.memory_space<vmem>>) attributes {dimension_semantics = [#tpu.dimension_semantics<parallel>, #tpu.dimension_semantics<parallel>], iteration_bounds = array<i64: 2, 1>, scalar_prefetch = 0 : i64, scratch_operands = 0 : i64, tpu.core_type = #tpu.core_type<tc>, window_params = [{transform_indices = @transform_0, window_bounds = array<i64: 1, 8, 32>}, {transform_indices = @transform_1, window_bounds = array<i64: 1, 8, 32>}, {transform_indices = @transform_2, window_bounds = array<i64: 1, 1, 8>}, {pipeline_mode = #tpu.pipeline_mode<synchronous>, transform_indices = @transform_3, window_bounds = array<i64: 32, 32>}, {pipeline_mode = #tpu.pipeline_mode<synchronous>, transform_indices = @transform_4, window_bounds = array<i64: 1, 32>}, {pipeline_mode = #tpu.pipeline_mode<synchronous>, transform_indices = @transform_5, window_bounds = array<i64: 32, 64>}, {pipeline_mode = #tpu.pipeline_mode<synchronous>, transform_indices = @transform_6, window_bounds = array<i64: 1, 64>}, {pipeline_mode = #tpu.pipeline_mode<synchronous>, transform_indices = @transform_7, window_bounds = array<i64: 32, 32>}, {pipeline_mode = #tpu.pipeline_mode<synchronous>, transform_indices = @transform_8, window_bounds = array<i64: 1, 32>}, {pipeline_mode = #tpu.pipeline_mode<synchronous>, transform_indices = @transform_9, window_bounds = array<i64: 1, 32>}, {pipeline_mode = #tpu.pipeline_mode<synchronous>, transform_indices = @transform_10, window_bounds = array<i64: 1, 32>}, {transform_indices = @transform_11, window_bounds = array<i64: 1, 8, 32>}]} {
    %c0 = arith.constant 0 : index
    %c0_0 = arith.constant 0 : index
    %c0_1 = arith.constant 0 : index
    %0 = vector.load %arg2[%c0, %c0_0, %c0_1] : memref<1x8x32xf32, #tpu.memory_space<vmem>>, vector<1x8x32xf32>
    %1 = vector.shape_cast %0 : vector<1x8x32xf32> to vector<8x32xf32>
    %c0_2 = arith.constant 0 : index
    %c0_3 = arith.constant 0 : index
    %c0_4 = arith.constant 0 : index
    %2 = vector.load %arg3[%c0_2, %c0_3, %c0_4] : memref<1x8x32xf32, #tpu.memory_space<vmem>>, vector<1x8x32xf32>
    %3 = vector.shape_cast %2 : vector<1x8x32xf32> to vector<8x32xf32>
    %c0_5 = arith.constant 0 : index
    %c0_6 = arith.constant 0 : index
    %4 = vector.load %arg5[%c0_5, %c0_6] : memref<32x32xf32, #tpu.memory_space<vmem>>, vector<32x32xf32>
    %cst = arith.constant dense<0.000000e+00> : vector<8x32xf32>
    %5 = tpu.matmul %1, %4, %cst {dimension_numbers = #tpu.dot_dimension_numbers<[1], [0], [0], [1], [0, 0, 1, 1], [], []>} : vector<8x32xf32>, vector<32x32xf32>, vector<8x32xf32> -> vector<8x32xf32>
    %c0_7 = arith.constant 0 : index
    %c0_8 = arith.constant 0 : index
    %6 = vector.load %arg6[%c0_7, %c0_8] : memref<1x32xf32, #tpu.memory_space<vmem>>, vector<1x32xf32>
    %7 = vector.broadcast %6 : vector<1x32xf32> to vector<8x32xf32>
    %8 = arith.addf %5, %7 : vector<8x32xf32>
    %c0_9 = arith.constant 0 : index
    %c0_10 = arith.constant 0 : index
    %9 = vector.load %arg7[%c0_9, %c0_10] : memref<32x64xf32, #tpu.memory_space<vmem>>, vector<32x64xf32>
    %cst_11 = arith.constant dense<0.000000e+00> : vector<8x64xf32>
    %10 = tpu.matmul %3, %9, %cst_11 {dimension_numbers = #tpu.dot_dimension_numbers<[1], [0], [0], [1], [0, 0, 1, 1], [], []>} : vector<8x32xf32>, vector<32x64xf32>, vector<8x64xf32> -> vector<8x64xf32>
    %c0_12 = arith.constant 0 : index
    %c0_13 = arith.constant 0 : index
    %11 = vector.load %arg8[%c0_12, %c0_13] : memref<1x64xf32, #tpu.memory_space<vmem>>, vector<1x64xf32>
    %12 = vector.broadcast %11 : vector<1x64xf32> to vector<8x64xf32>
    %13 = arith.addf %10, %12 : vector<8x64xf32>
    %c8_i32 = arith.constant 8 : i32
    %14 = arith.muli %arg1, %c8_i32 : i32
    %15 = tpu.iota {dimensions = array<i32: 0>} : vector<8x8xi32>
    %16 = vector.broadcast %14 : i32 to vector<8x8xi32>
    %17 = arith.addi %15, %16 : vector<8x8xi32>
    %18 = tpu.iota {dimensions = array<i32: 1>} : vector<8x8xi32>
    %19 = arith.cmpi sgt, %18, %17 : vector<8x8xi32>
    %cst_14 = arith.constant -1.000000e+09 : f32
    %cst_15 = arith.constant 0.000000e+00 : f32
    %20 = vector.broadcast %cst_14 : f32 to vector<8x8xf32>
    %21 = vector.broadcast %cst_15 : f32 to vector<8x8xf32>
    %22 = arith.select %19, %20, %21 : vector<8x8xi1>, vector<8x8xf32>
    %c0_16 = arith.constant 0 : index
    %c0_17 = arith.constant 0 : index
    %c0_18 = arith.constant 0 : index
    %23 = vector.load %arg4[%c0_16, %c0_17, %c0_18] : memref<1x1x8xf32, #tpu.memory_space<vmem>>, vector<1x1x8xf32>
    %24 = vector.shape_cast %23 : vector<1x1x8xf32> to vector<1x8xf32>
    %25 = vector.broadcast %24 : vector<1x8xf32> to vector<8x8xf32>
    %26 = arith.addf %22, %25 : vector<8x8xf32>
    %cst_19 = arith.constant 0.000000e+00 : f32
    %27 = vector.broadcast %cst_19 : f32 to vector<8x32xf32>
    %28 = vector.extract_strided_slice %8 {offsets = [0, 0], sizes = [8, 8], strides = [1, 1]} : vector<8x32xf32> to vector<8x8xf32>
    %cst_20 = arith.constant 0.353553385 : f32
    %29 = vector.broadcast %cst_20 : f32 to vector<8x8xf32>
    %30 = arith.mulf %28, %29 : vector<8x8xf32>
    %31 = vector.extract_strided_slice %13 {offsets = [0, 0], sizes = [8, 8], strides = [1, 1]} : vector<8x64xf32> to vector<8x8xf32>
    %32 = vector.extract_strided_slice %13 {offsets = [0, 32], sizes = [8, 8], strides = [1, 1]} : vector<8x64xf32> to vector<8x8xf32>
    %cst_21 = arith.constant dense<0.000000e+00> : vector<8x8xf32>
    %33 = tpu.matmul %30, %31, %cst_21 {dimension_numbers = #tpu.dot_dimension_numbers<[1], [1], [0], [0], [0, 0, 1, 0], [], []>} : vector<8x8xf32>, vector<8x8xf32>, vector<8x8xf32> -> vector<8x8xf32>
    %34 = arith.addf %33, %26 : vector<8x8xf32>
    %cst_22 = arith.constant dense<0xFF800000> : vector<8xf32>
    %35 = vector.multi_reduction <maximumf>, %34, %cst_22 [1] : vector<8x8xf32> to vector<8xf32>
    %36 = vector.shape_cast %35 : vector<8xf32> to vector<8x1xf32>
    %37 = vector.broadcast %36 : vector<8x1xf32> to vector<8x8xf32>
    %38 = arith.subf %34, %37 : vector<8x8xf32>
    %39 = math.exp %38 : vector<8x8xf32>
    %cst_23 = arith.constant dense<0.000000e+00> : vector<8xf32>
    %40 = vector.multi_reduction <add>, %39, %cst_23 [1] : vector<8x8xf32> to vector<8xf32>
    %41 = vector.shape_cast %40 : vector<8xf32> to vector<8x1xf32>
    %42 = tpu.reciprocal %41 {approx = true} : vector<8x1xf32> -> vector<8x1xf32>
    %43 = vector.broadcast %42 : vector<8x1xf32> to vector<8x8xf32>
    %44 = arith.mulf %39, %43 : vector<8x8xf32>
    %cst_24 = arith.constant dense<0.000000e+00> : vector<8x8xf32>
    %45 = tpu.matmul %44, %32, %cst_24 {dimension_numbers = #tpu.dot_dimension_numbers<[1], [0], [0], [1], [0, 0, 1, 1], [], []>} : vector<8x8xf32>, vector<8x8xf32>, vector<8x8xf32> -> vector<8x8xf32>
    %c0_25 = arith.constant 0 : index
    %c0_26 = arith.constant 0 : index
    %46 = vector.load %arg9[%c0_25, %c0_26] : memref<32x32xf32, #tpu.memory_space<vmem>>, vector<8x32xf32>
    %cst_27 = arith.constant dense<0.000000e+00> : vector<8x32xf32>
    %47 = tpu.matmul %45, %46, %cst_27 {dimension_numbers = #tpu.dot_dimension_numbers<[1], [0], [0], [1], [0, 0, 1, 1], [], []>} : vector<8x8xf32>, vector<8x32xf32>, vector<8x32xf32> -> vector<8x32xf32>
    %48 = arith.addf %27, %47 : vector<8x32xf32>
    %49 = vector.extract_strided_slice %8 {offsets = [0, 8], sizes = [8, 8], strides = [1, 1]} : vector<8x32xf32> to vector<8x8xf32>
    %cst_28 = arith.constant 0.353553385 : f32
    %50 = vector.broadcast %cst_28 : f32 to vector<8x8xf32>
    %51 = arith.mulf %49, %50 : vector<8x8xf32>
    %52 = vector.extract_strided_slice %13 {offsets = [0, 8], sizes = [8, 8], strides = [1, 1]} : vector<8x64xf32> to vector<8x8xf32>
    %53 = vector.extract_strided_slice %13 {offsets = [0, 40], sizes = [8, 8], strides = [1, 1]} : vector<8x64xf32> to vector<8x8xf32>
    %cst_29 = arith.constant dense<0.000000e+00> : vector<8x8xf32>
    %54 = tpu.matmul %51, %52, %cst_29 {dimension_numbers = #tpu.dot_dimension_numbers<[1], [1], [0], [0], [0, 0, 1, 0], [], []>} : vector<8x8xf32>, vector<8x8xf32>, vector<8x8xf32> -> vector<8x8xf32>
    %55 = arith.addf %54, %26 : vector<8x8xf32>
    %cst_30 = arith.constant dense<0xFF800000> : vector<8xf32>
    %56 = vector.multi_reduction <maximumf>, %55, %cst_30 [1] : vector<8x8xf32> to vector<8xf32>
    %57 = vector.shape_cast %56 : vector<8xf32> to vector<8x1xf32>
    %58 = vector.broadcast %57 : vector<8x1xf32> to vector<8x8xf32>
    %59 = arith.subf %55, %58 : vector<8x8xf32>
    %60 = math.exp %59 : vector<8x8xf32>
    %cst_31 = arith.constant dense<0.000000e+00> : vector<8xf32>
    %61 = vector.multi_reduction <add>, %60, %cst_31 [1] : vector<8x8xf32> to vector<8xf32>
    %62 = vector.shape_cast %61 : vector<8xf32> to vector<8x1xf32>
    %63 = tpu.reciprocal %62 {approx = true} : vector<8x1xf32> -> vector<8x1xf32>
    %64 = vector.broadcast %63 : vector<8x1xf32> to vector<8x8xf32>
    %65 = arith.mulf %60, %64 : vector<8x8xf32>
    %cst_32 = arith.constant dense<0.000000e+00> : vector<8x8xf32>
    %66 = tpu.matmul %65, %53, %cst_32 {dimension_numbers = #tpu.dot_dimension_numbers<[1], [0], [0], [1], [0, 0, 1, 1], [], []>} : vector<8x8xf32>, vector<8x8xf32>, vector<8x8xf32> -> vector<8x8xf32>
    %c8 = arith.constant 8 : index
    %c0_33 = arith.constant 0 : index
    %67 = vector.load %arg9[%c8, %c0_33] : memref<32x32xf32, #tpu.memory_space<vmem>>, vector<8x32xf32>
    %cst_34 = arith.constant dense<0.000000e+00> : vector<8x32xf32>
    %68 = tpu.matmul %66, %67, %cst_34 {dimension_numbers = #tpu.dot_dimension_numbers<[1], [0], [0], [1], [0, 0, 1, 1], [], []>} : vector<8x8xf32>, vector<8x32xf32>, vector<8x32xf32> -> vector<8x32xf32>
    %69 = arith.addf %48, %68 : vector<8x32xf32>
    %70 = vector.extract_strided_slice %8 {offsets = [0, 16], sizes = [8, 8], strides = [1, 1]} : vector<8x32xf32> to vector<8x8xf32>
    %cst_35 = arith.constant 0.353553385 : f32
    %71 = vector.broadcast %cst_35 : f32 to vector<8x8xf32>
    %72 = arith.mulf %70, %71 : vector<8x8xf32>
    %73 = vector.extract_strided_slice %13 {offsets = [0, 16], sizes = [8, 8], strides = [1, 1]} : vector<8x64xf32> to vector<8x8xf32>
    %74 = vector.extract_strided_slice %13 {offsets = [0, 48], sizes = [8, 8], strides = [1, 1]} : vector<8x64xf32> to vector<8x8xf32>
    %cst_36 = arith.constant dense<0.000000e+00> : vector<8x8xf32>
    %75 = tpu.matmul %72, %73, %cst_36 {dimension_numbers = #tpu.dot_dimension_numbers<[1], [1], [0], [0], [0, 0, 1, 0], [], []>} : vector<8x8xf32>, vector<8x8xf32>, vector<8x8xf32> -> vector<8x8xf32>
    %76 = arith.addf %75, %26 : vector<8x8xf32>
    %cst_37 = arith.constant dense<0xFF800000> : vector<8xf32>
    %77 = vector.multi_reduction <maximumf>, %76, %cst_37 [1] : vector<8x8xf32> to vector<8xf32>
    %78 = vector.shape_cast %77 : vector<8xf32> to vector<8x1xf32>
    %79 = vector.broadcast %78 : vector<8x1xf32> to vector<8x8xf32>
    %80 = arith.subf %76, %79 : vector<8x8xf32>
    %81 = math.exp %80 : vector<8x8xf32>
    %cst_38 = arith.constant dense<0.000000e+00> : vector<8xf32>
    %82 = vector.multi_reduction <add>, %81, %cst_38 [1] : vector<8x8xf32> to vector<8xf32>
    %83 = vector.shape_cast %82 : vector<8xf32> to vector<8x1xf32>
    %84 = tpu.reciprocal %83 {approx = true} : vector<8x1xf32> -> vector<8x1xf32>
    %85 = vector.broadcast %84 : vector<8x1xf32> to vector<8x8xf32>
    %86 = arith.mulf %81, %85 : vector<8x8xf32>
    %cst_39 = arith.constant dense<0.000000e+00> : vector<8x8xf32>
    %87 = tpu.matmul %86, %74, %cst_39 {dimension_numbers = #tpu.dot_dimension_numbers<[1], [0], [0], [1], [0, 0, 1, 1], [], []>} : vector<8x8xf32>, vector<8x8xf32>, vector<8x8xf32> -> vector<8x8xf32>
    %c16 = arith.constant 16 : index
    %c0_40 = arith.constant 0 : index
    %88 = vector.load %arg9[%c16, %c0_40] : memref<32x32xf32, #tpu.memory_space<vmem>>, vector<8x32xf32>
    %cst_41 = arith.constant dense<0.000000e+00> : vector<8x32xf32>
    %89 = tpu.matmul %87, %88, %cst_41 {dimension_numbers = #tpu.dot_dimension_numbers<[1], [0], [0], [1], [0, 0, 1, 1], [], []>} : vector<8x8xf32>, vector<8x32xf32>, vector<8x32xf32> -> vector<8x32xf32>
    %90 = arith.addf %69, %89 : vector<8x32xf32>
    %91 = vector.extract_strided_slice %8 {offsets = [0, 24], sizes = [8, 8], strides = [1, 1]} : vector<8x32xf32> to vector<8x8xf32>
    %cst_42 = arith.constant 0.353553385 : f32
    %92 = vector.broadcast %cst_42 : f32 to vector<8x8xf32>
    %93 = arith.mulf %91, %92 : vector<8x8xf32>
    %94 = vector.extract_strided_slice %13 {offsets = [0, 24], sizes = [8, 8], strides = [1, 1]} : vector<8x64xf32> to vector<8x8xf32>
    %95 = vector.extract_strided_slice %13 {offsets = [0, 56], sizes = [8, 8], strides = [1, 1]} : vector<8x64xf32> to vector<8x8xf32>
    %cst_43 = arith.constant dense<0.000000e+00> : vector<8x8xf32>
    %96 = tpu.matmul %93, %94, %cst_43 {dimension_numbers = #tpu.dot_dimension_numbers<[1], [1], [0], [0], [0, 0, 1, 0], [], []>} : vector<8x8xf32>, vector<8x8xf32>, vector<8x8xf32> -> vector<8x8xf32>
    %97 = arith.addf %96, %26 : vector<8x8xf32>
    %cst_44 = arith.constant dense<0xFF800000> : vector<8xf32>
    %98 = vector.multi_reduction <maximumf>, %97, %cst_44 [1] : vector<8x8xf32> to vector<8xf32>
    %99 = vector.shape_cast %98 : vector<8xf32> to vector<8x1xf32>
    %100 = vector.broadcast %99 : vector<8x1xf32> to vector<8x8xf32>
    %101 = arith.subf %97, %100 : vector<8x8xf32>
    %102 = math.exp %101 : vector<8x8xf32>
    %cst_45 = arith.constant dense<0.000000e+00> : vector<8xf32>
    %103 = vector.multi_reduction <add>, %102, %cst_45 [1] : vector<8x8xf32> to vector<8xf32>
    %104 = vector.shape_cast %103 : vector<8xf32> to vector<8x1xf32>
    %105 = tpu.reciprocal %104 {approx = true} : vector<8x1xf32> -> vector<8x1xf32>
    %106 = vector.broadcast %105 : vector<8x1xf32> to vector<8x8xf32>
    %107 = arith.mulf %102, %106 : vector<8x8xf32>
    %cst_46 = arith.constant dense<0.000000e+00> : vector<8x8xf32>
    %108 = tpu.matmul %107, %95, %cst_46 {dimension_numbers = #tpu.dot_dimension_numbers<[1], [0], [0], [1], [0, 0, 1, 1], [], []>} : vector<8x8xf32>, vector<8x8xf32>, vector<8x8xf32> -> vector<8x8xf32>
    %c24 = arith.constant 24 : index
    %c0_47 = arith.constant 0 : index
    %109 = vector.load %arg9[%c24, %c0_47] : memref<32x32xf32, #tpu.memory_space<vmem>>, vector<8x32xf32>
    %cst_48 = arith.constant dense<0.000000e+00> : vector<8x32xf32>
    %110 = tpu.matmul %108, %109, %cst_48 {dimension_numbers = #tpu.dot_dimension_numbers<[1], [0], [0], [1], [0, 0, 1, 1], [], []>} : vector<8x8xf32>, vector<8x32xf32>, vector<8x32xf32> -> vector<8x32xf32>
    %111 = arith.addf %90, %110 : vector<8x32xf32>
    %c0_49 = arith.constant 0 : index
    %c0_50 = arith.constant 0 : index
    %112 = vector.load %arg10[%c0_49, %c0_50] : memref<1x32xf32, #tpu.memory_space<vmem>>, vector<1x32xf32>
    %113 = vector.broadcast %112 : vector<1x32xf32> to vector<8x32xf32>
    %114 = arith.addf %111, %113 : vector<8x32xf32>
    %115 = arith.addf %114, %1 : vector<8x32xf32>
    %cst_51 = arith.constant dense<0.000000e+00> : vector<8xf32>
    %116 = vector.multi_reduction <add>, %115, %cst_51 [1] : vector<8x32xf32> to vector<8xf32>
    %117 = vector.shape_cast %116 : vector<8xf32> to vector<8x1xf32>
    %cst_52 = arith.constant 3.200000e+01 : f32
    %118 = vector.broadcast %cst_52 : f32 to vector<8x1xf32>
    %119 = arith.divf %117, %118 : vector<8x1xf32>
    %120 = vector.broadcast %119 : vector<8x1xf32> to vector<8x32xf32>
    %121 = arith.subf %115, %120 : vector<8x32xf32>
    %122 = arith.mulf %121, %121 : vector<8x32xf32>
    %cst_53 = arith.constant dense<0.000000e+00> : vector<8xf32>
    %123 = vector.multi_reduction <add>, %122, %cst_53 [1] : vector<8x32xf32> to vector<8xf32>
    %124 = vector.shape_cast %123 : vector<8xf32> to vector<8x1xf32>
    %cst_54 = arith.constant 3.200000e+01 : f32
    %125 = vector.broadcast %cst_54 : f32 to vector<8x1xf32>
    %126 = arith.divf %124, %125 : vector<8x1xf32>
    %127 = vector.broadcast %119 : vector<8x1xf32> to vector<8x32xf32>
    %128 = arith.subf %115, %127 : vector<8x32xf32>
    %cst_55 = arith.constant 9.99999974E-6 : f32
    %129 = vector.broadcast %cst_55 : f32 to vector<8x1xf32>
    %130 = arith.addf %126, %129 : vector<8x1xf32>
    %131 = math.rsqrt %130 : vector<8x1xf32>
    %132 = vector.broadcast %131 : vector<8x1xf32> to vector<8x32xf32>
    %133 = arith.mulf %128, %132 : vector<8x32xf32>
    %c0_56 = arith.constant 0 : index
    %c0_57 = arith.constant 0 : index
    %134 = vector.load %arg11[%c0_56, %c0_57] : memref<1x32xf32, #tpu.memory_space<vmem>>, vector<1x32xf32>
    %135 = vector.broadcast %134 : vector<1x32xf32> to vector<8x32xf32>
    %136 = arith.mulf %133, %135 : vector<8x32xf32>
    %c0_58 = arith.constant 0 : index
    %c0_59 = arith.constant 0 : index
    %137 = vector.load %arg12[%c0_58, %c0_59] : memref<1x32xf32, #tpu.memory_space<vmem>>, vector<1x32xf32>
    %138 = vector.broadcast %137 : vector<1x32xf32> to vector<8x32xf32>
    %139 = arith.addf %136, %138 : vector<8x32xf32>
    %c0_60 = arith.constant 0 : index
    %c0_61 = arith.constant 0 : index
    %c0_62 = arith.constant 0 : index
    %140 = vector.load %arg13[%c0_60, %c0_61, %c0_62] : memref<1x8x32xf32, #tpu.memory_space<vmem>>, vector<1x8x32xf32>
    %141 = vector.shape_cast %140 : vector<1x8x32xf32> to vector<8x32xf32>
    %142 = vector.shape_cast %139 : vector<8x32xf32> to vector<1x8x32xf32>
    tpu.vector_store %arg13[%c0_60, %c0_61, %c0_62], %142 {strides = array<i32>} : memref<1x8x32xf32, #tpu.memory_space<vmem>>, vector<1x8x32xf32>,
    return
  }
  func.func @transform_0(%arg0: i32, %arg1: i32) -> (i32, i32, i32) {
    %c0_i32 = arith.constant 0 : i32
    %c0_i32_0 = arith.constant 0 : i32
    return %arg0, %arg1, %c0_i32 : i32, i32, i32
  }
  func.func @transform_1(%arg0: i32, %arg1: i32) -> (i32, i32, i32) {
    %c0_i32 = arith.constant 0 : i32
    %c0_i32_0 = arith.constant 0 : i32
    %c0_i32_1 = arith.constant 0 : i32
    return %arg0, %c0_i32, %c0_i32_0 : i32, i32, i32
  }
  func.func @transform_2(%arg0: i32, %arg1: i32) -> (i32, i32, i32) {
    %c0_i32 = arith.constant 0 : i32
    %c0_i32_0 = arith.constant 0 : i32
    %c0_i32_1 = arith.constant 0 : i32
    return %arg0, %c0_i32, %c0_i32_0 : i32, i32, i32
  }
  func.func @transform_3(%arg0: i32, %arg1: i32) -> (i32, i32) {
    %c0_i32 = arith.constant 0 : i32
    %c0_i32_0 = arith.constant 0 : i32
    %c0_i32_1 = arith.constant 0 : i32
    return %c0_i32, %c0_i32_0 : i32, i32
  }
  func.func @transform_4(%arg0: i32, %arg1: i32) -> (i32, i32) {
    %c0_i32 = arith.constant 0 : i32
    %c0_i32_0 = arith.constant 0 : i32
    %c0_i32_1 = arith.constant 0 : i32
    return %c0_i32, %c0_i32_0 : i32, i32
  }
  func.func @transform_5(%arg0: i32, %arg1: i32) -> (i32, i32) {
    %c0_i32 = arith.constant 0 : i32
    %c0_i32_0 = arith.constant 0 : i32
    %c0_i32_1 = arith.constant 0 : i32
    return %c0_i32, %c0_i32_0 : i32, i32
  }
  func.func @transform_6(%arg0: i32, %arg1: i32) -> (i32, i32) {
    %c0_i32 = arith.constant 0 : i32
    %c0_i32_0 = arith.constant 0 : i32
    %c0_i32_1 = arith.constant 0 : i32
    return %c0_i32, %c0_i32_0 : i32, i32
  }
  func.func @transform_7(%arg0: i32, %arg1: i32) -> (i32, i32) {
    %c0_i32 = arith.constant 0 : i32
    %c0_i32_0 = arith.constant 0 : i32
    %c0_i32_1 = arith.constant 0 : i32
    return %c0_i32, %c0_i32_0 : i32, i32
  }
  func.func @transform_8(%arg0: i32, %arg1: i32) -> (i32, i32) {
    %c0_i32 = arith.constant 0 : i32
    %c0_i32_0 = arith.constant 0 : i32
    %c0_i32_1 = arith.constant 0 : i32
    return %c0_i32, %c0_i32_0 : i32, i32
  }
  func.func @transform_9(%arg0: i32, %arg1: i32) -> (i32, i32) {
    %c0_i32 = arith.constant 0 : i32
    %c0_i32_0 = arith.constant 0 : i32
    %c0_i32_1 = arith.constant 0 : i32
    return %c0_i32, %c0_i32_0 : i32, i32
  }
  func.func @transform_10(%arg0: i32, %arg1: i32) -> (i32, i32) {
    %c0_i32 = arith.constant 0 : i32
    %c0_i32_0 = arith.constant 0 : i32
    %c0_i32_1 = arith.constant 0 : i32
    return %c0_i32, %c0_i32_0 : i32, i32
  }
  func.func @transform_11(%arg0: i32, %arg1: i32) -> (i32, i32, i32) {
    %c0_i32 = arith.constant 0 : i32
    %c0_i32_0 = arith.constant 0 : i32
    return %arg0, %arg1, %c0_i32 : i32, i32, i32
  }
}

module attributes {stable_mosaic.version = 11 : i64} {
  func.func @_cross_attn_block_kernel(%arg0: i32, %arg1: i32, %arg2: memref<1x8x32xf32, #tpu.memory_space<vmem>>, %arg3: memref<1x4x32xf32, #tpu.memory_space<vmem>>, %arg4: memref<32x32xf32, #tpu.memory_space<vmem>>, %arg5: memref<1x32xf32, #tpu.memory_space<vmem>>, %arg6: memref<32x64xf32, #tpu.memory_space<vmem>>, %arg7: memref<1x64xf32, #tpu.memory_space<vmem>>, %arg8: memref<32x32xf32, #tpu.memory_space<vmem>>, %arg9: memref<1x32xf32, #tpu.memory_space<vmem>>, %arg10: memref<1x32xf32, #tpu.memory_space<vmem>>, %arg11: memref<1x32xf32, #tpu.memory_space<vmem>>, %arg12: memref<1x8x32xf32, #tpu.memory_space<vmem>>, %arg13: memref<1x4x8x4xf32, #tpu.memory_space<vmem>>) attributes {dimension_semantics = [#tpu.dimension_semantics<parallel>, #tpu.dimension_semantics<parallel>], iteration_bounds = array<i64: 2, 1>, scalar_prefetch = 0 : i64, scratch_operands = 0 : i64, tpu.core_type = #tpu.core_type<tc>, window_params = [{transform_indices = @transform_0, window_bounds = array<i64: 1, 8, 32>}, {transform_indices = @transform_1, window_bounds = array<i64: 1, 4, 32>}, {pipeline_mode = #tpu.pipeline_mode<synchronous>, transform_indices = @transform_2, window_bounds = array<i64: 32, 32>}, {pipeline_mode = #tpu.pipeline_mode<synchronous>, transform_indices = @transform_3, window_bounds = array<i64: 1, 32>}, {pipeline_mode = #tpu.pipeline_mode<synchronous>, transform_indices = @transform_4, window_bounds = array<i64: 32, 64>}, {pipeline_mode = #tpu.pipeline_mode<synchronous>, transform_indices = @transform_5, window_bounds = array<i64: 1, 64>}, {pipeline_mode = #tpu.pipeline_mode<synchronous>, transform_indices = @transform_6, window_bounds = array<i64: 32, 32>}, {pipeline_mode = #tpu.pipeline_mode<synchronous>, transform_indices = @transform_7, window_bounds = array<i64: 1, 32>}, {pipeline_mode = #tpu.pipeline_mode<synchronous>, transform_indices = @transform_8, window_bounds = array<i64: 1, 32>}, {pipeline_mode = #tpu.pipeline_mode<synchronous>, transform_indices = @transform_9, window_bounds = array<i64: 1, 32>}, {transform_indices = @transform_10, window_bounds = array<i64: 1, 8, 32>}, {transform_indices = @transform_11, window_bounds = array<i64: 1, 4, 8, 4>}]} {
    %c0 = arith.constant 0 : index
    %c0_0 = arith.constant 0 : index
    %c0_1 = arith.constant 0 : index
    %0 = vector.load %arg2[%c0, %c0_0, %c0_1] : memref<1x8x32xf32, #tpu.memory_space<vmem>>, vector<1x8x32xf32>
    %1 = vector.shape_cast %0 : vector<1x8x32xf32> to vector<8x32xf32>
    %c0_2 = arith.constant 0 : index
    %c0_3 = arith.constant 0 : index
    %c0_4 = arith.constant 0 : index
    %2 = vector.load %arg3[%c0_2, %c0_3, %c0_4] : memref<1x4x32xf32, #tpu.memory_space<vmem>>, vector<1x4x32xf32>
    %3 = vector.shape_cast %2 : vector<1x4x32xf32> to vector<4x32xf32>
    %c0_5 = arith.constant 0 : index
    %c0_6 = arith.constant 0 : index
    %4 = vector.load %arg4[%c0_5, %c0_6] : memref<32x32xf32, #tpu.memory_space<vmem>>, vector<32x32xf32>
    %cst = arith.constant dense<0.000000e+00> : vector<8x32xf32>
    %5 = tpu.matmul %1, %4, %cst {dimension_numbers = #tpu.dot_dimension_numbers<[1], [0], [0], [1], [0, 0, 1, 1], [], []>} : vector<8x32xf32>, vector<32x32xf32>, vector<8x32xf32> -> vector<8x32xf32>
    %c0_7 = arith.constant 0 : index
    %c0_8 = arith.constant 0 : index
    %6 = vector.load %arg5[%c0_7, %c0_8] : memref<1x32xf32, #tpu.memory_space<vmem>>, vector<1x32xf32>
    %7 = vector.broadcast %6 : vector<1x32xf32> to vector<8x32xf32>
    %8 = arith.addf %5, %7 : vector<8x32xf32>
    %c0_9 = arith.constant 0 : index
    %c0_10 = arith.constant 0 : index
    %9 = vector.load %arg6[%c0_9, %c0_10] : memref<32x64xf32, #tpu.memory_space<vmem>>, vector<32x64xf32>
    %cst_11 = arith.constant dense<0.000000e+00> : vector<4x64xf32>
    %10 = tpu.matmul %3, %9, %cst_11 {dimension_numbers = #tpu.dot_dimension_numbers<[1], [0], [0], [1], [0, 0, 1, 1], [], []>} : vector<4x32xf32>, vector<32x64xf32>, vector<4x64xf32> -> vector<4x64xf32>
    %c0_12 = arith.constant 0 : index
    %c0_13 = arith.constant 0 : index
    %11 = vector.load %arg7[%c0_12, %c0_13] : memref<1x64xf32, #tpu.memory_space<vmem>>, vector<1x64xf32>
    %12 = vector.broadcast %11 : vector<1x64xf32> to vector<4x64xf32>
    %13 = arith.addf %10, %12 : vector<4x64xf32>
    %cst_14 = arith.constant 0.000000e+00 : f32
    %14 = vector.broadcast %cst_14 : f32 to vector<8x32xf32>
    %15 = vector.extract_strided_slice %8 {offsets = [0, 0], sizes = [8, 8], strides = [1, 1]} : vector<8x32xf32> to vector<8x8xf32>
    %cst_15 = arith.constant 0.353553385 : f32
    %16 = vector.broadcast %cst_15 : f32 to vector<8x8xf32>
    %17 = arith.mulf %15, %16 : vector<8x8xf32>
    %18 = vector.extract_strided_slice %13 {offsets = [0, 0], sizes = [4, 8], strides = [1, 1]} : vector<4x64xf32> to vector<4x8xf32>
    %19 = vector.extract_strided_slice %13 {offsets = [0, 32], sizes = [4, 8], strides = [1, 1]} : vector<4x64xf32> to vector<4x8xf32>
    %cst_16 = arith.constant dense<0.000000e+00> : vector<8x4xf32>
    %20 = tpu.matmul %17, %18, %cst_16 {dimension_numbers = #tpu.dot_dimension_numbers<[1], [1], [0], [0], [0, 0, 1, 0], [], []>} : vector<8x8xf32>, vector<4x8xf32>, vector<8x4xf32> -> vector<8x4xf32>
    %cst_17 = arith.constant dense<0xFF800000> : vector<8xf32>
    %21 = vector.multi_reduction <maximumf>, %20, %cst_17 [1] : vector<8x4xf32> to vector<8xf32>
    %22 = vector.shape_cast %21 : vector<8xf32> to vector<8x1xf32>
    %23 = vector.broadcast %22 : vector<8x1xf32> to vector<8x4xf32>
    %24 = arith.subf %20, %23 : vector<8x4xf32>
    %25 = math.exp %24 : vector<8x4xf32>
    %cst_18 = arith.constant dense<0.000000e+00> : vector<8xf32>
    %26 = vector.multi_reduction <add>, %25, %cst_18 [1] : vector<8x4xf32> to vector<8xf32>
    %27 = vector.shape_cast %26 : vector<8xf32> to vector<8x1xf32>
    %28 = vector.broadcast %27 : vector<8x1xf32> to vector<8x4xf32>
    %29 = arith.divf %25, %28 : vector<8x4xf32>
    %c0_19 = arith.constant 0 : index
    %c0_20 = arith.constant 0 : index
    %c0_21 = arith.constant 0 : index
    %c0_22 = arith.constant 0 : index
    %30 = vector.load %arg13[%c0_19, %c0_20, %c0_21, %c0_22] : memref<1x4x8x4xf32, #tpu.memory_space<vmem>>, vector<1x1x8x4xf32>
    %31 = vector.shape_cast %30 : vector<1x1x8x4xf32> to vector<8x4xf32>
    %32 = vector.shape_cast %29 : vector<8x4xf32> to vector<1x1x8x4xf32>
    tpu.vector_store %arg13[%c0_19, %c0_20, %c0_21, %c0_22], %32 {strides = array<i32>} : memref<1x4x8x4xf32, #tpu.memory_space<vmem>>, vector<1x1x8x4xf32>,
    %cst_23 = arith.constant dense<0.000000e+00> : vector<8x8xf32>
    %33 = tpu.matmul %29, %19, %cst_23 {dimension_numbers = #tpu.dot_dimension_numbers<[1], [0], [0], [1], [0, 0, 1, 1], [], []>} : vector<8x4xf32>, vector<4x8xf32>, vector<8x8xf32> -> vector<8x8xf32>
    %c0_24 = arith.constant 0 : index
    %c0_25 = arith.constant 0 : index
    %34 = vector.load %arg8[%c0_24, %c0_25] : memref<32x32xf32, #tpu.memory_space<vmem>>, vector<8x32xf32>
    %cst_26 = arith.constant dense<0.000000e+00> : vector<8x32xf32>
    %35 = tpu.matmul %33, %34, %cst_26 {dimension_numbers = #tpu.dot_dimension_numbers<[1], [0], [0], [1], [0, 0, 1, 1], [], []>} : vector<8x8xf32>, vector<8x32xf32>, vector<8x32xf32> -> vector<8x32xf32>
    %36 = arith.addf %14, %35 : vector<8x32xf32>
    %37 = vector.extract_strided_slice %8 {offsets = [0, 8], sizes = [8, 8], strides = [1, 1]} : vector<8x32xf32> to vector<8x8xf32>
    %cst_27 = arith.constant 0.353553385 : f32
    %38 = vector.broadcast %cst_27 : f32 to vector<8x8xf32>
    %39 = arith.mulf %37, %38 : vector<8x8xf32>
    %40 = vector.extract_strided_slice %13 {offsets = [0, 8], sizes = [4, 8], strides = [1, 1]} : vector<4x64xf32> to vector<4x8xf32>
    %41 = vector.extract_strided_slice %13 {offsets = [0, 40], sizes = [4, 8], strides = [1, 1]} : vector<4x64xf32> to vector<4x8xf32>
    %cst_28 = arith.constant dense<0.000000e+00> : vector<8x4xf32>
    %42 = tpu.matmul %39, %40, %cst_28 {dimension_numbers = #tpu.dot_dimension_numbers<[1], [1], [0], [0], [0, 0, 1, 0], [], []>} : vector<8x8xf32>, vector<4x8xf32>, vector<8x4xf32> -> vector<8x4xf32>
    %cst_29 = arith.constant dense<0xFF800000> : vector<8xf32>
    %43 = vector.multi_reduction <maximumf>, %42, %cst_29 [1] : vector<8x4xf32> to vector<8xf32>
    %44 = vector.shape_cast %43 : vector<8xf32> to vector<8x1xf32>
    %45 = vector.broadcast %44 : vector<8x1xf32> to vector<8x4xf32>
    %46 = arith.subf %42, %45 : vector<8x4xf32>
    %47 = math.exp %46 : vector<8x4xf32>
    %cst_30 = arith.constant dense<0.000000e+00> : vector<8xf32>
    %48 = vector.multi_reduction <add>, %47, %cst_30 [1] : vector<8x4xf32> to vector<8xf32>
    %49 = vector.shape_cast %48 : vector<8xf32> to vector<8x1xf32>
    %50 = vector.broadcast %49 : vector<8x1xf32> to vector<8x4xf32>
    %51 = arith.divf %47, %50 : vector<8x4xf32>
    %c0_31 = arith.constant 0 : index
    %c1 = arith.constant 1 : index
    %c0_32 = arith.constant 0 : index
    %c0_33 = arith.constant 0 : index
    %52 = vector.load %arg13[%c0_31, %c1, %c0_32, %c0_33] : memref<1x4x8x4xf32, #tpu.memory_space<vmem>>, vector<1x1x8x4xf32>
    %53 = vector.shape_cast %52 : vector<1x1x8x4xf32> to vector<8x4xf32>
    %54 = vector.shape_cast %51 : vector<8x4xf32> to vector<1x1x8x4xf32>
    tpu.vector_store %arg13[%c0_31, %c1, %c0_32, %c0_33], %54 {strides = array<i32>} : memref<1x4x8x4xf32, #tpu.memory_space<vmem>>, vector<1x1x8x4xf32>,
    %cst_34 = arith.constant dense<0.000000e+00> : vector<8x8xf32>
    %55 = tpu.matmul %51, %41, %cst_34 {dimension_numbers = #tpu.dot_dimension_numbers<[1], [0], [0], [1], [0, 0, 1, 1], [], []>} : vector<8x4xf32>, vector<4x8xf32>, vector<8x8xf32> -> vector<8x8xf32>
    %c8 = arith.constant 8 : index
    %c0_35 = arith.constant 0 : index
    %56 = vector.load %arg8[%c8, %c0_35] : memref<32x32xf32, #tpu.memory_space<vmem>>, vector<8x32xf32>
    %cst_36 = arith.constant dense<0.000000e+00> : vector<8x32xf32>
    %57 = tpu.matmul %55, %56, %cst_36 {dimension_numbers = #tpu.dot_dimension_numbers<[1], [0], [0], [1], [0, 0, 1, 1], [], []>} : vector<8x8xf32>, vector<8x32xf32>, vector<8x32xf32> -> vector<8x32xf32>
    %58 = arith.addf %36, %57 : vector<8x32xf32>
    %59 = vector.extract_strided_slice %8 {offsets = [0, 16], sizes = [8, 8], strides = [1, 1]} : vector<8x32xf32> to vector<8x8xf32>
    %cst_37 = arith.constant 0.353553385 : f32
    %60 = vector.broadcast %cst_37 : f32 to vector<8x8xf32>
    %61 = arith.mulf %59, %60 : vector<8x8xf32>
    %62 = vector.extract_strided_slice %13 {offsets = [0, 16], sizes = [4, 8], strides = [1, 1]} : vector<4x64xf32> to vector<4x8xf32>
    %63 = vector.extract_strided_slice %13 {offsets = [0, 48], sizes = [4, 8], strides = [1, 1]} : vector<4x64xf32> to vector<4x8xf32>
    %cst_38 = arith.constant dense<0.000000e+00> : vector<8x4xf32>
    %64 = tpu.matmul %61, %62, %cst_38 {dimension_numbers = #tpu.dot_dimension_numbers<[1], [1], [0], [0], [0, 0, 1, 0], [], []>} : vector<8x8xf32>, vector<4x8xf32>, vector<8x4xf32> -> vector<8x4xf32>
    %cst_39 = arith.constant dense<0xFF800000> : vector<8xf32>
    %65 = vector.multi_reduction <maximumf>, %64, %cst_39 [1] : vector<8x4xf32> to vector<8xf32>
    %66 = vector.shape_cast %65 : vector<8xf32> to vector<8x1xf32>
    %67 = vector.broadcast %66 : vector<8x1xf32> to vector<8x4xf32>
    %68 = arith.subf %64, %67 : vector<8x4xf32>
    %69 = math.exp %68 : vector<8x4xf32>
    %cst_40 = arith.constant dense<0.000000e+00> : vector<8xf32>
    %70 = vector.multi_reduction <add>, %69, %cst_40 [1] : vector<8x4xf32> to vector<8xf32>
    %71 = vector.shape_cast %70 : vector<8xf32> to vector<8x1xf32>
    %72 = vector.broadcast %71 : vector<8x1xf32> to vector<8x4xf32>
    %73 = arith.divf %69, %72 : vector<8x4xf32>
    %c0_41 = arith.constant 0 : index
    %c2 = arith.constant 2 : index
    %c0_42 = arith.constant 0 : index
    %c0_43 = arith.constant 0 : index
    %74 = vector.load %arg13[%c0_41, %c2, %c0_42, %c0_43] : memref<1x4x8x4xf32, #tpu.memory_space<vmem>>, vector<1x1x8x4xf32>
    %75 = vector.shape_cast %74 : vector<1x1x8x4xf32> to vector<8x4xf32>
    %76 = vector.shape_cast %73 : vector<8x4xf32> to vector<1x1x8x4xf32>
    tpu.vector_store %arg13[%c0_41, %c2, %c0_42, %c0_43], %76 {strides = array<i32>} : memref<1x4x8x4xf32, #tpu.memory_space<vmem>>, vector<1x1x8x4xf32>,
    %cst_44 = arith.constant dense<0.000000e+00> : vector<8x8xf32>
    %77 = tpu.matmul %73, %63, %cst_44 {dimension_numbers = #tpu.dot_dimension_numbers<[1], [0], [0], [1], [0, 0, 1, 1], [], []>} : vector<8x4xf32>, vector<4x8xf32>, vector<8x8xf32> -> vector<8x8xf32>
    %c16 = arith.constant 16 : index
    %c0_45 = arith.constant 0 : index
    %78 = vector.load %arg8[%c16, %c0_45] : memref<32x32xf32, #tpu.memory_space<vmem>>, vector<8x32xf32>
    %cst_46 = arith.constant dense<0.000000e+00> : vector<8x32xf32>
    %79 = tpu.matmul %77, %78, %cst_46 {dimension_numbers = #tpu.dot_dimension_numbers<[1], [0], [0], [1], [0, 0, 1, 1], [], []>} : vector<8x8xf32>, vector<8x32xf32>, vector<8x32xf32> -> vector<8x32xf32>
    %80 = arith.addf %58, %79 : vector<8x32xf32>
    %81 = vector.extract_strided_slice %8 {offsets = [0, 24], sizes = [8, 8], strides = [1, 1]} : vector<8x32xf32> to vector<8x8xf32>
    %cst_47 = arith.constant 0.353553385 : f32
    %82 = vector.broadcast %cst_47 : f32 to vector<8x8xf32>
    %83 = arith.mulf %81, %82 : vector<8x8xf32>
    %84 = vector.extract_strided_slice %13 {offsets = [0, 24], sizes = [4, 8], strides = [1, 1]} : vector<4x64xf32> to vector<4x8xf32>
    %85 = vector.extract_strided_slice %13 {offsets = [0, 56], sizes = [4, 8], strides = [1, 1]} : vector<4x64xf32> to vector<4x8xf32>
    %cst_48 = arith.constant dense<0.000000e+00> : vector<8x4xf32>
    %86 = tpu.matmul %83, %84, %cst_48 {dimension_numbers = #tpu.dot_dimension_numbers<[1], [1], [0], [0], [0, 0, 1, 0], [], []>} : vector<8x8xf32>, vector<4x8xf32>, vector<8x4xf32> -> vector<8x4xf32>
    %cst_49 = arith.constant dense<0xFF800000> : vector<8xf32>
    %87 = vector.multi_reduction <maximumf>, %86, %cst_49 [1] : vector<8x4xf32> to vector<8xf32>
    %88 = vector.shape_cast %87 : vector<8xf32> to vector<8x1xf32>
    %89 = vector.broadcast %88 : vector<8x1xf32> to vector<8x4xf32>
    %90 = arith.subf %86, %89 : vector<8x4xf32>
    %91 = math.exp %90 : vector<8x4xf32>
    %cst_50 = arith.constant dense<0.000000e+00> : vector<8xf32>
    %92 = vector.multi_reduction <add>, %91, %cst_50 [1] : vector<8x4xf32> to vector<8xf32>
    %93 = vector.shape_cast %92 : vector<8xf32> to vector<8x1xf32>
    %94 = vector.broadcast %93 : vector<8x1xf32> to vector<8x4xf32>
    %95 = arith.divf %91, %94 : vector<8x4xf32>
    %c0_51 = arith.constant 0 : index
    %c3 = arith.constant 3 : index
    %c0_52 = arith.constant 0 : index
    %c0_53 = arith.constant 0 : index
    %96 = vector.load %arg13[%c0_51, %c3, %c0_52, %c0_53] : memref<1x4x8x4xf32, #tpu.memory_space<vmem>>, vector<1x1x8x4xf32>
    %97 = vector.shape_cast %96 : vector<1x1x8x4xf32> to vector<8x4xf32>
    %98 = vector.shape_cast %95 : vector<8x4xf32> to vector<1x1x8x4xf32>
    tpu.vector_store %arg13[%c0_51, %c3, %c0_52, %c0_53], %98 {strides = array<i32>} : memref<1x4x8x4xf32, #tpu.memory_space<vmem>>, vector<1x1x8x4xf32>,
    %cst_54 = arith.constant dense<0.000000e+00> : vector<8x8xf32>
    %99 = tpu.matmul %95, %85, %cst_54 {dimension_numbers = #tpu.dot_dimension_numbers<[1], [0], [0], [1], [0, 0, 1, 1], [], []>} : vector<8x4xf32>, vector<4x8xf32>, vector<8x8xf32> -> vector<8x8xf32>
    %c24 = arith.constant 24 : index
    %c0_55 = arith.constant 0 : index
    %100 = vector.load %arg8[%c24, %c0_55] : memref<32x32xf32, #tpu.memory_space<vmem>>, vector<8x32xf32>
    %cst_56 = arith.constant dense<0.000000e+00> : vector<8x32xf32>
    %101 = tpu.matmul %99, %100, %cst_56 {dimension_numbers = #tpu.dot_dimension_numbers<[1], [0], [0], [1], [0, 0, 1, 1], [], []>} : vector<8x8xf32>, vector<8x32xf32>, vector<8x32xf32> -> vector<8x32xf32>
    %102 = arith.addf %80, %101 : vector<8x32xf32>
    %c0_57 = arith.constant 0 : index
    %c0_58 = arith.constant 0 : index
    %103 = vector.load %arg9[%c0_57, %c0_58] : memref<1x32xf32, #tpu.memory_space<vmem>>, vector<1x32xf32>
    %104 = vector.broadcast %103 : vector<1x32xf32> to vector<8x32xf32>
    %105 = arith.addf %102, %104 : vector<8x32xf32>
    %106 = arith.addf %105, %1 : vector<8x32xf32>
    %cst_59 = arith.constant dense<0.000000e+00> : vector<8xf32>
    %107 = vector.multi_reduction <add>, %106, %cst_59 [1] : vector<8x32xf32> to vector<8xf32>
    %108 = vector.shape_cast %107 : vector<8xf32> to vector<8x1xf32>
    %cst_60 = arith.constant 3.200000e+01 : f32
    %109 = vector.broadcast %cst_60 : f32 to vector<8x1xf32>
    %110 = arith.divf %108, %109 : vector<8x1xf32>
    %111 = vector.broadcast %110 : vector<8x1xf32> to vector<8x32xf32>
    %112 = arith.subf %106, %111 : vector<8x32xf32>
    %113 = arith.mulf %112, %112 : vector<8x32xf32>
    %cst_61 = arith.constant dense<0.000000e+00> : vector<8xf32>
    %114 = vector.multi_reduction <add>, %113, %cst_61 [1] : vector<8x32xf32> to vector<8xf32>
    %115 = vector.shape_cast %114 : vector<8xf32> to vector<8x1xf32>
    %cst_62 = arith.constant 3.200000e+01 : f32
    %116 = vector.broadcast %cst_62 : f32 to vector<8x1xf32>
    %117 = arith.divf %115, %116 : vector<8x1xf32>
    %118 = vector.broadcast %110 : vector<8x1xf32> to vector<8x32xf32>
    %119 = arith.subf %106, %118 : vector<8x32xf32>
    %cst_63 = arith.constant 9.99999974E-6 : f32
    %120 = vector.broadcast %cst_63 : f32 to vector<8x1xf32>
    %121 = arith.addf %117, %120 : vector<8x1xf32>
    %122 = math.rsqrt %121 : vector<8x1xf32>
    %123 = vector.broadcast %122 : vector<8x1xf32> to vector<8x32xf32>
    %124 = arith.mulf %119, %123 : vector<8x32xf32>
    %c0_64 = arith.constant 0 : index
    %c0_65 = arith.constant 0 : index
    %125 = vector.load %arg10[%c0_64, %c0_65] : memref<1x32xf32, #tpu.memory_space<vmem>>, vector<1x32xf32>
    %126 = vector.broadcast %125 : vector<1x32xf32> to vector<8x32xf32>
    %127 = arith.mulf %124, %126 : vector<8x32xf32>
    %c0_66 = arith.constant 0 : index
    %c0_67 = arith.constant 0 : index
    %128 = vector.load %arg11[%c0_66, %c0_67] : memref<1x32xf32, #tpu.memory_space<vmem>>, vector<1x32xf32>
    %129 = vector.broadcast %128 : vector<1x32xf32> to vector<8x32xf32>
    %130 = arith.addf %127, %129 : vector<8x32xf32>
    %c0_68 = arith.constant 0 : index
    %c0_69 = arith.constant 0 : index
    %c0_70 = arith.constant 0 : index
    %131 = vector.load %arg12[%c0_68, %c0_69, %c0_70] : memref<1x8x32xf32, #tpu.memory_space<vmem>>, vector<1x8x32xf32>
    %132 = vector.shape_cast %131 : vector<1x8x32xf32> to vector<8x32xf32>
    %133 = vector.shape_cast %130 : vector<8x32xf32> to vector<1x8x32xf32>
    tpu.vector_store %arg12[%c0_68, %c0_69, %c0_70], %133 {strides = array<i32>} : memref<1x8x32xf32, #tpu.memory_space<vmem>>, vector<1x8x32xf32>,
    return
  }
  func.func @transform_0(%arg0: i32, %arg1: i32) -> (i32, i32, i32) {
    %c0_i32 = arith.constant 0 : i32
    %c0_i32_0 = arith.constant 0 : i32
    return %arg0, %arg1, %c0_i32 : i32, i32, i32
  }
  func.func @transform_1(%arg0: i32, %arg1: i32) -> (i32, i32, i32) {
    %c0_i32 = arith.constant 0 : i32
    %c0_i32_0 = arith.constant 0 : i32
    %c0_i32_1 = arith.constant 0 : i32
    return %arg0, %c0_i32, %c0_i32_0 : i32, i32, i32
  }
  func.func @transform_2(%arg0: i32, %arg1: i32) -> (i32, i32) {
    %c0_i32 = arith.constant 0 : i32
    %c0_i32_0 = arith.constant 0 : i32
    %c0_i32_1 = arith.constant 0 : i32
    return %c0_i32, %c0_i32_0 : i32, i32
  }
  func.func @transform_3(%arg0: i32, %arg1: i32) -> (i32, i32) {
    %c0_i32 = arith.constant 0 : i32
    %c0_i32_0 = arith.constant 0 : i32
    %c0_i32_1 = arith.constant 0 : i32
    return %c0_i32, %c0_i32_0 : i32, i32
  }
  func.func @transform_4(%arg0: i32, %arg1: i32) -> (i32, i32) {
    %c0_i32 = arith.constant 0 : i32
    %c0_i32_0 = arith.constant 0 : i32
    %c0_i32_1 = arith.constant 0 : i32
    return %c0_i32, %c0_i32_0 : i32, i32
  }
  func.func @transform_5(%arg0: i32, %arg1: i32) -> (i32, i32) {
    %c0_i32 = arith.constant 0 : i32
    %c0_i32_0 = arith.constant 0 : i32
    %c0_i32_1 = arith.constant 0 : i32
    return %c0_i32, %c0_i32_0 : i32, i32
  }
  func.func @transform_6(%arg0: i32, %arg1: i32) -> (i32, i32) {
    %c0_i32 = arith.constant 0 : i32
    %c0_i32_0 = arith.constant 0 : i32
    %c0_i32_1 = arith.constant 0 : i32
    return %c0_i32, %c0_i32_0 : i32, i32
  }
  func.func @transform_7(%arg0: i32, %arg1: i32) -> (i32, i32) {
    %c0_i32 = arith.constant 0 : i32
    %c0_i32_0 = arith.constant 0 : i32
    %c0_i32_1 = arith.constant 0 : i32
    return %c0_i32, %c0_i32_0 : i32, i32
  }
  func.func @transform_8(%arg0: i32, %arg1: i32) -> (i32, i32) {
    %c0_i32 = arith.constant 0 : i32
    %c0_i32_0 = arith.constant 0 : i32
    %c0_i32_1 = arith.constant 0 : i32
    return %c0_i32, %c0_i32_0 : i32, i32
  }
  func.func @transform_9(%arg0: i32, %arg1: i32) -> (i32, i32) {
    %c0_i32 = arith.constant 0 : i32
    %c0_i32_0 = arith.constant 0 : i32
    %c0_i32_1 = arith.constant 0 : i32
    return %c0_i32, %c0_i32_0 : i32, i32
  }
  func.func @transform_10(%arg0: i32, %arg1: i32) -> (i32, i32, i32) {
    %c0_i32 = arith.constant 0 : i32
    %c0_i32_0 = arith.constant 0 : i32
    return %arg0, %arg1, %c0_i32 : i32, i32, i32
  }
  func.func @transform_11(%arg0: i32, %arg1: i32) -> (i32, i32, i32, i32) {
    %c0_i32 = arith.constant 0 : i32
    %c0_i32_0 = arith.constant 0 : i32
    %c0_i32_1 = arith.constant 0 : i32
    return %arg0, %c0_i32, %arg1, %c0_i32_0 : i32, i32, i32, i32
  }
}

module attributes {stable_mosaic.version = 11 : i64} {
  func.func @_ffn_ln_kernel(%arg0: i32, %arg1: i32, %arg2: memref<16x32xf32, #tpu.memory_space<vmem>>, %arg3: memref<32x64xf32, #tpu.memory_space<vmem>>, %arg4: memref<1x64xf32, #tpu.memory_space<vmem>>, %arg5: memref<64x32xf32, #tpu.memory_space<vmem>>, %arg6: memref<1x32xf32, #tpu.memory_space<vmem>>, %arg7: memref<1x32xf32, #tpu.memory_space<vmem>>, %arg8: memref<1x32xf32, #tpu.memory_space<vmem>>, %arg9: memref<16x32xf32, #tpu.memory_space<vmem>>, %arg10: memref<16x32xf32, #tpu.memory_space<vmem>>) attributes {dimension_semantics = [#tpu.dimension_semantics<parallel>, #tpu.dimension_semantics<arbitrary>], iteration_bounds = array<i64: 1, 1>, scalar_prefetch = 0 : i64, scratch_operands = 1 : i64, tpu.core_type = #tpu.core_type<tc>, window_params = [{transform_indices = @transform_0, window_bounds = array<i64: 16, 32>}, {transform_indices = @transform_1, window_bounds = array<i64: 32, 64>}, {transform_indices = @transform_2, window_bounds = array<i64: 1, 64>}, {transform_indices = @transform_3, window_bounds = array<i64: 64, 32>}, {pipeline_mode = #tpu.pipeline_mode<synchronous>, transform_indices = @transform_4, window_bounds = array<i64: 1, 32>}, {pipeline_mode = #tpu.pipeline_mode<synchronous>, transform_indices = @transform_5, window_bounds = array<i64: 1, 32>}, {pipeline_mode = #tpu.pipeline_mode<synchronous>, transform_indices = @transform_6, window_bounds = array<i64: 1, 32>}, {transform_indices = @transform_7, window_bounds = array<i64: 16, 32>}]} {
    %c0_i32 = arith.constant 0 : i32
    %0 = arith.cmpi eq, %arg1, %c0_i32 : i32
    %1 = arith.extui %0 : i1 to i32
    %c0_i32_0 = arith.constant 0 : i32
    %2 = arith.cmpi ne, %1, %c0_i32_0 : i32
    scf.if %2 {
      %cst_16 = arith.constant 0.000000e+00 : f32
      %19 = vector.broadcast %cst_16 : f32 to vector<16x32xf32>
      %c0_17 = arith.constant 0 : index
      %c0_18 = arith.constant 0 : index
      %20 = vector.load %arg10[%c0_17, %c0_18] : memref<16x32xf32, #tpu.memory_space<vmem>>, vector<16x32xf32>
      tpu.vector_store %arg10[%c0_17, %c0_18], %19 {strides = array<i32>} : memref<16x32xf32, #tpu.memory_space<vmem>>, vector<16x32xf32>,
    } else {
    }
    %c0 = arith.constant 0 : index
    %c0_1 = arith.constant 0 : index
    %3 = vector.load %arg2[%c0, %c0_1] : memref<16x32xf32, #tpu.memory_space<vmem>>, vector<16x32xf32>
    %c0_2 = arith.constant 0 : index
    %c0_3 = arith.constant 0 : index
    %4 = vector.load %arg3[%c0_2, %c0_3] : memref<32x64xf32, #tpu.memory_space<vmem>>, vector<32x64xf32>
    %cst = arith.constant dense<0.000000e+00> : vector<16x64xf32>
    %5 = tpu.matmul %3, %4, %cst {dimension_numbers = #tpu.dot_dimension_numbers<[1], [0], [0], [1], [0, 0, 1, 1], [], []>} : vector<16x32xf32>, vector<32x64xf32>, vector<16x64xf32> -> vector<16x64xf32>
    %c0_4 = arith.constant 0 : index
    %c0_5 = arith.constant 0 : index
    %6 = vector.load %arg4[%c0_4, %c0_5] : memref<1x64xf32, #tpu.memory_space<vmem>>, vector<1x64xf32>
    %7 = vector.broadcast %6 : vector<1x64xf32> to vector<16x64xf32>
    %8 = arith.addf %5, %7 : vector<16x64xf32>
    %cst_6 = arith.constant 0.000000e+00 : f32
    %9 = vector.broadcast %cst_6 : f32 to vector<16x64xf32>
    %10 = arith.maximumf %8, %9 : vector<16x64xf32>
    %c0_7 = arith.constant 0 : index
    %c0_8 = arith.constant 0 : index
    %11 = vector.load %arg10[%c0_7, %c0_8] : memref<16x32xf32, #tpu.memory_space<vmem>>, vector<16x32xf32>
    %c0_9 = arith.constant 0 : index
    %c0_10 = arith.constant 0 : index
    %12 = vector.load %arg5[%c0_9, %c0_10] : memref<64x32xf32, #tpu.memory_space<vmem>>, vector<64x32xf32>
    %cst_11 = arith.constant dense<0.000000e+00> : vector<16x32xf32>
    %13 = tpu.matmul %10, %12, %cst_11 {dimension_numbers = #tpu.dot_dimension_numbers<[1], [0], [0], [1], [0, 0, 1, 1], [], []>} : vector<16x64xf32>, vector<64x32xf32>, vector<16x32xf32> -> vector<16x32xf32>
    %14 = arith.addf %11, %13 : vector<16x32xf32>
    %c0_12 = arith.constant 0 : index
    %c0_13 = arith.constant 0 : index
    %15 = vector.load %arg10[%c0_12, %c0_13] : memref<16x32xf32, #tpu.memory_space<vmem>>, vector<16x32xf32>
    tpu.vector_store %arg10[%c0_12, %c0_13], %14 {strides = array<i32>} : memref<16x32xf32, #tpu.memory_space<vmem>>, vector<16x32xf32>,
    %c0_i32_14 = arith.constant 0 : i32
    %16 = arith.cmpi eq, %arg1, %c0_i32_14 : i32
    %17 = arith.extui %16 : i1 to i32
    %c0_i32_15 = arith.constant 0 : i32
    %18 = arith.cmpi ne, %17, %c0_i32_15 : i32
    scf.if %18 {
      %c0_16 = arith.constant 0 : index
      %c0_17 = arith.constant 0 : index
      %19 = vector.load %arg10[%c0_16, %c0_17] : memref<16x32xf32, #tpu.memory_space<vmem>>, vector<16x32xf32>
      %c0_18 = arith.constant 0 : index
      %c0_19 = arith.constant 0 : index
      %20 = vector.load %arg6[%c0_18, %c0_19] : memref<1x32xf32, #tpu.memory_space<vmem>>, vector<1x32xf32>
      %21 = vector.broadcast %20 : vector<1x32xf32> to vector<16x32xf32>
      %22 = arith.addf %19, %21 : vector<16x32xf32>
      %c0_20 = arith.constant 0 : index
      %c0_21 = arith.constant 0 : index
      %23 = vector.load %arg2[%c0_20, %c0_21] : memref<16x32xf32, #tpu.memory_space<vmem>>, vector<16x32xf32>
      %24 = arith.addf %22, %23 : vector<16x32xf32>
      %cst_22 = arith.constant dense<0.000000e+00> : vector<16xf32>
      %25 = vector.multi_reduction <add>, %24, %cst_22 [1] : vector<16x32xf32> to vector<16xf32>
      %26 = vector.shape_cast %25 : vector<16xf32> to vector<16x1xf32>
      %cst_23 = arith.constant 3.200000e+01 : f32
      %27 = vector.broadcast %cst_23 : f32 to vector<16x1xf32>
      %28 = arith.divf %26, %27 : vector<16x1xf32>
      %29 = vector.broadcast %28 : vector<16x1xf32> to vector<16x32xf32>
      %30 = arith.subf %24, %29 : vector<16x32xf32>
      %31 = arith.mulf %30, %30 : vector<16x32xf32>
      %cst_24 = arith.constant dense<0.000000e+00> : vector<16xf32>
      %32 = vector.multi_reduction <add>, %31, %cst_24 [1] : vector<16x32xf32> to vector<16xf32>
      %33 = vector.shape_cast %32 : vector<16xf32> to vector<16x1xf32>
      %cst_25 = arith.constant 3.200000e+01 : f32
      %34 = vector.broadcast %cst_25 : f32 to vector<16x1xf32>
      %35 = arith.divf %33, %34 : vector<16x1xf32>
      %36 = vector.broadcast %28 : vector<16x1xf32> to vector<16x32xf32>
      %37 = arith.subf %24, %36 : vector<16x32xf32>
      %cst_26 = arith.constant 9.99999974E-6 : f32
      %38 = vector.broadcast %cst_26 : f32 to vector<16x1xf32>
      %39 = arith.addf %35, %38 : vector<16x1xf32>
      %40 = math.rsqrt %39 : vector<16x1xf32>
      %41 = vector.broadcast %40 : vector<16x1xf32> to vector<16x32xf32>
      %42 = arith.mulf %37, %41 : vector<16x32xf32>
      %c0_27 = arith.constant 0 : index
      %c0_28 = arith.constant 0 : index
      %43 = vector.load %arg7[%c0_27, %c0_28] : memref<1x32xf32, #tpu.memory_space<vmem>>, vector<1x32xf32>
      %44 = vector.broadcast %43 : vector<1x32xf32> to vector<16x32xf32>
      %45 = arith.mulf %42, %44 : vector<16x32xf32>
      %c0_29 = arith.constant 0 : index
      %c0_30 = arith.constant 0 : index
      %46 = vector.load %arg8[%c0_29, %c0_30] : memref<1x32xf32, #tpu.memory_space<vmem>>, vector<1x32xf32>
      %47 = vector.broadcast %46 : vector<1x32xf32> to vector<16x32xf32>
      %48 = arith.addf %45, %47 : vector<16x32xf32>
      %c0_31 = arith.constant 0 : index
      %c0_32 = arith.constant 0 : index
      %49 = vector.load %arg9[%c0_31, %c0_32] : memref<16x32xf32, #tpu.memory_space<vmem>>, vector<16x32xf32>
      tpu.vector_store %arg9[%c0_31, %c0_32], %48 {strides = array<i32>} : memref<16x32xf32, #tpu.memory_space<vmem>>, vector<16x32xf32>,
    } else {
    }
    return
  }
  func.func @transform_0(%arg0: i32, %arg1: i32) -> (i32, i32) {
    %c0_i32 = arith.constant 0 : i32
    %c0_i32_0 = arith.constant 0 : i32
    return %arg0, %c0_i32 : i32, i32
  }
  func.func @transform_1(%arg0: i32, %arg1: i32) -> (i32, i32) {
    %c0_i32 = arith.constant 0 : i32
    %c0_i32_0 = arith.constant 0 : i32
    return %c0_i32, %arg1 : i32, i32
  }
  func.func @transform_2(%arg0: i32, %arg1: i32) -> (i32, i32) {
    %c0_i32 = arith.constant 0 : i32
    %c0_i32_0 = arith.constant 0 : i32
    return %c0_i32, %arg1 : i32, i32
  }
  func.func @transform_3(%arg0: i32, %arg1: i32) -> (i32, i32) {
    %c0_i32 = arith.constant 0 : i32
    %c0_i32_0 = arith.constant 0 : i32
    return %arg1, %c0_i32 : i32, i32
  }
  func.func @transform_4(%arg0: i32, %arg1: i32) -> (i32, i32) {
    %c0_i32 = arith.constant 0 : i32
    %c0_i32_0 = arith.constant 0 : i32
    %c0_i32_1 = arith.constant 0 : i32
    return %c0_i32, %c0_i32_0 : i32, i32
  }
  func.func @transform_5(%arg0: i32, %arg1: i32) -> (i32, i32) {
    %c0_i32 = arith.constant 0 : i32
    %c0_i32_0 = arith.constant 0 : i32
    %c0_i32_1 = arith.constant 0 : i32
    return %c0_i32, %c0_i32_0 : i32, i32
  }
  func.func @transform_6(%arg0: i32, %arg1: i32) -> (i32, i32) {
    %c0_i32 = arith.constant 0 : i32
    %c0_i32_0 = arith.constant 0 : i32
    %c0_i32_1 = arith.constant 0 : i32
    return %c0_i32, %c0_i32_0 : i32, i32
  }
  func.func @transform_7(%arg0: i32, %arg1: i32) -> (i32, i32) {
    %c0_i32 = arith.constant 0 : i32
    %c0_i32_0 = arith.constant 0 : i32
    return %arg0, %c0_i32 : i32, i32
  }
}

module attributes {stable_mosaic.version = 11 : i64} {
  func.func @_linear_kernel(%arg0: i32, %arg1: i32, %arg2: i32, %arg3: memref<16x32xf32, #tpu.memory_space<vmem>>, %arg4: memref<32x128xf32, #tpu.memory_space<vmem>>, %arg5: memref<1x128xf32, #tpu.memory_space<vmem>>, %arg6: memref<16x128xf32, #tpu.memory_space<vmem>>, %arg7: memref<16x128xf32, #tpu.memory_space<vmem>>) attributes {dimension_semantics = [#tpu.dimension_semantics<parallel>, #tpu.dimension_semantics<parallel>, #tpu.dimension_semantics<arbitrary>], iteration_bounds = array<i64: 1, 1, 1>, scalar_prefetch = 0 : i64, scratch_operands = 1 : i64, tpu.core_type = #tpu.core_type<tc>, window_params = [{transform_indices = @transform_0, window_bounds = array<i64: 16, 32>}, {transform_indices = @transform_1, window_bounds = array<i64: 32, 128>}, {transform_indices = @transform_2, window_bounds = array<i64: 1, 128>}, {transform_indices = @transform_3, window_bounds = array<i64: 16, 128>}]} {
    %c0_i32 = arith.constant 0 : i32
    %0 = arith.cmpi eq, %arg2, %c0_i32 : i32
    %1 = arith.extui %0 : i1 to i32
    %c0_i32_0 = arith.constant 0 : i32
    %2 = arith.cmpi ne, %1, %c0_i32_0 : i32
    scf.if %2 {
      %cst_10 = arith.constant 0.000000e+00 : f32
      %12 = vector.broadcast %cst_10 : f32 to vector<16x128xf32>
      %c0_11 = arith.constant 0 : index
      %c0_12 = arith.constant 0 : index
      %13 = vector.load %arg7[%c0_11, %c0_12] : memref<16x128xf32, #tpu.memory_space<vmem>>, vector<16x128xf32>
      tpu.vector_store %arg7[%c0_11, %c0_12], %12 {strides = array<i32>} : memref<16x128xf32, #tpu.memory_space<vmem>>, vector<16x128xf32>,
    } else {
    }
    %c0 = arith.constant 0 : index
    %c0_1 = arith.constant 0 : index
    %3 = vector.load %arg7[%c0, %c0_1] : memref<16x128xf32, #tpu.memory_space<vmem>>, vector<16x128xf32>
    %c0_2 = arith.constant 0 : index
    %c0_3 = arith.constant 0 : index
    %4 = vector.load %arg3[%c0_2, %c0_3] : memref<16x32xf32, #tpu.memory_space<vmem>>, vector<16x32xf32>
    %c0_4 = arith.constant 0 : index
    %c0_5 = arith.constant 0 : index
    %5 = vector.load %arg4[%c0_4, %c0_5] : memref<32x128xf32, #tpu.memory_space<vmem>>, vector<32x128xf32>
    %cst = arith.constant dense<0.000000e+00> : vector<16x128xf32>
    %6 = tpu.matmul %4, %5, %cst {dimension_numbers = #tpu.dot_dimension_numbers<[1], [0], [0], [1], [0, 0, 1, 1], [], []>} : vector<16x32xf32>, vector<32x128xf32>, vector<16x128xf32> -> vector<16x128xf32>
    %7 = arith.addf %3, %6 : vector<16x128xf32>
    %c0_6 = arith.constant 0 : index
    %c0_7 = arith.constant 0 : index
    %8 = vector.load %arg7[%c0_6, %c0_7] : memref<16x128xf32, #tpu.memory_space<vmem>>, vector<16x128xf32>
    tpu.vector_store %arg7[%c0_6, %c0_7], %7 {strides = array<i32>} : memref<16x128xf32, #tpu.memory_space<vmem>>, vector<16x128xf32>,
    %c0_i32_8 = arith.constant 0 : i32
    %9 = arith.cmpi eq, %arg2, %c0_i32_8 : i32
    %10 = arith.extui %9 : i1 to i32
    %c0_i32_9 = arith.constant 0 : i32
    %11 = arith.cmpi ne, %10, %c0_i32_9 : i32
    scf.if %11 {
      %c0_10 = arith.constant 0 : index
      %c0_11 = arith.constant 0 : index
      %12 = vector.load %arg7[%c0_10, %c0_11] : memref<16x128xf32, #tpu.memory_space<vmem>>, vector<16x128xf32>
      %c0_12 = arith.constant 0 : index
      %c0_13 = arith.constant 0 : index
      %13 = vector.load %arg5[%c0_12, %c0_13] : memref<1x128xf32, #tpu.memory_space<vmem>>, vector<1x128xf32>
      %14 = vector.broadcast %13 : vector<1x128xf32> to vector<16x128xf32>
      %15 = arith.addf %12, %14 : vector<16x128xf32>
      %c0_14 = arith.constant 0 : index
      %c0_15 = arith.constant 0 : index
      %16 = vector.load %arg6[%c0_14, %c0_15] : memref<16x128xf32, #tpu.memory_space<vmem>>, vector<16x128xf32>
      tpu.vector_store %arg6[%c0_14, %c0_15], %15 {strides = array<i32>} : memref<16x128xf32, #tpu.memory_space<vmem>>, vector<16x128xf32>,
    } else {
    }
    return
  }
  func.func @transform_0(%arg0: i32, %arg1: i32, %arg2: i32) -> (i32, i32) {
    %c0_i32 = arith.constant 0 : i32
    return %arg0, %arg2 : i32, i32
  }
  func.func @transform_1(%arg0: i32, %arg1: i32, %arg2: i32) -> (i32, i32) {
    %c0_i32 = arith.constant 0 : i32
    return %arg2, %arg1 : i32, i32
  }
  func.func @transform_2(%arg0: i32, %arg1: i32, %arg2: i32) -> (i32, i32) {
    %c0_i32 = arith.constant 0 : i32
    %c0_i32_0 = arith.constant 0 : i32
    return %c0_i32, %arg1 : i32, i32
  }
  func.func @transform_3(%arg0: i32, %arg1: i32, %arg2: i32) -> (i32, i32) {
    %c0_i32 = arith.constant 0 : i32
    return %arg0, %arg1 : i32, i32
  }
}

</mosaic_0001>

<llo_original>
// kernel: transformer_forward.8
$region0: #{transformer_forward.8}
  #allocation0 [shape = 'u32[]', space=smem, size = 0x4, offset = 0x4, fixed_abs, tag = 'smem constant byte address 0x4 - core index']
  #allocation1 [shape = 'u32[144,128]{1,0:T(1,128)}', space=vmem, size = 0x12000, scoped, tag = 'internal scratch']
  #allocation2 [shape = 'f32[8,32]{1,0:T(8,128)}', space=vmem, size = 0x1000, scoped, tag = 'scratch operand']
  %s0 = inlined_call_operand.vmem [shape: f32[8,192], index: 0, kind: input, shape index: {}]
  %s1 = inlined_call_operand.vmem [shape: f32[192,32], index: 1, kind: input, shape index: {}]
  %s2 = inlined_call_operand.vmem [shape: f32[1,32], index: 2, kind: input, shape index: {}]
  %s3 = inlined_call_operand.vmem [shape: f32[8,32], index: 3, kind: output, shape index: {}]
  %s4 = sld [smem:[#allocation0]]
  $region30: #{transformer_forward.8} parent=0
    _
  %s6 = ssub.s32 1, %s4
  %s7 = scalar_select 0, %s6, %s4
  // Predicated region
  $region2: #{transformer_forward.8} parent=0 // pred_check
    _
  $region3: #{transformer_forward.8} parent=0 // pred_check_branch
    %9 = sbr.rel (0) target = $region5
  $region4: #{transformer_forward.8} parent=0 // pred_region
    _
  $region5: #{transformer_forward.8} parent=0 // pred_fallthru
    _
  // Predicated region
  $region6: #{transformer_forward.8} parent=0 // pred_check
    _
  $region7: #{transformer_forward.8} parent=0 // pred_check_branch
    %11 = sbr.rel (0) target = $region9
  $region8: #{transformer_forward.8} parent=0 // pred_region
    _
  $region9: #{transformer_forward.8} parent=0 // pred_fallthru
    _
  // Predicated region
  $region10: #{transformer_forward.8} parent=0 // pred_check
    _
  $region11: #{transformer_forward.8} parent=0 // pred_check_branch
    %13 = sbr.rel (0) target = $region13
  $region12: #{transformer_forward.8} parent=0 // pred_region
    _
  $region13: #{transformer_forward.8} parent=0 // pred_fallthru
    _
  %p14 = scmp.eq.s32.totalorder 0, 0
  // Predicated region
  $region14: #{transformer_forward.8} parent=0 // pred_check
    %p15 = pneg %p14
  $region15: #{transformer_forward.8} parent=0 // pred_check_branch
    %17 = sbr.rel (%p15) target = $region17
  $region16: #{transformer_forward.8} parent=0 // pred_region
    %vm18 = vcmask 261120
    %19 = vst.msk [vmem:[#allocation2] sm:$0xff] %vm18, 0.0
  $region17: #{transformer_forward.8} parent=0 // pred_fallthru
    _
  %v20 = vld [vmem:[#allocation2] sm:$0xff]
  %v21 = vld [vmem:[%s0] sm:$0xff]
  %v22 = vld [vmem:[%s0 + $0x8] sm:$0xff]
  %v23 = vld [vmem:[%s1] sm:$0xff]
  %v24 = vld [vmem:[%s1 + $0x8] sm:$0xff]
  %v25 = vld [vmem:[%s1 + $0x10] sm:$0xff]
  %v26 = vld [vmem:[%s1 + $0x18] sm:$0xff]
  %v27 = vld [vmem:[%s1 + $0x20] sm:$0xff]
  %v28 = vld [vmem:[%s1 + $0x28] sm:$0xff]
  %v29 = vld [vmem:[%s1 + $0x30] sm:$0xff]
  %v30 = vld [vmem:[%s1 + $0x38] sm:$0xff]
  %v31 = vld [vmem:[%s1 + $0x40] sm:$0xff]
  %v32 = vld [vmem:[%s1 + $0x48] sm:$0xff]
  %v33 = vld [vmem:[%s1 + $0x50] sm:$0xff]
  %v34 = vld [vmem:[%s1 + $0x58] sm:$0xff]
  %v35 = vld [vmem:[%s1 + $0x60] sm:$0xff]
  %v36 = vld [vmem:[%s1 + $0x68] sm:$0xff]
  %v37 = vld [vmem:[%s1 + $0x70] sm:$0xff]
  %v38 = vld [vmem:[%s1 + $0x78] sm:$0xff]
  %v39 = vld [vmem:[%s1 + $0x80] sm:$0xff]
  %v40 = vld [vmem:[%s1 + $0x88] sm:$0xff]
  %v41 = vld [vmem:[%s1 + $0x90] sm:$0xff]
  %v42 = vld [vmem:[%s1 + $0x98] sm:$0xff]
  %v43 = vld [vmem:[%s1 + $0xa0] sm:$0xff]
  %v44 = vld [vmem:[%s1 + $0xa8] sm:$0xff]
  %v45 = vld [vmem:[%s1 + $0xb0] sm:$0xff]
  %v46 = vld [vmem:[%s1 + $0xb8] sm:$0xff]
  %vm47 = vcmask 523264
  %v49 = vsel %vm47, %v22, 0
  %51 = vmatprep.subr.mxu0 0.0
  %52 = vmatpush1.msra.mxu0 %v38
  %53 = vmatprep.subr.mxu0 0.0
  %54 = vmatpush1.msra.mxu0 %v37
  %55 = vmatprep.subr.mxu0 0.0
  %56 = vmatpush1.msra.mxu0 %v36
  %57 = vmatprep.subr.mxu0 0.0
  %58 = vmatpush1.msra.mxu0 %v35
  %59 = vmatprep.subr.mxu0 0.0
  %60 = vmatpush1.msra.mxu0 %v34
  %61 = vmatprep.subr.mxu0 0.0
  %62 = vmatpush1.msra.mxu0 %v33
  %63 = vmatprep.subr.mxu0 0.0
  %64 = vmatpush1.msra.mxu0 %v32
  %65 = vmatprep.subr.mxu0 0.0
  %66 = vmatpush1.msra.mxu0 %v31
  %67 = vmatprep.subr.mxu0 0.0
  %68 = vmatpush1.msra.mxu0 %v30
  %69 = vmatprep.subr.mxu0 0.0
  %70 = vmatpush1.msra.mxu0 %v29
  %71 = vmatprep.subr.mxu0 0.0
  %72 = vmatpush1.msra.mxu0 %v28
  %73 = vmatprep.subr.mxu0 0.0
  %74 = vmatpush1.msra.mxu0 %v27
  %75 = vmatprep.subr.mxu0 0.0
  %76 = vmatpush1.msra.mxu0 %v26
  %77 = vmatprep.subr.mxu0 0.0
  %78 = vmatpush1.msra.mxu0 %v25
  %79 = vmatprep.subr.mxu0 0.0
  %80 = vmatpush1.msra.mxu0 %v24
  %81 = vmatprep.subr.mxu0 0.0
  %82 = vmatpush1.msra.mxu0 %v23
  %83 = vmatprep.subr.mxu0 0.0
  %84 = vmatpush2.msra.mxu0 0.0
  %85 = vmatprep.subr.mxu0 0.0
  %86 = vmatpush2.msra.mxu0 0.0
  %87 = vmatprep.subr.mxu0 0.0
  %88 = vmatpush2.msra.mxu0 0.0
  %89 = vmatprep.subr.mxu0 0.0
  %90 = vmatpush2.msra.mxu0 0.0
  %91 = vmatprep.subr.mxu0 0.0
  %92 = vmatpush2.msra.mxu0 0.0
  %93 = vmatprep.subr.mxu0 0.0
  %94 = vmatpush2.msra.mxu0 0.0
  %95 = vmatprep.subr.mxu0 0.0
  %96 = vmatpush2.msra.mxu0 0.0
  %97 = vmatprep.subr.mxu0 0.0
  %98 = vmatpush2.msra.mxu0 0.0
  %99 = vmatprep.subr.mxu0 0.0
  %100 = vmatpush2.msra.mxu0 %v46
  %101 = vmatprep.subr.mxu0 0.0
  %102 = vmatpush2.msra.mxu0 %v45
  %103 = vmatprep.subr.mxu0 0.0
  %104 = vmatpush2.msra.mxu0 %v44
  %105 = vmatprep.subr.mxu0 0.0
  %106 = vmatpush2.msra.mxu0 %v43
  %107 = vmatprep.subr.mxu0 0.0
  %108 = vmatpush2.msra.mxu0 %v42
  %109 = vmatprep.subr.mxu0 0.0
  %110 = vmatpush2.msra.mxu0 %v41
  %111 = vmatprep.subr.mxu0 0.0
  %112 = vmatpush2.msra.mxu0 %v40
  %113 = vmatprep.subr.mxu0 0.0
  %114 = vmatpush2.msra.mxu0 %v39
  %115 = vmatprep.mubr.f32.mxu0 %v49
  %116 = vmatmul.mubr.f32.gmra.mxu0 %v21
  %v117 = vpop.f32.mrf.mxu0
  %v118 = vadd.f32 0.0, %v117
  %v119 = vpop.f32.mrf.mxu0
  %120 = vdwg.mxu0
  %v121 = vadd.f32 %v20, %v118
  %vm122 = vcmask 261120
  %123 = vst.msk [vmem:[#allocation2] sm:$0xff] %vm122, %v121
  // Predicated region
  $region18: #{transformer_forward.8} parent=0 // pred_check
    %p124 = pneg %p14
  $region19: #{transformer_forward.8} parent=0 // pred_check_branch
    %126 = sbr.rel (%p124) target = $region21
  $region20: #{transformer_forward.8} parent=0 // pred_region
    %v127 = vld [vmem:[#allocation2] sm:$0xff]
    %v128 = vld [vmem:[%s2] sm:$0x1]
    %v130 = vlaneseq
    %v131 = vshrl.u32 %v130, 7
    %v132 = vsub.s32 0, %v131
    %v133 = vrot.slane %v128, %v132
    %v135 = vadd.f32 %v127, %v133
    %136 = vst.msk [vmem:[%s3] sm:$0xff] %vm122, %v135
  $region21: #{transformer_forward.8} parent=0 // pred_fallthru
    _
  // Predicated region
  $region22: #{transformer_forward.8} parent=0 // pred_check
    _
  $region23: #{transformer_forward.8} parent=0 // pred_check_branch
    %138 = sbr.rel (0) target = $region25
  $region24: #{transformer_forward.8} parent=0 // pred_region
    _
  $region25: #{transformer_forward.8} parent=0 // pred_fallthru
    _
  // Predicated region
  $region26: #{transformer_forward.8} parent=0 // pred_check
    _
  $region27: #{transformer_forward.8} parent=0 // pred_check_branch
    %140 = sbr.rel (0) target = $region29
  $region28: #{transformer_forward.8} parent=0 // pred_region
    _
  $region29: #{transformer_forward.8} parent=0 // pred_fallthru
    _

// kernel: transformer_forward.11
$region0: #{transformer_forward.11}
  #allocation0 [shape = 'u32[]', space=smem, size = 0x4, offset = 0x4, fixed_abs, tag = 'smem constant byte address 0x4 - core index']
  #allocation1 [shape = 'u32[144,128]{1,0:T(1,128)}', space=vmem, size = 0x12000, scoped, tag = 'internal scratch']
  #allocation2 [shape = 'f32[16,32]{1,0:T(8,128)}', space=vmem, size = 0x2000, scoped, tag = 'scratch operand']
  %s0 = inlined_call_operand.vmem [shape: f32[16,32], index: 0, kind: input, shape index: {}]
  %s1 = inlined_call_operand.vmem [shape: f32[32,64], index: 1, kind: input, shape index: {}]
  %s2 = inlined_call_operand.vmem [shape: f32[1,64], index: 2, kind: input, shape index: {}]
  %s3 = inlined_call_operand.vmem [shape: f32[64,32], index: 3, kind: input, shape index: {}]
  %s4 = inlined_call_operand.vmem [shape: f32[1,32], index: 4, kind: input, shape index: {}]
  %s5 = inlined_call_operand.vmem [shape: f32[1,32], index: 5, kind: input, shape index: {}]
  %s6 = inlined_call_operand.vmem [shape: f32[1,32], index: 6, kind: input, shape index: {}]
  %s7 = inlined_call_operand.vmem [shape: f32[16,32], index: 7, kind: output, shape index: {}]
  %s8 = sld [smem:[#allocation0]]
  $region46: #{transformer_forward.11} parent=0
    _
  %s10 = ssub.s32 1, %s8
  %s11 = scalar_select 0, %s10, %s8
  // Predicated region
  $region2: #{transformer_forward.11} parent=0 // pred_check
    _
  $region3: #{transformer_forward.11} parent=0 // pred_check_branch
    %13 = sbr.rel (0) target = $region5
  $region4: #{transformer_forward.11} parent=0 // pred_region
    _
  $region5: #{transformer_forward.11} parent=0 // pred_fallthru
    _
  // Predicated region
  $region6: #{transformer_forward.11} parent=0 // pred_check
    _
  $region7: #{transformer_forward.11} parent=0 // pred_check_branch
    %15 = sbr.rel (0) target = $region9
  $region8: #{transformer_forward.11} parent=0 // pred_region
    _
  $region9: #{transformer_forward.11} parent=0 // pred_fallthru
    _
  // Predicated region
  $region10: #{transformer_forward.11} parent=0 // pred_check
    _
  $region11: #{transformer_forward.11} parent=0 // pred_check_branch
    %17 = sbr.rel (0) target = $region13
  $region12: #{transformer_forward.11} parent=0 // pred_region
    _
  $region13: #{transformer_forward.11} parent=0 // pred_fallthru
    _
  // Predicated region
  $region14: #{transformer_forward.11} parent=0 // pred_check
    _
  $region15: #{transformer_forward.11} parent=0 // pred_check_branch
    %19 = sbr.rel (0) target = $region17
  $region16: #{transformer_forward.11} parent=0 // pred_region
    _
  $region17: #{transformer_forward.11} parent=0 // pred_fallthru
    _
  // Predicated region
  $region18: #{transformer_forward.11} parent=0 // pred_check
    _
  $region19: #{transformer_forward.11} parent=0 // pred_check_branch
    %21 = sbr.rel (0) target = $region21
  $region20: #{transformer_forward.11} parent=0 // pred_region
    _
  $region21: #{transformer_forward.11} parent=0 // pred_fallthru
    _
  // Predicated region
  $region22: #{transformer_forward.11} parent=0 // pred_check
    _
  $region23: #{transformer_forward.11} parent=0 // pred_check_branch
    %23 = sbr.rel (0) target = $region25
  $region24: #{transformer_forward.11} parent=0 // pred_region
    _
  $region25: #{transformer_forward.11} parent=0 // pred_fallthru
    _
  // Predicated region
  $region26: #{transformer_forward.11} parent=0 // pred_check
    _
  $region27: #{transformer_forward.11} parent=0 // pred_check_branch
    %25 = sbr.rel (0) target = $region29
  $region28: #{transformer_forward.11} parent=0 // pred_region
    _
  $region29: #{transformer_forward.11} parent=0 // pred_fallthru
    _
  %p26 = scmp.eq.s32.totalorder 0, 0
  // Predicated region
  $region30: #{transformer_forward.11} parent=0 // pred_check
    %p27 = pneg %p26
  $region31: #{transformer_forward.11} parent=0 // pred_check_branch
    %29 = sbr.rel (%p27) target = $region33
  $region32: #{transformer_forward.11} parent=0 // pred_region
    %vm30 = vcmask 261120
    %31 = vst.msk [vmem:[#allocation2] sm:$0xff] %vm30, 0.0
    %32 = vst.msk [vmem:[#allocation2 + $0x8] sm:$0xff] %vm30, 0.0
  $region33: #{transformer_forward.11} parent=0 // pred_fallthru
    _
  %v33 = vld [vmem:[%s0] sm:$0xff]
  %v34 = vld [vmem:[%s0 + $0x8] sm:$0xff]
  %v35 = vld [vmem:[%s1] sm:$0xff]
  %v36 = vld [vmem:[%s1 + $0x8] sm:$0xff]
  %v37 = vld [vmem:[%s1 + $0x10] sm:$0xff]
  %v38 = vld [vmem:[%s1 + $0x18] sm:$0xff]
  %v39 = vld [vmem:[%s2] sm:$0x1]
  %v41 = vlaneseq
  %v42 = vshrl.u32 %v41, 7
  %v43 = vsub.s32 0, %v42
  %v44 = vrot.slane %v39, %v43
  %vm46 = vcmask 261120
  %v48 = vsel %vm46, %v33, 0
  %v51 = vsel %vm46, %v34, 0
  %53 = vmatprep.subr.mxu0 0.0
  %54 = vmatpush1.msra.mxu0 0.0
  %55 = vmatprep.subr.mxu0 0.0
  %56 = vmatpush1.msra.mxu0 0.0
  %57 = vmatprep.subr.mxu0 0.0
  %58 = vmatpush1.msra.mxu0 0.0
  %59 = vmatprep.subr.mxu0 0.0
  %60 = vmatpush1.msra.mxu0 0.0
  %61 = vmatprep.subr.mxu0 0.0
  %62 = vmatpush1.msra.mxu0 0.0
  %63 = vmatprep.subr.mxu0 0.0
  %64 = vmatpush1.msra.mxu0 0.0
  %65 = vmatprep.subr.mxu0 0.0
  %66 = vmatpush1.msra.mxu0 0.0
  %67 = vmatprep.subr.mxu0 0.0
  %68 = vmatpush1.msra.mxu0 0.0
  %69 = vmatprep.subr.mxu0 0.0
  %70 = vmatpush1.msra.mxu0 0.0
  %71 = vmatprep.subr.mxu0 0.0
  %72 = vmatpush1.msra.mxu0 0.0
  %73 = vmatprep.subr.mxu0 0.0
  %74 = vmatpush1.msra.mxu0 0.0
  %75 = vmatprep.subr.mxu0 0.0
  %76 = vmatpush1.msra.mxu0 0.0
  %77 = vmatprep.subr.mxu0 0.0
  %78 = vmatpush1.msra.mxu0 %v38
  %79 = vmatprep.subr.mxu0 0.0
  %80 = vmatpush1.msra.mxu0 %v37
  %81 = vmatprep.subr.mxu0 0.0
  %82 = vmatpush1.msra.mxu0 %v36
  %83 = vmatprep.subr.mxu0 0.0
  %84 = vmatpush1.msra.mxu0 %v35
  %85 = vmatprep.subr.mxu0 0.0
  %86 = vmatpush2.msra.mxu0 0.0
  %87 = vmatprep.subr.mxu0 0.0
  %88 = vmatpush2.msra.mxu0 0.0
  %89 = vmatprep.subr.mxu0 0.0
  %90 = vmatpush2.msra.mxu0 0.0
  %91 = vmatprep.subr.mxu0 0.0
  %92 = vmatpush2.msra.mxu0 0.0
  %93 = vmatprep.subr.mxu0 0.0
  %94 = vmatpush2.msra.mxu0 0.0
  %95 = vmatprep.subr.mxu0 0.0
  %96 = vmatpush2.msra.mxu0 0.0
  %97 = vmatprep.subr.mxu0 0.0
  %98 = vmatpush2.msra.mxu0 0.0
  %99 = vmatprep.subr.mxu0 0.0
  %100 = vmatpush2.msra.mxu0 0.0
  %101 = vmatprep.subr.mxu0 0.0
  %102 = vmatpush2.msra.mxu0 0.0
  %103 = vmatprep.subr.mxu0 0.0
  %104 = vmatpush2.msra.mxu0 0.0
  %105 = vmatprep.subr.mxu0 0.0
  %106 = vmatpush2.msra.mxu0 0.0
  %107 = vmatprep.subr.mxu0 0.0
  %108 = vmatpush2.msra.mxu0 0.0
  %109 = vmatprep.subr.mxu0 0.0
  %110 = vmatpush2.msra.mxu0 0.0
  %111 = vmatprep.subr.mxu0 0.0
  %112 = vmatpush2.msra.mxu0 0.0
  %113 = vmatprep.subr.mxu0 0.0
  %114 = vmatpush2.msra.mxu0 0.0
  %115 = vmatprep.subr.mxu0 0.0
  %116 = vmatpush2.msra.mxu0 0.0
  %117 = vmatprep.mubr.f32.mxu0 0.0
  %118 = vmatmul.mubr.f32.gmra.mxu0 %v48
  %v119 = vpop.f32.mrf.mxu0
  %v120 = vadd.f32 %v44, %v119
  %v121 = vpop.f32.mrf.mxu0
  %122 = vmatprep.mubr.f32.mxu0 0.0
  %123 = vmatmul.mubr.f32.gmra.mxu0 %v51
  %v124 = vpop.f32.mrf.mxu0
  %v125 = vadd.f32 %v44, %v124
  %v126 = vpop.f32.mrf.mxu0
  %127 = vdwg.mxu0
  %v128 = vmax.f32 %v120, 0.0
  %v129 = vmax.f32 %v125, 0.0
  %v130 = vld [vmem:[#allocation2] sm:$0xff]
  %v131 = vld [vmem:[#allocation2 + $0x8] sm:$0xff]
  %v132 = vld [vmem:[%s3] sm:$0xff]
  %v133 = vld [vmem:[%s3 + $0x8] sm:$0xff]
  %v134 = vld [vmem:[%s3 + $0x10] sm:$0xff]
  %v135 = vld [vmem:[%s3 + $0x18] sm:$0xff]
  %v136 = vld [vmem:[%s3 + $0x20] sm:$0xff]
  %v137 = vld [vmem:[%s3 + $0x28] sm:$0xff]
  %v138 = vld [vmem:[%s3 + $0x30] sm:$0xff]
  %v139 = vld [vmem:[%s3 + $0x38] sm:$0xff]
  %vm140 = vcmask 523264
  %v142 = vsel %vm140, %v128, 0
  %v145 = vsel %vm140, %v129, 0
  %147 = vmatprep.subr.mxu0 0.0
  %148 = vmatpush1.msra.mxu0 0.0
  %149 = vmatprep.subr.mxu0 0.0
  %150 = vmatpush1.msra.mxu0 0.0
  %151 = vmatprep.subr.mxu0 0.0
  %152 = vmatpush1.msra.mxu0 0.0
  %153 = vmatprep.subr.mxu0 0.0
  %154 = vmatpush1.msra.mxu0 0.0
  %155 = vmatprep.subr.mxu0 0.0
  %156 = vmatpush1.msra.mxu0 0.0
  %157 = vmatprep.subr.mxu0 0.0
  %158 = vmatpush1.msra.mxu0 0.0
  %159 = vmatprep.subr.mxu0 0.0
  %160 = vmatpush1.msra.mxu0 0.0
  %161 = vmatprep.subr.mxu0 0.0
  %162 = vmatpush1.msra.mxu0 0.0
  %163 = vmatprep.subr.mxu0 0.0
  %164 = vmatpush1.msra.mxu0 %v139
  %165 = vmatprep.subr.mxu0 0.0
  %166 = vmatpush1.msra.mxu0 %v138
  %167 = vmatprep.subr.mxu0 0.0
  %168 = vmatpush1.msra.mxu0 %v137
  %169 = vmatprep.subr.mxu0 0.0
  %170 = vmatpush1.msra.mxu0 %v136
  %171 = vmatprep.subr.mxu0 0.0
  %172 = vmatpush1.msra.mxu0 %v135
  %173 = vmatprep.subr.mxu0 0.0
  %174 = vmatpush1.msra.mxu0 %v134
  %175 = vmatprep.subr.mxu0 0.0
  %176 = vmatpush1.msra.mxu0 %v133
  %177 = vmatprep.subr.mxu0 0.0
  %178 = vmatpush1.msra.mxu0 %v132
  %179 = vmatprep.subr.mxu0 0.0
  %180 = vmatpush2.msra.mxu0 0.0
  %181 = vmatprep.subr.mxu0 0.0
  %182 = vmatpush2.msra.mxu0 0.0
  %183 = vmatprep.subr.mxu0 0.0
  %184 = vmatpush2.msra.mxu0 0.0
  %185 = vmatprep.subr.mxu0 0.0
  %186 = vmatpush2.msra.mxu0 0.0
  %187 = vmatprep.subr.mxu0 0.0
  %188 = vmatpush2.msra.mxu0 0.0
  %189 = vmatprep.subr.mxu0 0.0
  %190 = vmatpush2.msra.mxu0 0.0
  %191 = vmatprep.subr.mxu0 0.0
  %192 = vmatpush2.msra.mxu0 0.0
  %193 = vmatprep.subr.mxu0 0.0
  %194 = vmatpush2.msra.mxu0 0.0
  %195 = vmatprep.subr.mxu0 0.0
  %196 = vmatpush2.msra.mxu0 0.0
  %197 = vmatprep.subr.mxu0 0.0
  %198 = vmatpush2.msra.mxu0 0.0
  %199 = vmatprep.subr.mxu0 0.0
  %200 = vmatpush2.msra.mxu0 0.0
  %201 = vmatprep.subr.mxu0 0.0
  %202 = vmatpush2.msra.mxu0 0.0
  %203 = vmatprep.subr.mxu0 0.0
  %204 = vmatpush2.msra.mxu0 0.0
  %205 = vmatprep.subr.mxu0 0.0
  %206 = vmatpush2.msra.mxu0 0.0
  %207 = vmatprep.subr.mxu0 0.0
  %208 = vmatpush2.msra.mxu0 0.0
  %209 = vmatprep.subr.mxu0 0.0
  %210 = vmatpush2.msra.mxu0 0.0
  %211 = vmatprep.mubr.f32.mxu0 0.0
  %212 = vmatmul.mubr.f32.gmra.mxu0 %v142
  %v213 = vpop.f32.mrf.mxu0
  %v214 = vadd.f32 0.0, %v213
  %v215 = vpop.f32.mrf.mxu0
  %216 = vmatprep.mubr.f32.mxu0 0.0
  %217 = vmatmul.mubr.f32.gmra.mxu0 %v145
  %v218 = vpop.f32.mrf.mxu0
  %v219 = vadd.f32 0.0, %v218
  %v220 = vpop.f32.mrf.mxu0
  %221 = vdwg.mxu0
  %v222 = vadd.f32 %v130, %v214
  %v223 = vadd.f32 %v131, %v219
  %224 = vst.msk [vmem:[#allocation2] sm:$0xff] %vm46, %v222
  %225 = vst.msk [vmem:[#allocation2 + $0x8] sm:$0xff] %vm46, %v223
  // Predicated region
  $region34: #{transformer_forward.11} parent=0 // pred_check
    %p226 = pneg %p26
  $region35: #{transformer_forward.11} parent=0 // pred_check_branch
    %228 = sbr.rel (%p226) target = $region37
  $region36: #{transformer_forward.11} parent=0 // pred_region
    %v229 = vld [vmem:[#allocation2] sm:$0xff]
    %v230 = vld [vmem:[#allocation2 + $0x8] sm:$0xff]
    %v231 = vld [vmem:[%s4] sm:$0x1]
    %v233 = vlaneseq
    %v234 = vshrl.u32 %v233, 7
    %v235 = vsub.s32 0, %v234
    %v236 = vrot.slane %v231, %v235
    %v238 = vadd.f32 %v229, %v236
    %v239 = vadd.f32 %v230, %v236
    %v240 = vld [vmem:[%s0] sm:$0xff]
    %v241 = vld [vmem:[%s0 + $0x8] sm:$0xff]
    %v242 = vadd.f32 %v238, %v240
    %v243 = vadd.f32 %v239, %v241
    %v244 = vsel %vm46, %v242, 0.0
    %245 = vadd.xlane.f32.xlu0 %v244
    %v246 = vpop.xlane.xlu0 %245
    %v247 = vsel %vm46, %v243, 0.0
    %248 = vadd.xlane.f32.xlu0 %v247
    %v249 = vpop.xlane.xlu0 %248
    %v250 = vrcp.pop 32.0
    %v251 = vmul.f32 %v246, %v250
    %v252 = vmul.f32 %v249, %v250
    %v253 = vsub.f32 %v242, %v251
    %v254 = vsub.f32 %v243, %v252
    %v255 = vmul.f32 %v253, %v253
    %v256 = vmul.f32 %v254, %v254
    %v257 = vsel %vm46, %v255, 0.0
    %258 = vadd.xlane.f32.xlu0 %v257
    %v259 = vpop.xlane.xlu0 %258
    %v260 = vsel %vm46, %v256, 0.0
    %261 = vadd.xlane.f32.xlu0 %v260
    %v262 = vpop.xlane.xlu0 %261
    %v263 = vmul.f32 %v259, %v250
    %v264 = vmul.f32 %v262, %v250
    %v265 = vadd.f32 %v263, 1e-05
    %v266 = vadd.f32 %v264, 1e-05
    %v267 = vrsqrt.pop %v265
    %v268 = vrsqrt.pop %v266
    %v269 = vmul.f32 %v253, %v267
    %v270 = vmul.f32 %v254, %v268
    %v271 = vld [vmem:[%s5] sm:$0x1]
    %v273 = vlaneseq
    %v274 = vshrl.u32 %v273, 7
    %v275 = vsub.s32 0, %v274
    %v276 = vrot.slane %v271, %v275
    %v278 = vmul.f32 %v269, %v276
    %v279 = vmul.f32 %v270, %v276
    %v280 = vld [vmem:[%s6] sm:$0x1]
    %v282 = vlaneseq
    %v283 = vshrl.u32 %v282, 7
    %v284 = vsub.s32 0, %v283
    %v285 = vrot.slane %v280, %v284
    %v287 = vadd.f32 %v278, %v285
    %v288 = vadd.f32 %v279, %v285
    %289 = vst.msk [vmem:[%s7] sm:$0xff] %vm46, %v287
    %290 = vst.msk [vmem:[%s7 + $0x8] sm:$0xff] %vm46, %v288
  $region37: #{transformer_forward.11} parent=0 // pred_fallthru
    _
  // Predicated region
  $region38: #{transformer_forward.11} parent=0 // pred_check
    _
  $region39: #{transformer_forward.11} parent=0 // pred_check_branch
    %292 = sbr.rel (0) target = $region41
  $region40: #{transformer_forward.11} parent=0 // pred_region
    _
  $region41: #{transformer_forward.11} parent=0 // pred_fallthru
    _
  // Predicated region
  $region42: #{transformer_forward.11} parent=0 // pred_check
    _
  $region43: #{transformer_forward.11} parent=0 // pred_check_branch
    %294 = sbr.rel (0) target = $region45
  $region44: #{transformer_forward.11} parent=0 // pred_region
    _
  $region45: #{transformer_forward.11} parent=0 // pred_fallthru
    _

// kernel: transformer_forward.10
$region0: #{transformer_forward.10}
  #allocation0 [shape = 'u32[]', space=smem, size = 0x4, offset = 0x4, fixed_abs, tag = 'smem constant byte address 0x4 - core index']
  #allocation1 [shape = 'u32[144,128]{1,0:T(1,128)}', space=vmem, size = 0x12000, scoped, tag = 'internal scratch']
  %s0 = inlined_call_operand.vmem [shape: f32[2,8,32], index: 0, kind: input, shape index: {}]
  %s1 = inlined_call_operand.vmem [shape: f32[2,4,32], index: 1, kind: input, shape index: {}]
  %s2 = inlined_call_operand.vmem [shape: f32[32,32], index: 2, kind: input, shape index: {}]
  %s3 = inlined_call_operand.vmem [shape: f32[1,32], index: 3, kind: input, shape index: {}]
  %s4 = inlined_call_operand.vmem [shape: f32[32,64], index: 4, kind: input, shape index: {}]
  %s5 = inlined_call_operand.vmem [shape: f32[1,64], index: 5, kind: input, shape index: {}]
  %s6 = inlined_call_operand.vmem [shape: f32[32,32], index: 6, kind: input, shape index: {}]
  %s7 = inlined_call_operand.vmem [shape: f32[1,32], index: 7, kind: input, shape index: {}]
  %s8 = inlined_call_operand.vmem [shape: f32[1,32], index: 8, kind: input, shape index: {}]
  %s9 = inlined_call_operand.vmem [shape: f32[1,32], index: 9, kind: input, shape index: {}]
  %s10 = inlined_call_operand.vmem [shape: f32[2,8,32], index: 10, kind: output, shape index: {0}]
  %s11 = inlined_call_operand.vmem [shape: f32[2,4,8,4], index: 11, kind: output, shape index: {1}]
  %12 = xla_tuple %s10, %s11
  %s13 = sld [smem:[#allocation0]]
  $region81: #{transformer_forward.10} parent=0
    _
  %s15 = ssub.s32 1, %s13
  %s16 = scalar_select 0, %s15, %s13
  loop: start=0, step=1, limit=4
  $region2: #{transformer_forward.10} parent=0 // loop_pre_header
    _
  $region3: #{transformer_forward.10} parent=0 // loop_header
    %s18 = sphi 0, %s22
    %p19 = scmp.ge.s32.totalorder %s18, 4
    %s25 = sphi 0, %s37
    %s26 = sphi 0, %s33
    %s27 = sphi 0, %s25
    %s28 = sphi 0, %s26
    %s29 = sphi 0, %s27
    %s30 = sphi 0, %s28
    %s42 = sphi 0, %s44
    %s45 = sphi 0, %s42
    %s46 = sphi 0, %s45
    %s62 = sphi 0, %s46
    %s68 = sphi 0, %s70
    %s71 = sphi 0, %s68
    %s72 = sphi 0, %s71
    %s88 = sphi 0, %s72
    %s92 = sphi 0, %s92
    %s94 = sphi 0, %s92
    %s95 = sphi 0, %s94
    %s109 = sphi 0, %s95
    %s113 = sphi 0, %s113
    %s115 = sphi 0, %s113
    %s116 = sphi 0, %s115
    %s130 = sphi 0, %s116
    %s134 = sphi 0, %s134
    %s136 = sphi 0, %s134
    %s137 = sphi 0, %s136
    %s151 = sphi 0, %s137
    %s155 = sphi 0, %s155
    %s157 = sphi 0, %s155
    %s158 = sphi 0, %s157
    %s172 = sphi 0, %s158
    %s176 = sphi 0, %s176
    %s178 = sphi 0, %s176
    %s179 = sphi 0, %s178
    %s193 = sphi 0, %s179
    %s197 = sphi 0, %s197
    %s199 = sphi 0, %s197
    %s200 = sphi 0, %s199
    %s214 = sphi 0, %s200
    %s218 = sphi 0, %s218
    %s220 = sphi 0, %s218
    %s221 = sphi 0, %s220
    %s235 = sphi 0, %s221
    %s239 = sphi 0, %s239
    %s241 = sphi 0, %s239
    %s242 = sphi 0, %s241
    %s256 = sphi 0, %s242
    %s264 = sphi 0, %s266
    %s267 = sphi 0, %s264
    %s268 = sphi 0, %s267
    %s284 = sphi 0, %s268
    %s292 = sphi 0, %s294
    %s295 = sphi 0, %s292
    %s296 = sphi 0, %s295
    %s312 = sphi 0, %s296
  $region4: #{transformer_forward.10} parent=0 // loop_header_branch
    %21 = sbr.rel (%p19) target = $region8
  $region5: #{transformer_forward.10} parent=0 // loop_body
    %s23 = ssub.s32 %s18, 1
    %s24 = ssub.s32 %s18, 2
    %s31 = sadd.s32 1, %s26
    %p32 = scmp.ge.s32.totalorder %s31, 1
    %s33 = scalar_select %p32, 0, %s31
    %s34 = sadd.s32 1, %s25
    %s35 = scalar_select %p32, %s34, %s25
    %p36 = scmp.ge.s32.totalorder %s35, 2
    %s37 = scalar_select %p36, 0, %s35
    %s38 = ssub.s32 %s25, %s37
    %s39 = ssub.s32 %s26, %s33
    %s40 = sor.u32 %s38, %s39
    %p41 = scmp.eq.s32.totalorder %s40, 0
    %s43 = sadd.s32 %s42, 1
    %s44 = scalar_select %p41, %s42, %s43
    %p47 = pneg %p41
    %p48 = scmp.eq.s32.totalorder %s18, 1
    %p49 = por %p47, %p48
    %p50 = scmp.ne.s32.totalorder %s42, %s45
    %p51 = scmp.eq.s32.totalorder %s18, 0
    %p52 = por %p50, %p51
    %p53 = scmp.ne.s32.totalorder %s42, %s45
    %p54 = scmp.eq.s32.totalorder %s23, 1
    %p55 = por %p53, %p54
    %p56 = scmp.ne.s32.totalorder %s45, %s46
    %p57 = scmp.eq.s32.totalorder %s23, 0
    %p58 = por %p56, %p57
    %p59 = scmp.ne.s32.totalorder %s45, %s46
    %p60 = scmp.eq.s32.totalorder %s24, 1
    %p61 = por %p59, %p60
    %p63 = scmp.ne.s32.totalorder %s46, %s62
    %p64 = scmp.eq.s32.totalorder %s24, 0
    %p65 = por %p63, %p64
    %s66 = ssub.s32 %s25, %s37
    %p67 = scmp.eq.s32.totalorder %s66, 0
    %s69 = sadd.s32 %s68, 1
    %s70 = scalar_select %p67, %s68, %s69
    %p73 = pneg %p67
    %p74 = scmp.eq.s32.totalorder %s18, 1
    %p75 = por %p73, %p74
    %p76 = scmp.ne.s32.totalorder %s68, %s71
    %p77 = scmp.eq.s32.totalorder %s18, 0
    %p78 = por %p76, %p77
    %p79 = scmp.ne.s32.totalorder %s68, %s71
    %p80 = scmp.eq.s32.totalorder %s23, 1
    %p81 = por %p79, %p80
    %p82 = scmp.ne.s32.totalorder %s71, %s72
    %p83 = scmp.eq.s32.totalorder %s23, 0
    %p84 = por %p82, %p83
    %p85 = scmp.ne.s32.totalorder %s71, %s72
    %p86 = scmp.eq.s32.totalorder %s24, 1
    %p87 = por %p85, %p86
    %p89 = scmp.ne.s32.totalorder %s72, %s88
    %p90 = scmp.eq.s32.totalorder %s24, 0
    %p91 = por %p89, %p90
    %s93 = sadd.s32 %s92, 1
    %p96 = scmp.eq.s32.totalorder %s18, 1
    %p97 = scmp.ne.s32.totalorder %s92, %s94
    %p98 = scmp.eq.s32.totalorder %s18, 0
    %p99 = por %p97, %p98
    %p100 = scmp.ne.s32.totalorder %s92, %s94
    %p101 = scmp.eq.s32.totalorder %s23, 1
    %p102 = por %p100, %p101
    %p103 = scmp.ne.s32.totalorder %s94, %s95
    %p104 = scmp.eq.s32.totalorder %s23, 0
    %p105 = por %p103, %p104
    %p106 = scmp.ne.s32.totalorder %s94, %s95
    %p107 = scmp.eq.s32.totalorder %s24, 1
    %p108 = por %p106, %p107
    %p110 = scmp.ne.s32.totalorder %s95, %s109
    %p111 = scmp.eq.s32.totalorder %s24, 0
    %p112 = por %p110, %p111
    %s114 = sadd.s32 %s113, 1
    %p117 = scmp.eq.s32.totalorder %s18, 1
    %p118 = scmp.ne.s32.totalorder %s113, %s115
    %p119 = scmp.eq.s32.totalorder %s18, 0
    %p120 = por %p118, %p119
    %p121 = scmp.ne.s32.totalorder %s113, %s115
    %p122 = scmp.eq.s32.totalorder %s23, 1
    %p123 = por %p121, %p122
    %p124 = scmp.ne.s32.totalorder %s115, %s116
    %p125 = scmp.eq.s32.totalorder %s23, 0
    %p126 = por %p124, %p125
    %p127 = scmp.ne.s32.totalorder %s115, %s116
    %p128 = scmp.eq.s32.totalorder %s24, 1
    %p129 = por %p127, %p128
    %p131 = scmp.ne.s32.totalorder %s116, %s130
    %p132 = scmp.eq.s32.totalorder %s24, 0
    %p133 = por %p131, %p132
    %s135 = sadd.s32 %s134, 1
    %p138 = scmp.eq.s32.totalorder %s18, 1
    %p139 = scmp.ne.s32.totalorder %s134, %s136
    %p140 = scmp.eq.s32.totalorder %s18, 0
    %p141 = por %p139, %p140
    %p142 = scmp.ne.s32.totalorder %s134, %s136
    %p143 = scmp.eq.s32.totalorder %s23, 1
    %p144 = por %p142, %p143
    %p145 = scmp.ne.s32.totalorder %s136, %s137
    %p146 = scmp.eq.s32.totalorder %s23, 0
    %p147 = por %p145, %p146
    %p148 = scmp.ne.s32.totalorder %s136, %s137
    %p149 = scmp.eq.s32.totalorder %s24, 1
    %p150 = por %p148, %p149
    %p152 = scmp.ne.s32.totalorder %s137, %s151
    %p153 = scmp.eq.s32.totalorder %s24, 0
    %p154 = por %p152, %p153
    %s156 = sadd.s32 %s155, 1
    %p159 = scmp.eq.s32.totalorder %s18, 1
    %p160 = scmp.ne.s32.totalorder %s155, %s157
    %p161 = scmp.eq.s32.totalorder %s18, 0
    %p162 = por %p160, %p161
    %p163 = scmp.ne.s32.totalorder %s155, %s157
    %p164 = scmp.eq.s32.totalorder %s23, 1
    %p165 = por %p163, %p164
    %p166 = scmp.ne.s32.totalorder %s157, %s158
    %p167 = scmp.eq.s32.totalorder %s23, 0
    %p168 = por %p166, %p167
    %p169 = scmp.ne.s32.totalorder %s157, %s158
    %p170 = scmp.eq.s32.totalorder %s24, 1
    %p171 = por %p169, %p170
    %p173 = scmp.ne.s32.totalorder %s158, %s172
    %p174 = scmp.eq.s32.totalorder %s24, 0
    %p175 = por %p173, %p174
    %s177 = sadd.s32 %s176, 1
    %p180 = scmp.eq.s32.totalorder %s18, 1
    %p181 = scmp.ne.s32.totalorder %s176, %s178
    %p182 = scmp.eq.s32.totalorder %s18, 0
    %p183 = por %p181, %p182
    %p184 = scmp.ne.s32.totalorder %s176, %s178
    %p185 = scmp.eq.s32.totalorder %s23, 1
    %p186 = por %p184, %p185
    %p187 = scmp.ne.s32.totalorder %s178, %s179
    %p188 = scmp.eq.s32.totalorder %s23, 0
    %p189 = por %p187, %p188
    %p190 = scmp.ne.s32.totalorder %s178, %s179
    %p191 = scmp.eq.s32.totalorder %s24, 1
    %p192 = por %p190, %p191
    %p194 = scmp.ne.s32.totalorder %s179, %s193
    %p195 = scmp.eq.s32.totalorder %s24, 0
    %p196 = por %p194, %p195
    %s198 = sadd.s32 %s197, 1
    %p201 = scmp.eq.s32.totalorder %s18, 1
    %p202 = scmp.ne.s32.totalorder %s197, %s199
    %p203 = scmp.eq.s32.totalorder %s18, 0
    %p204 = por %p202, %p203
    %p205 = scmp.ne.s32.totalorder %s197, %s199
    %p206 = scmp.eq.s32.totalorder %s23, 1
    %p207 = por %p205, %p206
    %p208 = scmp.ne.s32.totalorder %s199, %s200
    %p209 = scmp.eq.s32.totalorder %s23, 0
    %p210 = por %p208, %p209
    %p211 = scmp.ne.s32.totalorder %s199, %s200
    %p212 = scmp.eq.s32.totalorder %s24, 1
    %p213 = por %p211, %p212
    %p215 = scmp.ne.s32.totalorder %s200, %s214
    %p216 = scmp.eq.s32.totalorder %s24, 0
    %p217 = por %p215, %p216
    %s219 = sadd.s32 %s218, 1
    %p222 = scmp.eq.s32.totalorder %s18, 1
    %p223 = scmp.ne.s32.totalorder %s218, %s220
    %p224 = scmp.eq.s32.totalorder %s18, 0
    %p225 = por %p223, %p224
    %p226 = scmp.ne.s32.totalorder %s218, %s220
    %p227 = scmp.eq.s32.totalorder %s23, 1
    %p228 = por %p226, %p227
    %p229 = scmp.ne.s32.totalorder %s220, %s221
    %p230 = scmp.eq.s32.totalorder %s23, 0
    %p231 = por %p229, %p230
    %p232 = scmp.ne.s32.totalorder %s220, %s221
    %p233 = scmp.eq.s32.totalorder %s24, 1
    %p234 = por %p232, %p233
    %p236 = scmp.ne.s32.totalorder %s221, %s235
    %p237 = scmp.eq.s32.totalorder %s24, 0
    %p238 = por %p236, %p237
    %s240 = sadd.s32 %s239, 1
    %p243 = scmp.eq.s32.totalorder %s18, 1
    %p244 = scmp.ne.s32.totalorder %s239, %s241
    %p245 = scmp.eq.s32.totalorder %s18, 0
    %p246 = por %p244, %p245
    %p247 = scmp.ne.s32.totalorder %s239, %s241
    %p248 = scmp.eq.s32.totalorder %s23, 1
    %p249 = por %p247, %p248
    %p250 = scmp.ne.s32.totalorder %s241, %s242
    %p251 = scmp.eq.s32.totalorder %s23, 0
    %p252 = por %p250, %p251
    %p253 = scmp.ne.s32.totalorder %s241, %s242
    %p254 = scmp.eq.s32.totalorder %s24, 1
    %p255 = por %p253, %p254
    %p257 = scmp.ne.s32.totalorder %s242, %s256
    %p258 = scmp.eq.s32.totalorder %s24, 0
    %p259 = por %p257, %p258
    %s260 = ssub.s32 %s25, %s37
    %s261 = ssub.s32 %s26, %s33
    %s262 = sor.u32 %s260, %s261
    %p263 = scmp.eq.s32.totalorder %s262, 0
    %s265 = sadd.s32 %s264, 1
    %s266 = scalar_select %p263, %s264, %s265
    %p269 = pneg %p263
    %p270 = scmp.eq.s32.totalorder %s18, 1
    %p271 = por %p269, %p270
    %p272 = scmp.ne.s32.totalorder %s264, %s267
    %p273 = scmp.eq.s32.totalorder %s18, 0
    %p274 = por %p272, %p273
    %p275 = scmp.ne.s32.totalorder %s264, %s267
    %p276 = scmp.eq.s32.totalorder %s23, 1
    %p277 = por %p275, %p276
    %p278 = scmp.ne.s32.totalorder %s267, %s268
    %p279 = scmp.eq.s32.totalorder %s23, 0
    %p280 = por %p278, %p279
    %p281 = scmp.ne.s32.totalorder %s267, %s268
    %p282 = scmp.eq.s32.totalorder %s24, 1
    %p283 = por %p281, %p282
    %p285 = scmp.ne.s32.totalorder %s268, %s284
    %p286 = scmp.eq.s32.totalorder %s24, 0
    %p287 = por %p285, %p286
    %s288 = ssub.s32 %s25, %s37
    %s289 = ssub.s32 %s26, %s33
    %s290 = sor.u32 %s288, %s289
    %p291 = scmp.eq.s32.totalorder %s290, 0
    %s293 = sadd.s32 %s292, 1
    %s294 = scalar_select %p291, %s292, %s293
    %p297 = pneg %p291
    %p298 = scmp.eq.s32.totalorder %s18, 1
    %p299 = por %p297, %p298
    %p300 = scmp.ne.s32.totalorder %s292, %s295
    %p301 = scmp.eq.s32.totalorder %s18, 0
    %p302 = por %p300, %p301
    %p303 = scmp.ne.s32.totalorder %s292, %s295
    %p304 = scmp.eq.s32.totalorder %s23, 1
    %p305 = por %p303, %p304
    %p306 = scmp.ne.s32.totalorder %s295, %s296
    %p307 = scmp.eq.s32.totalorder %s23, 0
    %p308 = por %p306, %p307
    %p309 = scmp.ne.s32.totalorder %s295, %s296
    %p310 = scmp.eq.s32.totalorder %s24, 1
    %p311 = por %p309, %p310
    %p313 = scmp.ne.s32.totalorder %s296, %s312
    %p314 = scmp.eq.s32.totalorder %s24, 0
    %p315 = por %p313, %p314
    %p316 = scmp.le.s32.totalorder 1, %s18
    %p317 = scmp.lt.s32.totalorder %s18, 3
    %p318 = pnand %p316, %p317
    %p319 = pneg %p318
    // Predicated region
    $region9: #{transformer_forward.10} parent=5 // pred_check
      _
    $region10: #{transformer_forward.10} parent=5 // pred_check_branch
      %321 = sbr.rel (%p318) target = $region12
    $region11: #{transformer_forward.10} parent=5 // pred_region
      %s322 = ssub.s32 %s18, 1
      // Predicated region
      $region13: #{transformer_forward.10} parent=11 // pred_check
        %p323 = pneg %p105
      $region14: #{transformer_forward.10} parent=11 // pred_check_branch
        %325 = sbr.rel (%p323) target = $region16
      $region15: #{transformer_forward.10} parent=11 // pred_region
        _
      $region16: #{transformer_forward.10} parent=11 // pred_fallthru
        _
      // Predicated region
      $region17: #{transformer_forward.10} parent=11 // pred_check
        %p326 = pneg %p126
      $region18: #{transformer_forward.10} parent=11 // pred_check_branch
        %328 = sbr.rel (%p326) target = $region20
      $region19: #{transformer_forward.10} parent=11 // pred_region
        _
      $region20: #{transformer_forward.10} parent=11 // pred_fallthru
        _
      // Predicated region
      $region21: #{transformer_forward.10} parent=11 // pred_check
        %p329 = pneg %p147
      $region22: #{transformer_forward.10} parent=11 // pred_check_branch
        %331 = sbr.rel (%p329) target = $region24
      $region23: #{transformer_forward.10} parent=11 // pred_region
        _
      $region24: #{transformer_forward.10} parent=11 // pred_fallthru
        _
      // Predicated region
      $region25: #{transformer_forward.10} parent=11 // pred_check
        %p332 = pneg %p168
      $region26: #{transformer_forward.10} parent=11 // pred_check_branch
        %334 = sbr.rel (%p332) target = $region28
      $region27: #{transformer_forward.10} parent=11 // pred_region
        _
      $region28: #{transformer_forward.10} parent=11 // pred_fallthru
        _
      // Predicated region
      $region29: #{transformer_forward.10} parent=11 // pred_check
        %p335 = pneg %p189
      $region30: #{transformer_forward.10} parent=11 // pred_check_branch
        %337 = sbr.rel (%p335) target = $region32
      $region31: #{transformer_forward.10} parent=11 // pred_region
        _
      $region32: #{transformer_forward.10} parent=11 // pred_fallthru
        _
      // Predicated region
      $region33: #{transformer_forward.10} parent=11 // pred_check
        %p338 = pneg %p210
      $region34: #{transformer_forward.10} parent=11 // pred_check_branch
        %340 = sbr.rel (%p338) target = $region36
      $region35: #{transformer_forward.10} parent=11 // pred_region
        _
      $region36: #{transformer_forward.10} parent=11 // pred_fallthru
        _
      // Predicated region
      $region37: #{transformer_forward.10} parent=11 // pred_check
        %p341 = pneg %p231
      $region38: #{transformer_forward.10} parent=11 // pred_check_branch
        %343 = sbr.rel (%p341) target = $region40
      $region39: #{transformer_forward.10} parent=11 // pred_region
        _
      $region40: #{transformer_forward.10} parent=11 // pred_fallthru
        _
      // Predicated region
      $region41: #{transformer_forward.10} parent=11 // pred_check
        %p344 = pneg %p252
      $region42: #{transformer_forward.10} parent=11 // pred_check_branch
        %346 = sbr.rel (%p344) target = $region44
      $region43: #{transformer_forward.10} parent=11 // pred_region
        _
      $region44: #{transformer_forward.10} parent=11 // pred_fallthru
        _
    $region12: #{transformer_forward.10} parent=5 // pred_fallthru
      _
    %p347 = scmp.lt.s32.totalorder %s18, 2
    // Predicated region
    $region45: #{transformer_forward.10} parent=5 // pred_check
      %p348 = pneg %p347
    $region46: #{transformer_forward.10} parent=5 // pred_check_branch
      %350 = sbr.rel (%p348) target = $region48
    $region47: #{transformer_forward.10} parent=5 // pred_region
      // Predicated region
      $region49: #{transformer_forward.10} parent=47 // pred_check
        %p351 = pneg %p52
      $region50: #{transformer_forward.10} parent=47 // pred_check_branch
        %353 = sbr.rel (%p351) target = $region52
      $region51: #{transformer_forward.10} parent=47 // pred_region
        %p354 = scmp.lt.s32.totalorder %s25, 1
        %s355 = scalar_select %p354, %s25, 1
        %p356 = scmp.lt.s32.totalorder %s26, 0
        %s357 = scalar_select %p356, %s26, 0
        %s358 = sadd.s32 %s357, %s355
        %s359 = smul.addr %s358, 8
        %s360 = scalar_lea.vmem %s0, %s359
      $region52: #{transformer_forward.10} parent=47 // pred_fallthru
        _
      // Predicated region
      $region53: #{transformer_forward.10} parent=47 // pred_check
        %p361 = pneg %p78
      $region54: #{transformer_forward.10} parent=47 // pred_check_branch
        %363 = sbr.rel (%p361) target = $region56
      $region55: #{transformer_forward.10} parent=47 // pred_region
        %p364 = scmp.lt.s32.totalorder %s25, 1
        %s365 = scalar_select %p364, %s25, 1
        %s366 = smul.addr %s365, 4
        %s367 = scalar_lea.vmem %s1, %s366
      $region56: #{transformer_forward.10} parent=47 // pred_fallthru
        _
    $region48: #{transformer_forward.10} parent=5 // pred_fallthru
      _
    %p368 = scmp.le.s32.totalorder 1, %s18
    %p369 = scmp.lt.s32.totalorder %s18, 3
    %p370 = pnand %p368, %p369
    %p371 = pneg %p370
    // Predicated region
    $region57: #{transformer_forward.10} parent=5 // pred_check
      _
    $region58: #{transformer_forward.10} parent=5 // pred_check_branch
      %373 = sbr.rel (%p370) target = $region60
    $region59: #{transformer_forward.10} parent=5 // pred_region
      %s374 = ssub.s32 %s18, 1
      %p375 = scmp.lt.s32.totalorder %s27, 1
      %s376 = scalar_select %p375, %s27, 1
      %p377 = scmp.lt.s32.totalorder %s28, 0
      %s378 = scalar_select %p377, %s28, 0
      %s379 = sadd.s32 %s378, %s376
      %s380 = smul.addr %s379, 8
      %s381 = scalar_lea.vmem %s0, %s380
      %p382 = pneg %p58
      %p383 = pneg %p55
      %p384 = scmp.lt.s32.totalorder %s27, 1
      %s385 = scalar_select %p384, %s27, 1
      %s386 = smul.addr %s385, 4
      %s387 = scalar_lea.vmem %s1, %s386
      %p388 = pneg %p84
      %p389 = pneg %p81
      %p390 = pneg %p105
      %p391 = pneg %p102
      %p392 = pneg %p126
      %p393 = pneg %p123
      %p394 = pneg %p147
      %p395 = pneg %p144
      %p396 = pneg %p168
      %p397 = pneg %p165
      %p398 = pneg %p189
      %p399 = pneg %p186
      %p400 = pneg %p210
      %p401 = pneg %p207
      %p402 = pneg %p231
      %p403 = pneg %p228
      %p404 = pneg %p252
      %p405 = pneg %p249
      %p406 = pneg %p280
      %p407 = pneg %p277
      %p408 = scmp.lt.s32.totalorder %s27, 1
      %s409 = scalar_select %p408, %s27, 1
      %p410 = scmp.lt.s32.totalorder %s28, 0
      %s411 = scalar_select %p410, %s28, 0
      %s412 = sadd.s32 %s411, %s409
      %s413 = smul.addr %s412, 8
      %s414 = scalar_lea.vmem %s10, %s413
      %p415 = pneg %p308
      %p416 = pneg %p305
      %p417 = scmp.lt.s32.totalorder %s27, 1
      %s418 = scalar_select %p417, %s27, 1
      %p419 = scmp.lt.s32.totalorder %s28, 0
      %s420 = scalar_select %p419, %s28, 0
      %s421 = smul.addr %s418, 4
      %s422 = sadd.s32 %s420, %s421
      %s423 = smul.addr %s422, 8
      %s424 = scalar_lea.vmem %s11, %s423
      %p425 = scmp.lt.s32.totalorder %s27, 1
      %s426 = scalar_select %p425, %s27, 1
      %p427 = scmp.lt.s32.totalorder %s28, 0
      %s428 = scalar_select %p427, %s28, 0
      %s429 = sadd.s32 %s428, %s426
      %s430 = smul.addr %s429, 8
      %s431 = scalar_lea.vmem %s0, %s430
      %p432 = scmp.lt.s32.totalorder %s27, 1
      %s433 = scalar_select %p432, %s27, 1
      %s434 = smul.addr %s433, 4
      %s435 = scalar_lea.vmem %s1, %s434
      %p436 = scmp.lt.s32.totalorder %s27, 1
      %s437 = scalar_select %p436, %s27, 1
      %p438 = scmp.lt.s32.totalorder %s28, 0
      %s439 = scalar_select %p438, %s28, 0
      %s440 = sadd.s32 %s439, %s437
      %s441 = smul.addr %s440, 8
      %s442 = scalar_lea.vmem %s10, %s441
      %p443 = scmp.lt.s32.totalorder %s27, 1
      %s444 = scalar_select %p443, %s27, 1
      %p445 = scmp.lt.s32.totalorder %s28, 0
      %s446 = scalar_select %p445, %s28, 0
      %s447 = smul.addr %s444, 4
      %s448 = sadd.s32 %s446, %s447
      %s449 = smul.addr %s448, 8
      %s450 = scalar_lea.vmem %s11, %s449
      %v451 = vld [vmem:[%s431] sm:$0xff]
      %v452 = vld [vmem:[%s435] sm:$0xf]
      %v453 = vld [vmem:[%s2] sm:$0xff]
      %v454 = vld [vmem:[%s2 + $0x8] sm:$0xff]
      %v455 = vld [vmem:[%s2 + $0x10] sm:$0xff]
      %v456 = vld [vmem:[%s2 + $0x18] sm:$0xff]
      %v457 = vld [vmem:[%s3] sm:$0x1]
      %v459 = vlaneseq
      %v460 = vshrl.u32 %v459, 7
      %v461 = vsub.s32 0, %v460
      %v462 = vrot.slane %v457, %v461
      %vm464 = vcmask 261120
      %v466 = vsel %vm464, %v451, 0
      %468 = vmatprep.subr.mxu0 0.0
      %469 = vmatpush1.msra.mxu0 0.0
      %470 = vmatprep.subr.mxu0 0.0
      %471 = vmatpush1.msra.mxu0 0.0
      %472 = vmatprep.subr.mxu0 0.0
      %473 = vmatpush1.msra.mxu0 0.0
      %474 = vmatprep.subr.mxu0 0.0
      %475 = vmatpush1.msra.mxu0 0.0
      %476 = vmatprep.subr.mxu0 0.0
      %477 = vmatpush1.msra.mxu0 0.0
      %478 = vmatprep.subr.mxu0 0.0
      %479 = vmatpush1.msra.mxu0 0.0
      %480 = vmatprep.subr.mxu0 0.0
      %481 = vmatpush1.msra.mxu0 0.0
      %482 = vmatprep.subr.mxu0 0.0
      %483 = vmatpush1.msra.mxu0 0.0
      %484 = vmatprep.subr.mxu0 0.0
      %485 = vmatpush1.msra.mxu0 0.0
      %486 = vmatprep.subr.mxu0 0.0
      %487 = vmatpush1.msra.mxu0 0.0
      %488 = vmatprep.subr.mxu0 0.0
      %489 = vmatpush1.msra.mxu0 0.0
      %490 = vmatprep.subr.mxu0 0.0
      %491 = vmatpush1.msra.mxu0 0.0
      %492 = vmatprep.subr.mxu0 0.0
      %493 = vmatpush1.msra.mxu0 %v456
      %494 = vmatprep.subr.mxu0 0.0
      %495 = vmatpush1.msra.mxu0 %v455
      %496 = vmatprep.subr.mxu0 0.0
      %497 = vmatpush1.msra.mxu0 %v454
      %498 = vmatprep.subr.mxu0 0.0
      %499 = vmatpush1.msra.mxu0 %v453
      %500 = vmatprep.subr.mxu0 0.0
      %501 = vmatpush2.msra.mxu0 0.0
      %502 = vmatprep.subr.mxu0 0.0
      %503 = vmatpush2.msra.mxu0 0.0
      %504 = vmatprep.subr.mxu0 0.0
      %505 = vmatpush2.msra.mxu0 0.0
      %506 = vmatprep.subr.mxu0 0.0
      %507 = vmatpush2.msra.mxu0 0.0
      %508 = vmatprep.subr.mxu0 0.0
      %509 = vmatpush2.msra.mxu0 0.0
      %510 = vmatprep.subr.mxu0 0.0
      %511 = vmatpush2.msra.mxu0 0.0
      %512 = vmatprep.subr.mxu0 0.0
      %513 = vmatpush2.msra.mxu0 0.0
      %514 = vmatprep.subr.mxu0 0.0
      %515 = vmatpush2.msra.mxu0 0.0
      %516 = vmatprep.subr.mxu0 0.0
      %517 = vmatpush2.msra.mxu0 0.0
      %518 = vmatprep.subr.mxu0 0.0
      %519 = vmatpush2.msra.mxu0 0.0
      %520 = vmatprep.subr.mxu0 0.0
      %521 = vmatpush2.msra.mxu0 0.0
      %522 = vmatprep.subr.mxu0 0.0
      %523 = vmatpush2.msra.mxu0 0.0
      %524 = vmatprep.subr.mxu0 0.0
      %525 = vmatpush2.msra.mxu0 0.0
      %526 = vmatprep.subr.mxu0 0.0
      %527 = vmatpush2.msra.mxu0 0.0
      %528 = vmatprep.subr.mxu0 0.0
      %529 = vmatpush2.msra.mxu0 0.0
      %530 = vmatprep.subr.mxu0 0.0
      %531 = vmatpush2.msra.mxu0 0.0
      %532 = vmatprep.mubr.f32.mxu0 0.0
      %533 = vmatmul.mubr.f32.gmra.mxu0 %v466
      %v534 = vpop.f32.mrf.mxu0
      %v535 = vadd.f32 %v462, %v534
      %v536 = vpop.f32.mrf.mxu0
      %537 = vdwg.mxu0
      %v538 = vld [vmem:[%s4] sm:$0xff]
      %v539 = vld [vmem:[%s4 + $0x8] sm:$0xff]
      %v540 = vld [vmem:[%s4 + $0x10] sm:$0xff]
      %v541 = vld [vmem:[%s4 + $0x18] sm:$0xff]
      %v542 = vld [vmem:[%s5] sm:$0x1]
      %v544 = vlaneseq
      %v545 = vshrl.u32 %v544, 7
      %v546 = vsub.s32 0, %v545
      %v547 = vrot.slane %v542, %v546
      %v550 = vsel %vm464, %v452, 0
      %552 = vmatprep.subr.mxu0 0.0
      %553 = vmatpush1.msra.mxu0 0.0
      %554 = vmatprep.subr.mxu0 0.0
      %555 = vmatpush1.msra.mxu0 0.0
      %556 = vmatprep.subr.mxu0 0.0
      %557 = vmatpush1.msra.mxu0 0.0
      %558 = vmatprep.subr.mxu0 0.0
      %559 = vmatpush1.msra.mxu0 0.0
      %560 = vmatprep.subr.mxu0 0.0
      %561 = vmatpush1.msra.mxu0 0.0
      %562 = vmatprep.subr.mxu0 0.0
      %563 = vmatpush1.msra.mxu0 0.0
      %564 = vmatprep.subr.mxu0 0.0
      %565 = vmatpush1.msra.mxu0 0.0
      %566 = vmatprep.subr.mxu0 0.0
      %567 = vmatpush1.msra.mxu0 0.0
      %568 = vmatprep.subr.mxu0 0.0
      %569 = vmatpush1.msra.mxu0 0.0
      %570 = vmatprep.subr.mxu0 0.0
      %571 = vmatpush1.msra.mxu0 0.0
      %572 = vmatprep.subr.mxu0 0.0
      %573 = vmatpush1.msra.mxu0 0.0
      %574 = vmatprep.subr.mxu0 0.0
      %575 = vmatpush1.msra.mxu0 0.0
      %576 = vmatprep.subr.mxu0 0.0
      %577 = vmatpush1.msra.mxu0 %v541
      %578 = vmatprep.subr.mxu0 0.0
      %579 = vmatpush1.msra.mxu0 %v540
      %580 = vmatprep.subr.mxu0 0.0
      %581 = vmatpush1.msra.mxu0 %v539
      %582 = vmatprep.subr.mxu0 0.0
      %583 = vmatpush1.msra.mxu0 %v538
      %584 = vmatprep.subr.mxu0 0.0
      %585 = vmatpush2.msra.mxu0 0.0
      %586 = vmatprep.subr.mxu0 0.0
      %587 = vmatpush2.msra.mxu0 0.0
      %588 = vmatprep.subr.mxu0 0.0
      %589 = vmatpush2.msra.mxu0 0.0
      %590 = vmatprep.subr.mxu0 0.0
      %591 = vmatpush2.msra.mxu0 0.0
      %592 = vmatprep.subr.mxu0 0.0
      %593 = vmatpush2.msra.mxu0 0.0
      %594 = vmatprep.subr.mxu0 0.0
      %595 = vmatpush2.msra.mxu0 0.0
      %596 = vmatprep.subr.mxu0 0.0
      %597 = vmatpush2.msra.mxu0 0.0
      %598 = vmatprep.subr.mxu0 0.0
      %599 = vmatpush2.msra.mxu0 0.0
      %600 = vmatprep.subr.mxu0 0.0
      %601 = vmatpush2.msra.mxu0 0.0
      %602 = vmatprep.subr.mxu0 0.0
      %603 = vmatpush2.msra.mxu0 0.0
      %604 = vmatprep.subr.mxu0 0.0
      %605 = vmatpush2.msra.mxu0 0.0
      %606 = vmatprep.subr.mxu0 0.0
      %607 = vmatpush2.msra.mxu0 0.0
      %608 = vmatprep.subr.mxu0 0.0
      %609 = vmatpush2.msra.mxu0 0.0
      %610 = vmatprep.subr.mxu0 0.0
      %611 = vmatpush2.msra.mxu0 0.0
      %612 = vmatprep.subr.mxu0 0.0
      %613 = vmatpush2.msra.mxu0 0.0
      %614 = vmatprep.subr.mxu0 0.0
      %615 = vmatpush2.msra.mxu0 0.0
      %616 = vmatprep.mubr.f32.mxu0 0.0
      %617 = vmatmul.mubr.f32.gmra.mxu0 %v550
      %v618 = vpop.f32.mrf.mxu0
      %v619 = vadd.f32 %v547, %v618
      %v620 = vpop.f32.mrf.mxu0
      %621 = vdwg.mxu0
      %v622 = vmul.f32 %v535, 0.35355338
      %vm623 = vcmask 64512
      %v625 = vsel %vm623, %v622, 0
      %v628 = vsel %vm623, %v619, 0
      %630 = vmatprep.subr.mxu0 0.0
      %631 = vmatpush1.xpose.msra.mxu0 0.0
      %632 = vmatprep.subr.mxu0 0.0
      %633 = vmatpush1.xpose.msra.mxu0 0.0
      %634 = vmatprep.subr.mxu0 0.0
      %635 = vmatpush1.xpose.msra.mxu0 0.0
      %636 = vmatprep.subr.mxu0 0.0
      %637 = vmatpush1.xpose.msra.mxu0 0.0
      %638 = vmatprep.subr.mxu0 0.0
      %639 = vmatpush1.xpose.msra.mxu0 0.0
      %640 = vmatprep.subr.mxu0 0.0
      %641 = vmatpush1.xpose.msra.mxu0 0.0
      %642 = vmatprep.subr.mxu0 0.0
      %643 = vmatpush1.xpose.msra.mxu0 0.0
      %644 = vmatprep.subr.mxu0 0.0
      %645 = vmatpush1.xpose.msra.mxu0 0.0
      %646 = vmatprep.subr.mxu0 0.0
      %647 = vmatpush1.xpose.msra.mxu0 0.0
      %648 = vmatprep.subr.mxu0 0.0
      %649 = vmatpush1.xpose.msra.mxu0 0.0
      %650 = vmatprep.subr.mxu0 0.0
      %651 = vmatpush1.xpose.msra.mxu0 0.0
      %652 = vmatprep.subr.mxu0 0.0
      %653 = vmatpush1.xpose.msra.mxu0 0.0
      %654 = vmatprep.subr.mxu0 0.0
      %655 = vmatpush1.xpose.msra.mxu0 0.0
      %656 = vmatprep.subr.mxu0 0.0
      %657 = vmatpush1.xpose.msra.mxu0 0.0
      %658 = vmatprep.subr.mxu0 0.0
      %659 = vmatpush1.xpose.msra.mxu0 0.0
      %660 = vmatprep.subr.mxu0 0.0
      %661 = vmatpush1.xpose.msra.mxu0 %v628
      %662 = vmatprep.subr.mxu0 0.0
      %663 = vmatpush2.xpose.msra.mxu0 0.0
      %664 = vmatprep.subr.mxu0 0.0
      %665 = vmatpush2.xpose.msra.mxu0 0.0
      %666 = vmatprep.subr.mxu0 0.0
      %667 = vmatpush2.xpose.msra.mxu0 0.0
      %668 = vmatprep.subr.mxu0 0.0
      %669 = vmatpush2.xpose.msra.mxu0 0.0
      %670 = vmatprep.subr.mxu0 0.0
      %671 = vmatpush2.xpose.msra.mxu0 0.0
      %672 = vmatprep.subr.mxu0 0.0
      %673 = vmatpush2.xpose.msra.mxu0 0.0
      %674 = vmatprep.subr.mxu0 0.0
      %675 = vmatpush2.xpose.msra.mxu0 0.0
      %676 = vmatprep.subr.mxu0 0.0
      %677 = vmatpush2.xpose.msra.mxu0 0.0
      %678 = vmatprep.subr.mxu0 0.0
      %679 = vmatpush2.xpose.msra.mxu0 0.0
      %680 = vmatprep.subr.mxu0 0.0
      %681 = vmatpush2.xpose.msra.mxu0 0.0
      %682 = vmatprep.subr.mxu0 0.0
      %683 = vmatpush2.xpose.msra.mxu0 0.0
      %684 = vmatprep.subr.mxu0 0.0
      %685 = vmatpush2.xpose.msra.mxu0 0.0
      %686 = vmatprep.subr.mxu0 0.0
      %687 = vmatpush2.xpose.msra.mxu0 0.0
      %688 = vmatprep.subr.mxu0 0.0
      %689 = vmatpush2.xpose.msra.mxu0 0.0
      %690 = vmatprep.subr.mxu0 0.0
      %691 = vmatpush2.xpose.msra.mxu0 0.0
      %692 = vmatprep.subr.mxu0 0.0
      %693 = vmatpush2.xpose.msra.mxu0 0.0
      %694 = vmatprep.mubr.f32.mxu0 0.0
      %695 = vmatmul.mubr.f32.gmra.mxu0 %v625
      %v696 = vpop.f32.mrf.mxu0
      %v697 = vadd.f32 0.0, %v696
      %v698 = vpop.f32.mrf.mxu0
      %699 = vdwg.mxu0
      %vm700 = vcmask 31744
      %v701 = vsel %vm700, %v697, -inf
      %702 = vmax.xlane.f32.xlu0 %v701
      %v703 = vpop.xlane.xlu0 %702
      %v704 = vsub.f32 %v697, %v703
      %v705 = vmul.f32 %v704, 1.442695
      %v706 = vpow.pop %v705
      %v707 = vsel %vm700, %v706, 0.0
      %708 = vadd.xlane.f32.xlu0 %v707
      %v709 = vpop.xlane.xlu0 %708
      %v710 = vrcp.pop %v709
      %v711 = vmul.f32 %v706, %v710
      %712 = vst.msk [vmem:[%s450] sm:$0xff] %vm700, %v711
      %713 = vrot.lane.b32.xlu0 %v619, 96
      %v714 = vpop.permute.xlu0 %713
      %v716 = vsel %vm700, %v711, 0
      %vm718 = vcmask 1043456
      %v719 = vsel %vm718, %v714, 0
      %721 = vmatprep.subr.mxu0 0.0
      %722 = vmatpush1.msra.mxu0 0.0
      %723 = vmatprep.subr.mxu0 0.0
      %724 = vmatpush1.msra.mxu0 0.0
      %725 = vmatprep.subr.mxu0 0.0
      %726 = vmatpush1.msra.mxu0 0.0
      %727 = vmatprep.subr.mxu0 0.0
      %728 = vmatpush1.msra.mxu0 0.0
      %729 = vmatprep.subr.mxu0 0.0
      %730 = vmatpush1.msra.mxu0 0.0
      %731 = vmatprep.subr.mxu0 0.0
      %732 = vmatpush1.msra.mxu0 0.0
      %733 = vmatprep.subr.mxu0 0.0
      %734 = vmatpush1.msra.mxu0 0.0
      %735 = vmatprep.subr.mxu0 0.0
      %736 = vmatpush1.msra.mxu0 0.0
      %737 = vmatprep.subr.mxu0 0.0
      %738 = vmatpush1.msra.mxu0 0.0
      %739 = vmatprep.subr.mxu0 0.0
      %740 = vmatpush1.msra.mxu0 0.0
      %741 = vmatprep.subr.mxu0 0.0
      %742 = vmatpush1.msra.mxu0 0.0
      %743 = vmatprep.subr.mxu0 0.0
      %744 = vmatpush1.msra.mxu0 0.0
      %745 = vmatprep.subr.mxu0 0.0
      %746 = vmatpush1.msra.mxu0 0.0
      %747 = vmatprep.subr.mxu0 0.0
      %748 = vmatpush1.msra.mxu0 0.0
      %749 = vmatprep.subr.mxu0 0.0
      %750 = vmatpush1.msra.mxu0 0.0
      %751 = vmatprep.subr.mxu0 0.0
      %752 = vmatpush1.msra.mxu0 %v719
      %753 = vmatprep.subr.mxu0 0.0
      %754 = vmatpush2.msra.mxu0 0.0
      %755 = vmatprep.subr.mxu0 0.0
      %756 = vmatpush2.msra.mxu0 0.0
      %757 = vmatprep.subr.mxu0 0.0
      %758 = vmatpush2.msra.mxu0 0.0
      %759 = vmatprep.subr.mxu0 0.0
      %760 = vmatpush2.msra.mxu0 0.0
      %761 = vmatprep.subr.mxu0 0.0
      %762 = vmatpush2.msra.mxu0 0.0
      %763 = vmatprep.subr.mxu0 0.0
      %764 = vmatpush2.msra.mxu0 0.0
      %765 = vmatprep.subr.mxu0 0.0
      %766 = vmatpush2.msra.mxu0 0.0
      %767 = vmatprep.subr.mxu0 0.0
      %768 = vmatpush2.msra.mxu0 0.0
      %769 = vmatprep.subr.mxu0 0.0
      %770 = vmatpush2.msra.mxu0 0.0
      %771 = vmatprep.subr.mxu0 0.0
      %772 = vmatpush2.msra.mxu0 0.0
      %773 = vmatprep.subr.mxu0 0.0
      %774 = vmatpush2.msra.mxu0 0.0
      %775 = vmatprep.subr.mxu0 0.0
      %776 = vmatpush2.msra.mxu0 0.0
      %777 = vmatprep.subr.mxu0 0.0
      %778 = vmatpush2.msra.mxu0 0.0
      %779 = vmatprep.subr.mxu0 0.0
      %780 = vmatpush2.msra.mxu0 0.0
      %781 = vmatprep.subr.mxu0 0.0
      %782 = vmatpush2.msra.mxu0 0.0
      %783 = vmatprep.subr.mxu0 0.0
      %784 = vmatpush2.msra.mxu0 0.0
      %785 = vmatprep.mubr.f32.mxu0 0.0
      %786 = vmatmul.mubr.f32.gmra.mxu0 %v716
      %v787 = vpop.f32.mrf.mxu0
      %v788 = vadd.f32 0.0, %v787
      %v789 = vpop.f32.mrf.mxu0
      %790 = vdwg.mxu0
      %v791 = vld [vmem:[%s6] sm:$0xff]
      %792 = vrot.lane.b32.xlu0 %v622, 120
      %v793 = vpop.permute.xlu0 %792
      %794 = vrot.lane.b32.xlu0 %v619, 120
      %v795 = vpop.permute.xlu0 %794
      %v796 = vsel %vm623, %v793, 0
      %v798 = vsel %vm623, %v795, 0
      %800 = vmatprep.subr.mxu0 0.0
      %801 = vmatpush1.xpose.msra.mxu0 0.0
      %802 = vmatprep.subr.mxu0 0.0
      %803 = vmatpush1.xpose.msra.mxu0 0.0
      %804 = vmatprep.subr.mxu0 0.0
      %805 = vmatpush1.xpose.msra.mxu0 0.0
      %806 = vmatprep.subr.mxu0 0.0
      %807 = vmatpush1.xpose.msra.mxu0 0.0
      %808 = vmatprep.subr.mxu0 0.0
      %809 = vmatpush1.xpose.msra.mxu0 0.0
      %810 = vmatprep.subr.mxu0 0.0
      %811 = vmatpush1.xpose.msra.mxu0 0.0
      %812 = vmatprep.subr.mxu0 0.0
      %813 = vmatpush1.xpose.msra.mxu0 0.0
      %814 = vmatprep.subr.mxu0 0.0
      %815 = vmatpush1.xpose.msra.mxu0 0.0
      %816 = vmatprep.subr.mxu0 0.0
      %817 = vmatpush1.xpose.msra.mxu0 0.0
      %818 = vmatprep.subr.mxu0 0.0
      %819 = vmatpush1.xpose.msra.mxu0 0.0
      %820 = vmatprep.subr.mxu0 0.0
      %821 = vmatpush1.xpose.msra.mxu0 0.0
      %822 = vmatprep.subr.mxu0 0.0
      %823 = vmatpush1.xpose.msra.mxu0 0.0
      %824 = vmatprep.subr.mxu0 0.0
      %825 = vmatpush1.xpose.msra.mxu0 0.0
      %826 = vmatprep.subr.mxu0 0.0
      %827 = vmatpush1.xpose.msra.mxu0 0.0
      %828 = vmatprep.subr.mxu0 0.0
      %829 = vmatpush1.xpose.msra.mxu0 0.0
      %830 = vmatprep.subr.mxu0 0.0
      %831 = vmatpush1.xpose.msra.mxu0 %v798
      %832 = vmatprep.subr.mxu0 0.0
      %833 = vmatpush2.xpose.msra.mxu0 0.0
      %834 = vmatprep.subr.mxu0 0.0
      %835 = vmatpush2.xpose.msra.mxu0 0.0
      %836 = vmatprep.subr.mxu0 0.0
      %837 = vmatpush2.xpose.msra.mxu0 0.0
      %838 = vmatprep.subr.mxu0 0.0
      %839 = vmatpush2.xpose.msra.mxu0 0.0
      %840 = vmatprep.subr.mxu0 0.0
      %841 = vmatpush2.xpose.msra.mxu0 0.0
      %842 = vmatprep.subr.mxu0 0.0
      %843 = vmatpush2.xpose.msra.mxu0 0.0
      %844 = vmatprep.subr.mxu0 0.0
      %845 = vmatpush2.xpose.msra.mxu0 0.0
      %846 = vmatprep.subr.mxu0 0.0
      %847 = vmatpush2.xpose.msra.mxu0 0.0
      %848 = vmatprep.subr.mxu0 0.0
      %849 = vmatpush2.xpose.msra.mxu0 0.0
      %850 = vmatprep.subr.mxu0 0.0
      %851 = vmatpush2.xpose.msra.mxu0 0.0
      %852 = vmatprep.subr.mxu0 0.0
      %853 = vmatpush2.xpose.msra.mxu0 0.0
      %854 = vmatprep.subr.mxu0 0.0
      %855 = vmatpush2.xpose.msra.mxu0 0.0
      %856 = vmatprep.subr.mxu0 0.0
      %857 = vmatpush2.xpose.msra.mxu0 0.0
      %858 = vmatprep.subr.mxu0 0.0
      %859 = vmatpush2.xpose.msra.mxu0 0.0
      %860 = vmatprep.subr.mxu0 0.0
      %861 = vmatpush2.xpose.msra.mxu0 0.0
      %862 = vmatprep.subr.mxu0 0.0
      %863 = vmatpush2.xpose.msra.mxu0 0.0
      %864 = vmatprep.mubr.f32.mxu0 0.0
      %865 = vmatmul.mubr.f32.gmra.mxu0 %v796
      %v866 = vpop.f32.mrf.mxu0
      %v867 = vadd.f32 0.0, %v866
      %v868 = vpop.f32.mrf.mxu0
      %869 = vdwg.mxu0
      %v870 = vsel %vm700, %v867, -inf
      %871 = vmax.xlane.f32.xlu0 %v870
      %v872 = vpop.xlane.xlu0 %871
      %v873 = vsub.f32 %v867, %v872
      %v874 = vmul.f32 %v873, 1.442695
      %v875 = vpow.pop %v874
      %v876 = vsel %vm700, %v875, 0.0
      %877 = vadd.xlane.f32.xlu0 %v876
      %v878 = vpop.xlane.xlu0 %877
      %v879 = vrcp.pop %v878
      %v880 = vmul.f32 %v875, %v879
      %s881 = scalar_lea.vmem %s450, 8
      %882 = vst.msk [vmem:[%s881] sm:$0xff] %vm700, %v880
      %883 = vrot.lane.b32.xlu0 %v619, 88
      %v884 = vpop.permute.xlu0 %883
      %v886 = vsel %vm700, %v880, 0
      %v888 = vsel %vm718, %v884, 0
      %890 = vmatprep.subr.mxu0 0.0
      %891 = vmatpush1.msra.mxu0 0.0
      %892 = vmatprep.subr.mxu0 0.0
      %893 = vmatpush1.msra.mxu0 0.0
      %894 = vmatprep.subr.mxu0 0.0
      %895 = vmatpush1.msra.mxu0 0.0
      %896 = vmatprep.subr.mxu0 0.0
      %897 = vmatpush1.msra.mxu0 0.0
      %898 = vmatprep.subr.mxu0 0.0
      %899 = vmatpush1.msra.mxu0 0.0
      %900 = vmatprep.subr.mxu0 0.0
      %901 = vmatpush1.msra.mxu0 0.0
      %902 = vmatprep.subr.mxu0 0.0
      %903 = vmatpush1.msra.mxu0 0.0
      %904 = vmatprep.subr.mxu0 0.0
      %905 = vmatpush1.msra.mxu0 0.0
      %906 = vmatprep.subr.mxu0 0.0
      %907 = vmatpush1.msra.mxu0 0.0
      %908 = vmatprep.subr.mxu0 0.0
      %909 = vmatpush1.msra.mxu0 0.0
      %910 = vmatprep.subr.mxu0 0.0
      %911 = vmatpush1.msra.mxu0 0.0
      %912 = vmatprep.subr.mxu0 0.0
      %913 = vmatpush1.msra.mxu0 0.0
      %914 = vmatprep.subr.mxu0 0.0
      %915 = vmatpush1.msra.mxu0 0.0
      %916 = vmatprep.subr.mxu0 0.0
      %917 = vmatpush1.msra.mxu0 0.0
      %918 = vmatprep.subr.mxu0 0.0
      %919 = vmatpush1.msra.mxu0 0.0
      %920 = vmatprep.subr.mxu0 0.0
      %921 = vmatpush1.msra.mxu0 %v888
      %922 = vmatprep.subr.mxu0 0.0
      %923 = vmatpush2.msra.mxu0 0.0
      %924 = vmatprep.subr.mxu0 0.0
      %925 = vmatpush2.msra.mxu0 0.0
      %926 = vmatprep.subr.mxu0 0.0
      %927 = vmatpush2.msra.mxu0 0.0
      %928 = vmatprep.subr.mxu0 0.0
      %929 = vmatpush2.msra.mxu0 0.0
      %930 = vmatprep.subr.mxu0 0.0
      %931 = vmatpush2.msra.mxu0 0.0
      %932 = vmatprep.subr.mxu0 0.0
      %933 = vmatpush2.msra.mxu0 0.0
      %934 = vmatprep.subr.mxu0 0.0
      %935 = vmatpush2.msra.mxu0 0.0
      %936 = vmatprep.subr.mxu0 0.0
      %937 = vmatpush2.msra.mxu0 0.0
      %938 = vmatprep.subr.mxu0 0.0
      %939 = vmatpush2.msra.mxu0 0.0
      %940 = vmatprep.subr.mxu0 0.0
      %941 = vmatpush2.msra.mxu0 0.0
      %942 = vmatprep.subr.mxu0 0.0
      %943 = vmatpush2.msra.mxu0 0.0
      %944 = vmatprep.subr.mxu0 0.0
      %945 = vmatpush2.msra.mxu0 0.0
      %946 = vmatprep.subr.mxu0 0.0
      %947 = vmatpush2.msra.mxu0 0.0
      %948 = vmatprep.subr.mxu0 0.0
      %949 = vmatpush2.msra.mxu0 0.0
      %950 = vmatprep.subr.mxu0 0.0
      %951 = vmatpush2.msra.mxu0 0.0
      %952 = vmatprep.subr.mxu0 0.0
      %953 = vmatpush2.msra.mxu0 0.0
      %954 = vmatprep.mubr.f32.mxu0 0.0
      %955 = vmatmul.mubr.f32.gmra.mxu0 %v886
      %v956 = vpop.f32.mrf.mxu0
      %v957 = vadd.f32 0.0, %v956
      %v958 = vpop.f32.mrf.mxu0
      %959 = vdwg.mxu0
      %v960 = vld [vmem:[%s6 + $0x8] sm:$0xff]
      %v962 = vsel %vm623, %v957, 0
      %964 = vmatprep.subr.mxu0 0.0
      %965 = vmatpush1.msra.mxu0 0.0
      %966 = vmatprep.subr.mxu0 0.0
      %967 = vmatpush1.msra.mxu0 0.0
      %968 = vmatprep.subr.mxu0 0.0
      %969 = vmatpush1.msra.mxu0 0.0
      %970 = vmatprep.subr.mxu0 0.0
      %971 = vmatpush1.msra.mxu0 0.0
      %972 = vmatprep.subr.mxu0 0.0
      %973 = vmatpush1.msra.mxu0 0.0
      %974 = vmatprep.subr.mxu0 0.0
      %975 = vmatpush1.msra.mxu0 0.0
      %976 = vmatprep.subr.mxu0 0.0
      %977 = vmatpush1.msra.mxu0 0.0
      %978 = vmatprep.subr.mxu0 0.0
      %979 = vmatpush1.msra.mxu0 0.0
      %980 = vmatprep.subr.mxu0 0.0
      %981 = vmatpush1.msra.mxu0 0.0
      %982 = vmatprep.subr.mxu0 0.0
      %983 = vmatpush1.msra.mxu0 0.0
      %984 = vmatprep.subr.mxu0 0.0
      %985 = vmatpush1.msra.mxu0 0.0
      %986 = vmatprep.subr.mxu0 0.0
      %987 = vmatpush1.msra.mxu0 0.0
      %988 = vmatprep.subr.mxu0 0.0
      %989 = vmatpush1.msra.mxu0 0.0
      %990 = vmatprep.subr.mxu0 0.0
      %991 = vmatpush1.msra.mxu0 0.0
      %992 = vmatprep.subr.mxu0 0.0
      %993 = vmatpush1.msra.mxu0 0.0
      %994 = vmatprep.subr.mxu0 0.0
      %995 = vmatpush1.msra.mxu0 %v960
      %996 = vmatprep.subr.mxu0 0.0
      %997 = vmatpush2.msra.mxu0 0.0
      %998 = vmatprep.subr.mxu0 0.0
      %999 = vmatpush2.msra.mxu0 0.0
      %1000 = vmatprep.subr.mxu0 0.0
      %1001 = vmatpush2.msra.mxu0 0.0
      %1002 = vmatprep.subr.mxu0 0.0
      %1003 = vmatpush2.msra.mxu0 0.0
      %1004 = vmatprep.subr.mxu0 0.0
      %1005 = vmatpush2.msra.mxu0 0.0
      %1006 = vmatprep.subr.mxu0 0.0
      %1007 = vmatpush2.msra.mxu0 0.0
      %1008 = vmatprep.subr.mxu0 0.0
      %1009 = vmatpush2.msra.mxu0 0.0
      %1010 = vmatprep.subr.mxu0 0.0
      %1011 = vmatpush2.msra.mxu0 0.0
      %1012 = vmatprep.subr.mxu0 0.0
      %1013 = vmatpush2.msra.mxu0 0.0
      %1014 = vmatprep.subr.mxu0 0.0
      %1015 = vmatpush2.msra.mxu0 0.0
      %1016 = vmatprep.subr.mxu0 0.0
      %1017 = vmatpush2.msra.mxu0 0.0
      %1018 = vmatprep.subr.mxu0 0.0
      %1019 = vmatpush2.msra.mxu0 0.0
      %1020 = vmatprep.subr.mxu0 0.0
      %1021 = vmatpush2.msra.mxu0 0.0
      %1022 = vmatprep.subr.mxu0 0.0
      %1023 = vmatpush2.msra.mxu0 0.0
      %1024 = vmatprep.subr.mxu0 0.0
      %1025 = vmatpush2.msra.mxu0 0.0
      %1026 = vmatprep.subr.mxu0 0.0
      %1027 = vmatpush2.msra.mxu0 0.0
      %1028 = vmatprep.mubr.f32.mxu0 0.0
      %1029 = vmatmul.mubr.f32.gmra.mxu0 %v962
      %v1030 = vpop.f32.mrf.mxu0
      %v1031 = vadd.f32 0.0, %v1030
      %v1032 = vpop.f32.mrf.mxu0
      %1033 = vdwg.mxu0
      %v1035 = vsel %vm623, %v788, 0
      %1037 = vmatprep.subr.mxu0 0.0
      %1038 = vmatpush1.msra.mxu0 0.0
      %1039 = vmatprep.subr.mxu0 0.0
      %1040 = vmatpush1.msra.mxu0 0.0
      %1041 = vmatprep.subr.mxu0 0.0
      %1042 = vmatpush1.msra.mxu0 0.0
      %1043 = vmatprep.subr.mxu0 0.0
      %1044 = vmatpush1.msra.mxu0 0.0
      %1045 = vmatprep.subr.mxu0 0.0
      %1046 = vmatpush1.msra.mxu0 0.0
      %1047 = vmatprep.subr.mxu0 0.0
      %1048 = vmatpush1.msra.mxu0 0.0
      %1049 = vmatprep.subr.mxu0 0.0
      %1050 = vmatpush1.msra.mxu0 0.0
      %1051 = vmatprep.subr.mxu0 0.0
      %1052 = vmatpush1.msra.mxu0 0.0
      %1053 = vmatprep.subr.mxu0 0.0
      %1054 = vmatpush1.msra.mxu0 0.0
      %1055 = vmatprep.subr.mxu0 0.0
      %1056 = vmatpush1.msra.mxu0 0.0
      %1057 = vmatprep.subr.mxu0 0.0
      %1058 = vmatpush1.msra.mxu0 0.0
      %1059 = vmatprep.subr.mxu0 0.0
      %1060 = vmatpush1.msra.mxu0 0.0
      %1061 = vmatprep.subr.mxu0 0.0
      %1062 = vmatpush1.msra.mxu0 0.0
      %1063 = vmatprep.subr.mxu0 0.0
      %1064 = vmatpush1.msra.mxu0 0.0
      %1065 = vmatprep.subr.mxu0 0.0
      %1066 = vmatpush1.msra.mxu0 0.0
      %1067 = vmatprep.subr.mxu0 0.0
      %1068 = vmatpush1.msra.mxu0 %v791
      %1069 = vmatprep.subr.mxu0 0.0
      %1070 = vmatpush2.msra.mxu0 0.0
      %1071 = vmatprep.subr.mxu0 0.0
      %1072 = vmatpush2.msra.mxu0 0.0
      %1073 = vmatprep.subr.mxu0 0.0
      %1074 = vmatpush2.msra.mxu0 0.0
      %1075 = vmatprep.subr.mxu0 0.0
      %1076 = vmatpush2.msra.mxu0 0.0
      %1077 = vmatprep.subr.mxu0 0.0
      %1078 = vmatpush2.msra.mxu0 0.0
      %1079 = vmatprep.subr.mxu0 0.0
      %1080 = vmatpush2.msra.mxu0 0.0
      %1081 = vmatprep.subr.mxu0 0.0
      %1082 = vmatpush2.msra.mxu0 0.0
      %1083 = vmatprep.subr.mxu0 0.0
      %1084 = vmatpush2.msra.mxu0 0.0
      %1085 = vmatprep.subr.mxu0 0.0
      %1086 = vmatpush2.msra.mxu0 0.0
      %1087 = vmatprep.subr.mxu0 0.0
      %1088 = vmatpush2.msra.mxu0 0.0
      %1089 = vmatprep.subr.mxu0 0.0
      %1090 = vmatpush2.msra.mxu0 0.0
      %1091 = vmatprep.subr.mxu0 0.0
      %1092 = vmatpush2.msra.mxu0 0.0
      %1093 = vmatprep.subr.mxu0 0.0
      %1094 = vmatpush2.msra.mxu0 0.0
      %1095 = vmatprep.subr.mxu0 0.0
      %1096 = vmatpush2.msra.mxu0 0.0
      %1097 = vmatprep.subr.mxu0 0.0
      %1098 = vmatpush2.msra.mxu0 0.0
      %1099 = vmatprep.subr.mxu0 0.0
      %1100 = vmatpush2.msra.mxu0 0.0
      %1101 = vmatprep.mubr.f32.mxu0 0.0
      %1102 = vmatmul.mubr.f32.gmra.mxu0 %v1035
      %v1103 = vpop.f32.mrf.mxu0
      %v1104 = vadd.f32 %v1031, %v1103
      %v1105 = vpop.f32.mrf.mxu0
      %1106 = vdwg.mxu0
      %1107 = vrot.lane.b32.xlu0 %v622, 112
      %v1108 = vpop.permute.xlu0 %1107
      %1109 = vrot.lane.b32.xlu0 %v619, 112
      %v1110 = vpop.permute.xlu0 %1109
      %v1111 = vsel %vm623, %v1108, 0
      %v1113 = vsel %vm623, %v1110, 0
      %1115 = vmatprep.subr.mxu0 0.0
      %1116 = vmatpush1.xpose.msra.mxu0 0.0
      %1117 = vmatprep.subr.mxu0 0.0
      %1118 = vmatpush1.xpose.msra.mxu0 0.0
      %1119 = vmatprep.subr.mxu0 0.0
      %1120 = vmatpush1.xpose.msra.mxu0 0.0
      %1121 = vmatprep.subr.mxu0 0.0
      %1122 = vmatpush1.xpose.msra.mxu0 0.0
      %1123 = vmatprep.subr.mxu0 0.0
      %1124 = vmatpush1.xpose.msra.mxu0 0.0
      %1125 = vmatprep.subr.mxu0 0.0
      %1126 = vmatpush1.xpose.msra.mxu0 0.0
      %1127 = vmatprep.subr.mxu0 0.0
      %1128 = vmatpush1.xpose.msra.mxu0 0.0
      %1129 = vmatprep.subr.mxu0 0.0
      %1130 = vmatpush1.xpose.msra.mxu0 0.0
      %1131 = vmatprep.subr.mxu0 0.0
      %1132 = vmatpush1.xpose.msra.mxu0 0.0
      %1133 = vmatprep.subr.mxu0 0.0
      %1134 = vmatpush1.xpose.msra.mxu0 0.0
      %1135 = vmatprep.subr.mxu0 0.0
      %1136 = vmatpush1.xpose.msra.mxu0 0.0
      %1137 = vmatprep.subr.mxu0 0.0
      %1138 = vmatpush1.xpose.msra.mxu0 0.0
      %1139 = vmatprep.subr.mxu0 0.0
      %1140 = vmatpush1.xpose.msra.mxu0 0.0
      %1141 = vmatprep.subr.mxu0 0.0
      %1142 = vmatpush1.xpose.msra.mxu0 0.0
      %1143 = vmatprep.subr.mxu0 0.0
      %1144 = vmatpush1.xpose.msra.mxu0 0.0
      %1145 = vmatprep.subr.mxu0 0.0
      %1146 = vmatpush1.xpose.msra.mxu0 %v1113
      %1147 = vmatprep.subr.mxu0 0.0
      %1148 = vmatpush2.xpose.msra.mxu0 0.0
      %1149 = vmatprep.subr.mxu0 0.0
      %1150 = vmatpush2.xpose.msra.mxu0 0.0
      %1151 = vmatprep.subr.mxu0 0.0
      %1152 = vmatpush2.xpose.msra.mxu0 0.0
      %1153 = vmatprep.subr.mxu0 0.0
      %1154 = vmatpush2.xpose.msra.mxu0 0.0
      %1155 = vmatprep.subr.mxu0 0.0
      %1156 = vmatpush2.xpose.msra.mxu0 0.0
      %1157 = vmatprep.subr.mxu0 0.0
      %1158 = vmatpush2.xpose.msra.mxu0 0.0
      %1159 = vmatprep.subr.mxu0 0.0
      %1160 = vmatpush2.xpose.msra.mxu0 0.0
      %1161 = vmatprep.subr.mxu0 0.0
      %1162 = vmatpush2.xpose.msra.mxu0 0.0
      %1163 = vmatprep.subr.mxu0 0.0
      %1164 = vmatpush2.xpose.msra.mxu0 0.0
      %1165 = vmatprep.subr.mxu0 0.0
      %1166 = vmatpush2.xpose.msra.mxu0 0.0
      %1167 = vmatprep.subr.mxu0 0.0
      %1168 = vmatpush2.xpose.msra.mxu0 0.0
      %1169 = vmatprep.subr.mxu0 0.0
      %1170 = vmatpush2.xpose.msra.mxu0 0.0
      %1171 = vmatprep.subr.mxu0 0.0
      %1172 = vmatpush2.xpose.msra.mxu0 0.0
      %1173 = vmatprep.subr.mxu0 0.0
      %1174 = vmatpush2.xpose.msra.mxu0 0.0
      %1175 = vmatprep.subr.mxu0 0.0
      %1176 = vmatpush2.xpose.msra.mxu0 0.0
      %1177 = vmatprep.subr.mxu0 0.0
      %1178 = vmatpush2.xpose.msra.mxu0 0.0
      %1179 = vmatprep.mubr.f32.mxu0 0.0
      %1180 = vmatmul.mubr.f32.gmra.mxu0 %v1111
      %v1181 = vpop.f32.mrf.mxu0
      %v1182 = vadd.f32 0.0, %v1181
      %v1183 = vpop.f32.mrf.mxu0
      %1184 = vdwg.mxu0
      %v1185 = vsel %vm700, %v1182, -inf
      %1186 = vmax.xlane.f32.xlu0 %v1185
      %v1187 = vpop.xlane.xlu0 %1186
      %v1188 = vsub.f32 %v1182, %v1187
      %v1189 = vmul.f32 %v1188, 1.442695
      %v1190 = vpow.pop %v1189
      %v1191 = vsel %vm700, %v1190, 0.0
      %1192 = vadd.xlane.f32.xlu0 %v1191
      %v1193 = vpop.xlane.xlu0 %1192
      %v1194 = vrcp.pop %v1193
      %v1195 = vmul.f32 %v1190, %v1194
      %s1196 = scalar_lea.vmem %s450, 16
      %1197 = vst.msk [vmem:[%s1196] sm:$0xff] %vm700, %v1195
      %1198 = vrot.lane.b32.xlu0 %v619, 80
      %v1199 = vpop.permute.xlu0 %1198
      %v1201 = vsel %vm700, %v1195, 0
      %v1203 = vsel %vm718, %v1199, 0
      %1205 = vmatprep.subr.mxu0 0.0
      %1206 = vmatpush1.msra.mxu0 0.0
      %1207 = vmatprep.subr.mxu0 0.0
      %1208 = vmatpush1.msra.mxu0 0.0
      %1209 = vmatprep.subr.mxu0 0.0
      %1210 = vmatpush1.msra.mxu0 0.0
      %1211 = vmatprep.subr.mxu0 0.0
      %1212 = vmatpush1.msra.mxu0 0.0
      %1213 = vmatprep.subr.mxu0 0.0
      %1214 = vmatpush1.msra.mxu0 0.0
      %1215 = vmatprep.subr.mxu0 0.0
      %1216 = vmatpush1.msra.mxu0 0.0
      %1217 = vmatprep.subr.mxu0 0.0
      %1218 = vmatpush1.msra.mxu0 0.0
      %1219 = vmatprep.subr.mxu0 0.0
      %1220 = vmatpush1.msra.mxu0 0.0
      %1221 = vmatprep.subr.mxu0 0.0
      %1222 = vmatpush1.msra.mxu0 0.0
      %1223 = vmatprep.subr.mxu0 0.0
      %1224 = vmatpush1.msra.mxu0 0.0
      %1225 = vmatprep.subr.mxu0 0.0
      %1226 = vmatpush1.msra.mxu0 0.0
      %1227 = vmatprep.subr.mxu0 0.0
      %1228 = vmatpush1.msra.mxu0 0.0
      %1229 = vmatprep.subr.mxu0 0.0
      %1230 = vmatpush1.msra.mxu0 0.0
      %1231 = vmatprep.subr.mxu0 0.0
      %1232 = vmatpush1.msra.mxu0 0.0
      %1233 = vmatprep.subr.mxu0 0.0
      %1234 = vmatpush1.msra.mxu0 0.0
      %1235 = vmatprep.subr.mxu0 0.0
      %1236 = vmatpush1.msra.mxu0 %v1203
      %1237 = vmatprep.subr.mxu0 0.0
      %1238 = vmatpush2.msra.mxu0 0.0
      %1239 = vmatprep.subr.mxu0 0.0
      %1240 = vmatpush2.msra.mxu0 0.0
      %1241 = vmatprep.subr.mxu0 0.0
      %1242 = vmatpush2.msra.mxu0 0.0
      %1243 = vmatprep.subr.mxu0 0.0
      %1244 = vmatpush2.msra.mxu0 0.0
      %1245 = vmatprep.subr.mxu0 0.0
      %1246 = vmatpush2.msra.mxu0 0.0
      %1247 = vmatprep.subr.mxu0 0.0
      %1248 = vmatpush2.msra.mxu0 0.0
      %1249 = vmatprep.subr.mxu0 0.0
      %1250 = vmatpush2.msra.mxu0 0.0
      %1251 = vmatprep.subr.mxu0 0.0
      %1252 = vmatpush2.msra.mxu0 0.0
      %1253 = vmatprep.subr.mxu0 0.0
      %1254 = vmatpush2.msra.mxu0 0.0
      %1255 = vmatprep.subr.mxu0 0.0
      %1256 = vmatpush2.msra.mxu0 0.0
      %1257 = vmatprep.subr.mxu0 0.0
      %1258 = vmatpush2.msra.mxu0 0.0
      %1259 = vmatprep.subr.mxu0 0.0
      %1260 = vmatpush2.msra.mxu0 0.0
      %1261 = vmatprep.subr.mxu0 0.0
      %1262 = vmatpush2.msra.mxu0 0.0
      %1263 = vmatprep.subr.mxu0 0.0
      %1264 = vmatpush2.msra.mxu0 0.0
      %1265 = vmatprep.subr.mxu0 0.0
      %1266 = vmatpush2.msra.mxu0 0.0
      %1267 = vmatprep.subr.mxu0 0.0
      %1268 = vmatpush2.msra.mxu0 0.0
      %1269 = vmatprep.mubr.f32.mxu0 0.0
      %1270 = vmatmul.mubr.f32.gmra.mxu0 %v1201
      %v1271 = vpop.f32.mrf.mxu0
      %v1272 = vadd.f32 0.0, %v1271
      %v1273 = vpop.f32.mrf.mxu0
      %1274 = vdwg.mxu0
      %v1275 = vld [vmem:[%s6 + $0x10] sm:$0xff]
      %v1277 = vsel %vm623, %v1272, 0
      %1279 = vmatprep.subr.mxu0 0.0
      %1280 = vmatpush1.msra.mxu0 0.0
      %1281 = vmatprep.subr.mxu0 0.0
      %1282 = vmatpush1.msra.mxu0 0.0
      %1283 = vmatprep.subr.mxu0 0.0
      %1284 = vmatpush1.msra.mxu0 0.0
      %1285 = vmatprep.subr.mxu0 0.0
      %1286 = vmatpush1.msra.mxu0 0.0
      %1287 = vmatprep.subr.mxu0 0.0
      %1288 = vmatpush1.msra.mxu0 0.0
      %1289 = vmatprep.subr.mxu0 0.0
      %1290 = vmatpush1.msra.mxu0 0.0
      %1291 = vmatprep.subr.mxu0 0.0
      %1292 = vmatpush1.msra.mxu0 0.0
      %1293 = vmatprep.subr.mxu0 0.0
      %1294 = vmatpush1.msra.mxu0 0.0
      %1295 = vmatprep.subr.mxu0 0.0
      %1296 = vmatpush1.msra.mxu0 0.0
      %1297 = vmatprep.subr.mxu0 0.0
      %1298 = vmatpush1.msra.mxu0 0.0
      %1299 = vmatprep.subr.mxu0 0.0
      %1300 = vmatpush1.msra.mxu0 0.0
      %1301 = vmatprep.subr.mxu0 0.0
      %1302 = vmatpush1.msra.mxu0 0.0
      %1303 = vmatprep.subr.mxu0 0.0
      %1304 = vmatpush1.msra.mxu0 0.0
      %1305 = vmatprep.subr.mxu0 0.0
      %1306 = vmatpush1.msra.mxu0 0.0
      %1307 = vmatprep.subr.mxu0 0.0
      %1308 = vmatpush1.msra.mxu0 0.0
      %1309 = vmatprep.subr.mxu0 0.0
      %1310 = vmatpush1.msra.mxu0 %v1275
      %1311 = vmatprep.subr.mxu0 0.0
      %1312 = vmatpush2.msra.mxu0 0.0
      %1313 = vmatprep.subr.mxu0 0.0
      %1314 = vmatpush2.msra.mxu0 0.0
      %1315 = vmatprep.subr.mxu0 0.0
      %1316 = vmatpush2.msra.mxu0 0.0
      %1317 = vmatprep.subr.mxu0 0.0
      %1318 = vmatpush2.msra.mxu0 0.0
      %1319 = vmatprep.subr.mxu0 0.0
      %1320 = vmatpush2.msra.mxu0 0.0
      %1321 = vmatprep.subr.mxu0 0.0
      %1322 = vmatpush2.msra.mxu0 0.0
      %1323 = vmatprep.subr.mxu0 0.0
      %1324 = vmatpush2.msra.mxu0 0.0
      %1325 = vmatprep.subr.mxu0 0.0
      %1326 = vmatpush2.msra.mxu0 0.0
      %1327 = vmatprep.subr.mxu0 0.0
      %1328 = vmatpush2.msra.mxu0 0.0
      %1329 = vmatprep.subr.mxu0 0.0
      %1330 = vmatpush2.msra.mxu0 0.0
      %1331 = vmatprep.subr.mxu0 0.0
      %1332 = vmatpush2.msra.mxu0 0.0
      %1333 = vmatprep.subr.mxu0 0.0
      %1334 = vmatpush2.msra.mxu0 0.0
      %1335 = vmatprep.subr.mxu0 0.0
      %1336 = vmatpush2.msra.mxu0 0.0
      %1337 = vmatprep.subr.mxu0 0.0
      %1338 = vmatpush2.msra.mxu0 0.0
      %1339 = vmatprep.subr.mxu0 0.0
      %1340 = vmatpush2.msra.mxu0 0.0
      %1341 = vmatprep.subr.mxu0 0.0
      %1342 = vmatpush2.msra.mxu0 0.0
      %1343 = vmatprep.mubr.f32.mxu0 0.0
      %1344 = vmatmul.mubr.f32.gmra.mxu0 %v1277
      %v1345 = vpop.f32.mrf.mxu0
      %v1346 = vadd.f32 0.0, %v1345
      %v1347 = vpop.f32.mrf.mxu0
      %1348 = vdwg.mxu0
      %v1349 = vadd.f32 %v1104, %v1346
      %1350 = vrot.lane.b32.xlu0 %v622, 104
      %v1351 = vpop.permute.xlu0 %1350
      %1352 = vrot.lane.b32.xlu0 %v619, 104
      %v1353 = vpop.permute.xlu0 %1352
      %v1354 = vsel %vm623, %v1351, 0
      %v1356 = vsel %vm623, %v1353, 0
      %1358 = vmatprep.subr.mxu0 0.0
      %1359 = vmatpush1.xpose.msra.mxu0 0.0
      %1360 = vmatprep.subr.mxu0 0.0
      %1361 = vmatpush1.xpose.msra.mxu0 0.0
      %1362 = vmatprep.subr.mxu0 0.0
      %1363 = vmatpush1.xpose.msra.mxu0 0.0
      %1364 = vmatprep.subr.mxu0 0.0
      %1365 = vmatpush1.xpose.msra.mxu0 0.0
      %1366 = vmatprep.subr.mxu0 0.0
      %1367 = vmatpush1.xpose.msra.mxu0 0.0
      %1368 = vmatprep.subr.mxu0 0.0
      %1369 = vmatpush1.xpose.msra.mxu0 0.0
      %1370 = vmatprep.subr.mxu0 0.0
      %1371 = vmatpush1.xpose.msra.mxu0 0.0
      %1372 = vmatprep.subr.mxu0 0.0
      %1373 = vmatpush1.xpose.msra.mxu0 0.0
      %1374 = vmatprep.subr.mxu0 0.0
      %1375 = vmatpush1.xpose.msra.mxu0 0.0
      %1376 = vmatprep.subr.mxu0 0.0
      %1377 = vmatpush1.xpose.msra.mxu0 0.0
      %1378 = vmatprep.subr.mxu0 0.0
      %1379 = vmatpush1.xpose.msra.mxu0 0.0
      %1380 = vmatprep.subr.mxu0 0.0
      %1381 = vmatpush1.xpose.msra.mxu0 0.0
      %1382 = vmatprep.subr.mxu0 0.0
      %1383 = vmatpush1.xpose.msra.mxu0 0.0
      %1384 = vmatprep.subr.mxu0 0.0
      %1385 = vmatpush1.xpose.msra.mxu0 0.0
      %1386 = vmatprep.subr.mxu0 0.0
      %1387 = vmatpush1.xpose.msra.mxu0 0.0
      %1388 = vmatprep.subr.mxu0 0.0
      %1389 = vmatpush1.xpose.msra.mxu0 %v1356
      %1390 = vmatprep.subr.mxu0 0.0
      %1391 = vmatpush2.xpose.msra.mxu0 0.0
      %1392 = vmatprep.subr.mxu0 0.0
      %1393 = vmatpush2.xpose.msra.mxu0 0.0
      %1394 = vmatprep.subr.mxu0 0.0
      %1395 = vmatpush2.xpose.msra.mxu0 0.0
      %1396 = vmatprep.subr.mxu0 0.0
      %1397 = vmatpush2.xpose.msra.mxu0 0.0
      %1398 = vmatprep.subr.mxu0 0.0
      %1399 = vmatpush2.xpose.msra.mxu0 0.0
      %1400 = vmatprep.subr.mxu0 0.0
      %1401 = vmatpush2.xpose.msra.mxu0 0.0
      %1402 = vmatprep.subr.mxu0 0.0
      %1403 = vmatpush2.xpose.msra.mxu0 0.0
      %1404 = vmatprep.subr.mxu0 0.0
      %1405 = vmatpush2.xpose.msra.mxu0 0.0
      %1406 = vmatprep.subr.mxu0 0.0
      %1407 = vmatpush2.xpose.msra.mxu0 0.0
      %1408 = vmatprep.subr.mxu0 0.0
      %1409 = vmatpush2.xpose.msra.mxu0 0.0
      %1410 = vmatprep.subr.mxu0 0.0
      %1411 = vmatpush2.xpose.msra.mxu0 0.0
      %1412 = vmatprep.subr.mxu0 0.0
      %1413 = vmatpush2.xpose.msra.mxu0 0.0
      %1414 = vmatprep.subr.mxu0 0.0
      %1415 = vmatpush2.xpose.msra.mxu0 0.0
      %1416 = vmatprep.subr.mxu0 0.0
      %1417 = vmatpush2.xpose.msra.mxu0 0.0
      %1418 = vmatprep.subr.mxu0 0.0
      %1419 = vmatpush2.xpose.msra.mxu0 0.0
      %1420 = vmatprep.subr.mxu0 0.0
      %1421 = vmatpush2.xpose.msra.mxu0 0.0
      %1422 = vmatprep.mubr.f32.mxu0 0.0
      %1423 = vmatmul.mubr.f32.gmra.mxu0 %v1354
      %v1424 = vpop.f32.mrf.mxu0
      %v1425 = vadd.f32 0.0, %v1424
      %v1426 = vpop.f32.mrf.mxu0
      %1427 = vdwg.mxu0
      %v1428 = vsel %vm700, %v1425, -inf
      %1429 = vmax.xlane.f32.xlu0 %v1428
      %v1430 = vpop.xlane.xlu0 %1429
      %v1431 = vsub.f32 %v1425, %v1430
      %v1432 = vmul.f32 %v1431, 1.442695
      %v1433 = vpow.pop %v1432
      %v1434 = vsel %vm700, %v1433, 0.0
      %1435 = vadd.xlane.f32.xlu0 %v1434
      %v1436 = vpop.xlane.xlu0 %1435
      %v1437 = vrcp.pop %v1436
      %v1438 = vmul.f32 %v1433, %v1437
      %s1439 = scalar_lea.vmem %s450, 24
      %1440 = vst.msk [vmem:[%s1439] sm:$0xff] %vm700, %v1438
      %1441 = vrot.lane.b32.xlu0 %v619, 72
      %v1442 = vpop.permute.xlu0 %1441
      %v1444 = vsel %vm700, %v1438, 0
      %v1446 = vsel %vm718, %v1442, 0
      %1448 = vmatprep.subr.mxu0 0.0
      %1449 = vmatpush1.msra.mxu0 0.0
      %1450 = vmatprep.subr.mxu0 0.0
      %1451 = vmatpush1.msra.mxu0 0.0
      %1452 = vmatprep.subr.mxu0 0.0
      %1453 = vmatpush1.msra.mxu0 0.0
      %1454 = vmatprep.subr.mxu0 0.0
      %1455 = vmatpush1.msra.mxu0 0.0
      %1456 = vmatprep.subr.mxu0 0.0
      %1457 = vmatpush1.msra.mxu0 0.0
      %1458 = vmatprep.subr.mxu0 0.0
      %1459 = vmatpush1.msra.mxu0 0.0
      %1460 = vmatprep.subr.mxu0 0.0
      %1461 = vmatpush1.msra.mxu0 0.0
      %1462 = vmatprep.subr.mxu0 0.0
      %1463 = vmatpush1.msra.mxu0 0.0
      %1464 = vmatprep.subr.mxu0 0.0
      %1465 = vmatpush1.msra.mxu0 0.0
      %1466 = vmatprep.subr.mxu0 0.0
      %1467 = vmatpush1.msra.mxu0 0.0
      %1468 = vmatprep.subr.mxu0 0.0
      %1469 = vmatpush1.msra.mxu0 0.0
      %1470 = vmatprep.subr.mxu0 0.0
      %1471 = vmatpush1.msra.mxu0 0.0
      %1472 = vmatprep.subr.mxu0 0.0
      %1473 = vmatpush1.msra.mxu0 0.0
      %1474 = vmatprep.subr.mxu0 0.0
      %1475 = vmatpush1.msra.mxu0 0.0
      %1476 = vmatprep.subr.mxu0 0.0
      %1477 = vmatpush1.msra.mxu0 0.0
      %1478 = vmatprep.subr.mxu0 0.0
      %1479 = vmatpush1.msra.mxu0 %v1446
      %1480 = vmatprep.subr.mxu0 0.0
      %1481 = vmatpush2.msra.mxu0 0.0
      %1482 = vmatprep.subr.mxu0 0.0
      %1483 = vmatpush2.msra.mxu0 0.0
      %1484 = vmatprep.subr.mxu0 0.0
      %1485 = vmatpush2.msra.mxu0 0.0
      %1486 = vmatprep.subr.mxu0 0.0
      %1487 = vmatpush2.msra.mxu0 0.0
      %1488 = vmatprep.subr.mxu0 0.0
      %1489 = vmatpush2.msra.mxu0 0.0
      %1490 = vmatprep.subr.mxu0 0.0
      %1491 = vmatpush2.msra.mxu0 0.0
      %1492 = vmatprep.subr.mxu0 0.0
      %1493 = vmatpush2.msra.mxu0 0.0
      %1494 = vmatprep.subr.mxu0 0.0
      %1495 = vmatpush2.msra.mxu0 0.0
      %1496 = vmatprep.subr.mxu0 0.0
      %1497 = vmatpush2.msra.mxu0 0.0
      %1498 = vmatprep.subr.mxu0 0.0
      %1499 = vmatpush2.msra.mxu0 0.0
      %1500 = vmatprep.subr.mxu0 0.0
      %1501 = vmatpush2.msra.mxu0 0.0
      %1502 = vmatprep.subr.mxu0 0.0
      %1503 = vmatpush2.msra.mxu0 0.0
      %1504 = vmatprep.subr.mxu0 0.0
      %1505 = vmatpush2.msra.mxu0 0.0
      %1506 = vmatprep.subr.mxu0 0.0
      %1507 = vmatpush2.msra.mxu0 0.0
      %1508 = vmatprep.subr.mxu0 0.0
      %1509 = vmatpush2.msra.mxu0 0.0
      %1510 = vmatprep.subr.mxu0 0.0
      %1511 = vmatpush2.msra.mxu0 0.0
      %1512 = vmatprep.mubr.f32.mxu0 0.0
      %1513 = vmatmul.mubr.f32.gmra.mxu0 %v1444
      %v1514 = vpop.f32.mrf.mxu0
      %v1515 = vadd.f32 0.0, %v1514
      %v1516 = vpop.f32.mrf.mxu0
      %1517 = vdwg.mxu0
      %v1518 = vld [vmem:[%s6 + $0x18] sm:$0xff]
      %v1520 = vsel %vm623, %v1515, 0
      %1522 = vmatprep.subr.mxu0 0.0
      %1523 = vmatpush1.msra.mxu0 0.0
      %1524 = vmatprep.subr.mxu0 0.0
      %1525 = vmatpush1.msra.mxu0 0.0
      %1526 = vmatprep.subr.mxu0 0.0
      %1527 = vmatpush1.msra.mxu0 0.0
      %1528 = vmatprep.subr.mxu0 0.0
      %1529 = vmatpush1.msra.mxu0 0.0
      %1530 = vmatprep.subr.mxu0 0.0
      %1531 = vmatpush1.msra.mxu0 0.0
      %1532 = vmatprep.subr.mxu0 0.0
      %1533 = vmatpush1.msra.mxu0 0.0
      %1534 = vmatprep.subr.mxu0 0.0
      %1535 = vmatpush1.msra.mxu0 0.0
      %1536 = vmatprep.subr.mxu0 0.0
      %1537 = vmatpush1.msra.mxu0 0.0
      %1538 = vmatprep.subr.mxu0 0.0
      %1539 = vmatpush1.msra.mxu0 0.0
      %1540 = vmatprep.subr.mxu0 0.0
      %1541 = vmatpush1.msra.mxu0 0.0
      %1542 = vmatprep.subr.mxu0 0.0
      %1543 = vmatpush1.msra.mxu0 0.0
      %1544 = vmatprep.subr.mxu0 0.0
      %1545 = vmatpush1.msra.mxu0 0.0
      %1546 = vmatprep.subr.mxu0 0.0
      %1547 = vmatpush1.msra.mxu0 0.0
      %1548 = vmatprep.subr.mxu0 0.0
      %1549 = vmatpush1.msra.mxu0 0.0
      %1550 = vmatprep.subr.mxu0 0.0
      %1551 = vmatpush1.msra.mxu0 0.0
      %1552 = vmatprep.subr.mxu0 0.0
      %1553 = vmatpush1.msra.mxu0 %v1518
      %1554 = vmatprep.subr.mxu0 0.0
      %1555 = vmatpush2.msra.mxu0 0.0
      %1556 = vmatprep.subr.mxu0 0.0
      %1557 = vmatpush2.msra.mxu0 0.0
      %1558 = vmatprep.subr.mxu0 0.0
      %1559 = vmatpush2.msra.mxu0 0.0
      %1560 = vmatprep.subr.mxu0 0.0
      %1561 = vmatpush2.msra.mxu0 0.0
      %1562 = vmatprep.subr.mxu0 0.0
      %1563 = vmatpush2.msra.mxu0 0.0
      %1564 = vmatprep.subr.mxu0 0.0
      %1565 = vmatpush2.msra.mxu0 0.0
      %1566 = vmatprep.subr.mxu0 0.0
      %1567 = vmatpush2.msra.mxu0 0.0
      %1568 = vmatprep.subr.mxu0 0.0
      %1569 = vmatpush2.msra.mxu0 0.0
      %1570 = vmatprep.subr.mxu0 0.0
      %1571 = vmatpush2.msra.mxu0 0.0
      %1572 = vmatprep.subr.mxu0 0.0
      %1573 = vmatpush2.msra.mxu0 0.0
      %1574 = vmatprep.subr.mxu0 0.0
      %1575 = vmatpush2.msra.mxu0 0.0
      %1576 = vmatprep.subr.mxu0 0.0
      %1577 = vmatpush2.msra.mxu0 0.0
      %1578 = vmatprep.subr.mxu0 0.0
      %1579 = vmatpush2.msra.mxu0 0.0
      %1580 = vmatprep.subr.mxu0 0.0
      %1581 = vmatpush2.msra.mxu0 0.0
      %1582 = vmatprep.subr.mxu0 0.0
      %1583 = vmatpush2.msra.mxu0 0.0
      %1584 = vmatprep.subr.mxu0 0.0
      %1585 = vmatpush2.msra.mxu0 0.0
      %1586 = vmatprep.mubr.f32.mxu0 0.0
      %1587 = vmatmul.mubr.f32.gmra.mxu0 %v1520
      %v1588 = vpop.f32.mrf.mxu0
      %v1589 = vadd.f32 0.0, %v1588
      %v1590 = vpop.f32.mrf.mxu0
      %1591 = vdwg.mxu0
      %v1592 = vadd.f32 %v1349, %v1589
      %v1593 = vld [vmem:[%s7] sm:$0x1]
      %v1595 = vlaneseq
      %v1596 = vshrl.u32 %v1595, 7
      %v1597 = vsub.s32 0, %v1596
      %v1598 = vrot.slane %v1593, %v1597
      %v1600 = vadd.f32 %v1592, %v1598
      %v1601 = vadd.f32 %v1600, %v451
      %v1602 = vsel %vm464, %v1601, 0.0
      %1603 = vadd.xlane.f32.xlu0 %v1602
      %v1604 = vpop.xlane.xlu0 %1603
      %v1605 = vrcp.pop 32.0
      %v1606 = vmul.f32 %v1604, %v1605
      %v1607 = vsub.f32 %v1601, %v1606
      %v1608 = vmul.f32 %v1607, %v1607
      %v1609 = vsel %vm464, %v1608, 0.0
      %1610 = vadd.xlane.f32.xlu0 %v1609
      %v1611 = vpop.xlane.xlu0 %1610
      %v1612 = vmul.f32 %v1611, %v1605
      %v1613 = vadd.f32 %v1612, 1e-05
      %v1614 = vrsqrt.pop %v1613
      %v1615 = vmul.f32 %v1607, %v1614
      %v1616 = vld [vmem:[%s8] sm:$0x1]
      %v1618 = vlaneseq
      %v1619 = vshrl.u32 %v1618, 7
      %v1620 = vsub.s32 0, %v1619
      %v1621 = vrot.slane %v1616, %v1620
      %v1623 = vmul.f32 %v1615, %v1621
      %v1624 = vld [vmem:[%s9] sm:$0x1]
      %v1626 = vlaneseq
      %v1627 = vshrl.u32 %v1626, 7
      %v1628 = vsub.s32 0, %v1627
      %v1629 = vrot.slane %v1624, %v1628
      %v1631 = vadd.f32 %v1623, %v1629
      %1632 = vst.msk [vmem:[%s442] sm:$0xff] %vm464, %v1631
      %p1633 = scmp.lt.s32.totalorder %s27, 1
      %s1634 = scalar_select %p1633, %s27, 1
      %p1635 = scmp.lt.s32.totalorder %s28, 0
      %s1636 = scalar_select %p1635, %s28, 0
      %s1637 = sadd.s32 %s1636, %s1634
      %s1638 = smul.addr %s1637, 8
      %s1639 = scalar_lea.vmem %s10, %s1638
      %p1640 = scmp.lt.s32.totalorder %s27, 1
      %s1641 = scalar_select %p1640, %s27, 1
      %p1642 = scmp.lt.s32.totalorder %s28, 0
      %s1643 = scalar_select %p1642, %s28, 0
      %s1644 = smul.addr %s1641, 4
      %s1645 = sadd.s32 %s1643, %s1644
      %s1646 = smul.addr %s1645, 8
      %s1647 = scalar_lea.vmem %s11, %s1646
      // Predicated region
      $region61: #{transformer_forward.10} parent=59 // pred_check
        %p1648 = pneg %p277
      $region62: #{transformer_forward.10} parent=59 // pred_check_branch
        %1650 = sbr.rel (%p1648) target = $region64
      $region63: #{transformer_forward.10} parent=59 // pred_region
        _
      $region64: #{transformer_forward.10} parent=59 // pred_fallthru
        _
      // Predicated region
      $region65: #{transformer_forward.10} parent=59 // pred_check
        %p1651 = pneg %p305
      $region66: #{transformer_forward.10} parent=59 // pred_check_branch
        %1653 = sbr.rel (%p1651) target = $region68
      $region67: #{transformer_forward.10} parent=59 // pred_region
        _
      $region68: #{transformer_forward.10} parent=59 // pred_fallthru
        _
    $region60: #{transformer_forward.10} parent=5 // pred_fallthru
      _
    %p1654 = scmp.le.s32.totalorder 2, %s18
    // Predicated region
    $region69: #{transformer_forward.10} parent=5 // pred_check
      %p1655 = pneg %p1654
    $region70: #{transformer_forward.10} parent=5 // pred_check_branch
      %1657 = sbr.rel (%p1655) target = $region72
    $region71: #{transformer_forward.10} parent=5 // pred_region
      %s1658 = ssub.s32 %s18, 2
      // Predicated region
      $region73: #{transformer_forward.10} parent=71 // pred_check
        %p1659 = pneg %p283
      $region74: #{transformer_forward.10} parent=71 // pred_check_branch
        %1661 = sbr.rel (%p1659) target = $region76
      $region75: #{transformer_forward.10} parent=71 // pred_region
        %p1662 = scmp.lt.s32.totalorder %s29, 1
        %s1663 = scalar_select %p1662, %s29, 1
        %p1664 = scmp.lt.s32.totalorder %s30, 0
        %s1665 = scalar_select %p1664, %s30, 0
        %s1666 = sadd.s32 %s1665, %s1663
        %s1667 = smul.addr %s1666, 8
        %s1668 = scalar_lea.vmem %s10, %s1667
      $region76: #{transformer_forward.10} parent=71 // pred_fallthru
        _
      // Predicated region
      $region77: #{transformer_forward.10} parent=71 // pred_check
        %p1669 = pneg %p311
      $region78: #{transformer_forward.10} parent=71 // pred_check_branch
        %1671 = sbr.rel (%p1669) target = $region80
      $region79: #{transformer_forward.10} parent=71 // pred_region
        %p1672 = scmp.lt.s32.totalorder %s29, 1
        %s1673 = scalar_select %p1672, %s29, 1
        %p1674 = scmp.lt.s32.totalorder %s30, 0
        %s1675 = scalar_select %p1674, %s30, 0
        %s1676 = smul.addr %s1673, 4
        %s1677 = sadd.s32 %s1675, %s1676
        %s1678 = smul.addr %s1677, 8
        %s1679 = scalar_lea.vmem %s11, %s1678
      $region80: #{transformer_forward.10} parent=71 // pred_fallthru
        _
    $region72: #{transformer_forward.10} parent=5 // pred_fallthru
      _
  $region6: #{transformer_forward.10} parent=0 // loop_footer
    %s22 = sadd.s32 1, %s18
  $region7: #{transformer_forward.10} parent=0 // loop_footer_branch
    %17 = sbr.rel target = $region3
  $region8: #{transformer_forward.10} parent=0 // loop_exit
    _

// kernel: transformer_forward.9
$region0: #{transformer_forward.9}
  #allocation0 [shape = 'u32[]', space=smem, size = 0x4, offset = 0x4, fixed_abs, tag = 'smem constant byte address 0x4 - core index']
  #allocation1 [shape = 'u32[144,128]{1,0:T(1,128)}', space=vmem, size = 0x12000, scoped, tag = 'internal scratch']
  %s0 = inlined_call_operand.vmem [shape: f32[2,8,32], index: 0, kind: input, shape index: {}, may-alias: {0,1}]
  %s1 = inlined_call_operand.vmem [shape: f32[2,8,32], index: 1, kind: input, shape index: {}, may-alias: {0,1}]
  %s2 = inlined_call_operand.vmem [shape: f32[2,1,8], index: 2, kind: input, shape index: {}]
  %s3 = inlined_call_operand.vmem [shape: f32[32,32], index: 3, kind: input, shape index: {}]
  %s4 = inlined_call_operand.vmem [shape: f32[1,32], index: 4, kind: input, shape index: {}]
  %s5 = inlined_call_operand.vmem [shape: f32[32,64], index: 5, kind: input, shape index: {}]
  %s6 = inlined_call_operand.vmem [shape: f32[1,64], index: 6, kind: input, shape index: {}]
  %s7 = inlined_call_operand.vmem [shape: f32[32,32], index: 7, kind: input, shape index: {}]
  %s8 = inlined_call_operand.vmem [shape: f32[1,32], index: 8, kind: input, shape index: {}]
  %s9 = inlined_call_operand.vmem [shape: f32[1,32], index: 9, kind: input, shape index: {}]
  %s10 = inlined_call_operand.vmem [shape: f32[1,32], index: 10, kind: input, shape index: {}]
  %s11 = inlined_call_operand.vmem [shape: f32[2,8,32], index: 11, kind: output, shape index: {}]
  %s12 = sld [smem:[#allocation0]]
  $region77: #{transformer_forward.9} parent=0
    _
  %s14 = ssub.s32 1, %s12
  %s15 = scalar_select 0, %s14, %s12
  loop: start=0, step=1, limit=4
  $region2: #{transformer_forward.9} parent=0 // loop_pre_header
    _
  $region3: #{transformer_forward.9} parent=0 // loop_header
    %s17 = sphi 0, %s21
    %p18 = scmp.ge.s32.totalorder %s17, 4
    %s24 = sphi 0, %s36
    %s25 = sphi 0, %s32
    %s26 = sphi 0, %s24
    %s27 = sphi 0, %s25
    %s28 = sphi 0, %s26
    %s29 = sphi 0, %s27
    %s41 = sphi 0, %s43
    %s44 = sphi 0, %s41
    %s45 = sphi 0, %s44
    %s61 = sphi 0, %s45
    %s67 = sphi 0, %s69
    %s70 = sphi 0, %s67
    %s71 = sphi 0, %s70
    %s87 = sphi 0, %s71
    %s93 = sphi 0, %s95
    %s96 = sphi 0, %s93
    %s97 = sphi 0, %s96
    %s113 = sphi 0, %s97
    %s117 = sphi 0, %s117
    %s119 = sphi 0, %s117
    %s120 = sphi 0, %s119
    %s134 = sphi 0, %s120
    %s138 = sphi 0, %s138
    %s140 = sphi 0, %s138
    %s141 = sphi 0, %s140
    %s155 = sphi 0, %s141
    %s159 = sphi 0, %s159
    %s161 = sphi 0, %s159
    %s162 = sphi 0, %s161
    %s176 = sphi 0, %s162
    %s180 = sphi 0, %s180
    %s182 = sphi 0, %s180
    %s183 = sphi 0, %s182
    %s197 = sphi 0, %s183
    %s201 = sphi 0, %s201
    %s203 = sphi 0, %s201
    %s204 = sphi 0, %s203
    %s218 = sphi 0, %s204
    %s222 = sphi 0, %s222
    %s224 = sphi 0, %s222
    %s225 = sphi 0, %s224
    %s239 = sphi 0, %s225
    %s243 = sphi 0, %s243
    %s245 = sphi 0, %s243
    %s246 = sphi 0, %s245
    %s260 = sphi 0, %s246
    %s264 = sphi 0, %s264
    %s266 = sphi 0, %s264
    %s267 = sphi 0, %s266
    %s281 = sphi 0, %s267
    %s289 = sphi 0, %s291
    %s292 = sphi 0, %s289
    %s293 = sphi 0, %s292
    %s309 = sphi 0, %s293
  $region4: #{transformer_forward.9} parent=0 // loop_header_branch
    %20 = sbr.rel (%p18) target = $region8
  $region5: #{transformer_forward.9} parent=0 // loop_body
    %s22 = ssub.s32 %s17, 1
    %s23 = ssub.s32 %s17, 2
    %s30 = sadd.s32 1, %s25
    %p31 = scmp.ge.s32.totalorder %s30, 1
    %s32 = scalar_select %p31, 0, %s30
    %s33 = sadd.s32 1, %s24
    %s34 = scalar_select %p31, %s33, %s24
    %p35 = scmp.ge.s32.totalorder %s34, 2
    %s36 = scalar_select %p35, 0, %s34
    %s37 = ssub.s32 %s24, %s36
    %s38 = ssub.s32 %s25, %s32
    %s39 = sor.u32 %s37, %s38
    %p40 = scmp.eq.s32.totalorder %s39, 0
    %s42 = sadd.s32 %s41, 1
    %s43 = scalar_select %p40, %s41, %s42
    %p46 = pneg %p40
    %p47 = scmp.eq.s32.totalorder %s17, 1
    %p48 = por %p46, %p47
    %p49 = scmp.ne.s32.totalorder %s41, %s44
    %p50 = scmp.eq.s32.totalorder %s17, 0
    %p51 = por %p49, %p50
    %p52 = scmp.ne.s32.totalorder %s41, %s44
    %p53 = scmp.eq.s32.totalorder %s22, 1
    %p54 = por %p52, %p53
    %p55 = scmp.ne.s32.totalorder %s44, %s45
    %p56 = scmp.eq.s32.totalorder %s22, 0
    %p57 = por %p55, %p56
    %p58 = scmp.ne.s32.totalorder %s44, %s45
    %p59 = scmp.eq.s32.totalorder %s23, 1
    %p60 = por %p58, %p59
    %p62 = scmp.ne.s32.totalorder %s45, %s61
    %p63 = scmp.eq.s32.totalorder %s23, 0
    %p64 = por %p62, %p63
    %s65 = ssub.s32 %s24, %s36
    %p66 = scmp.eq.s32.totalorder %s65, 0
    %s68 = sadd.s32 %s67, 1
    %s69 = scalar_select %p66, %s67, %s68
    %p72 = pneg %p66
    %p73 = scmp.eq.s32.totalorder %s17, 1
    %p74 = por %p72, %p73
    %p75 = scmp.ne.s32.totalorder %s67, %s70
    %p76 = scmp.eq.s32.totalorder %s17, 0
    %p77 = por %p75, %p76
    %p78 = scmp.ne.s32.totalorder %s67, %s70
    %p79 = scmp.eq.s32.totalorder %s22, 1
    %p80 = por %p78, %p79
    %p81 = scmp.ne.s32.totalorder %s70, %s71
    %p82 = scmp.eq.s32.totalorder %s22, 0
    %p83 = por %p81, %p82
    %p84 = scmp.ne.s32.totalorder %s70, %s71
    %p85 = scmp.eq.s32.totalorder %s23, 1
    %p86 = por %p84, %p85
    %p88 = scmp.ne.s32.totalorder %s71, %s87
    %p89 = scmp.eq.s32.totalorder %s23, 0
    %p90 = por %p88, %p89
    %s91 = ssub.s32 %s24, %s36
    %p92 = scmp.eq.s32.totalorder %s91, 0
    %s94 = sadd.s32 %s93, 1
    %s95 = scalar_select %p92, %s93, %s94
    %p98 = pneg %p92
    %p99 = scmp.eq.s32.totalorder %s17, 1
    %p100 = por %p98, %p99
    %p101 = scmp.ne.s32.totalorder %s93, %s96
    %p102 = scmp.eq.s32.totalorder %s17, 0
    %p103 = por %p101, %p102
    %p104 = scmp.ne.s32.totalorder %s93, %s96
    %p105 = scmp.eq.s32.totalorder %s22, 1
    %p106 = por %p104, %p105
    %p107 = scmp.ne.s32.totalorder %s96, %s97
    %p108 = scmp.eq.s32.totalorder %s22, 0
    %p109 = por %p107, %p108
    %p110 = scmp.ne.s32.totalorder %s96, %s97
    %p111 = scmp.eq.s32.totalorder %s23, 1
    %p112 = por %p110, %p111
    %p114 = scmp.ne.s32.totalorder %s97, %s113
    %p115 = scmp.eq.s32.totalorder %s23, 0
    %p116 = por %p114, %p115
    %s118 = sadd.s32 %s117, 1
    %p121 = scmp.eq.s32.totalorder %s17, 1
    %p122 = scmp.ne.s32.totalorder %s117, %s119
    %p123 = scmp.eq.s32.totalorder %s17, 0
    %p124 = por %p122, %p123
    %p125 = scmp.ne.s32.totalorder %s117, %s119
    %p126 = scmp.eq.s32.totalorder %s22, 1
    %p127 = por %p125, %p126
    %p128 = scmp.ne.s32.totalorder %s119, %s120
    %p129 = scmp.eq.s32.totalorder %s22, 0
    %p130 = por %p128, %p129
    %p131 = scmp.ne.s32.totalorder %s119, %s120
    %p132 = scmp.eq.s32.totalorder %s23, 1
    %p133 = por %p131, %p132
    %p135 = scmp.ne.s32.totalorder %s120, %s134
    %p136 = scmp.eq.s32.totalorder %s23, 0
    %p137 = por %p135, %p136
    %s139 = sadd.s32 %s138, 1
    %p142 = scmp.eq.s32.totalorder %s17, 1
    %p143 = scmp.ne.s32.totalorder %s138, %s140
    %p144 = scmp.eq.s32.totalorder %s17, 0
    %p145 = por %p143, %p144
    %p146 = scmp.ne.s32.totalorder %s138, %s140
    %p147 = scmp.eq.s32.totalorder %s22, 1
    %p148 = por %p146, %p147
    %p149 = scmp.ne.s32.totalorder %s140, %s141
    %p150 = scmp.eq.s32.totalorder %s22, 0
    %p151 = por %p149, %p150
    %p152 = scmp.ne.s32.totalorder %s140, %s141
    %p153 = scmp.eq.s32.totalorder %s23, 1
    %p154 = por %p152, %p153
    %p156 = scmp.ne.s32.totalorder %s141, %s155
    %p157 = scmp.eq.s32.totalorder %s23, 0
    %p158 = por %p156, %p157
    %s160 = sadd.s32 %s159, 1
    %p163 = scmp.eq.s32.totalorder %s17, 1
    %p164 = scmp.ne.s32.totalorder %s159, %s161
    %p165 = scmp.eq.s32.totalorder %s17, 0
    %p166 = por %p164, %p165
    %p167 = scmp.ne.s32.totalorder %s159, %s161
    %p168 = scmp.eq.s32.totalorder %s22, 1
    %p169 = por %p167, %p168
    %p170 = scmp.ne.s32.totalorder %s161, %s162
    %p171 = scmp.eq.s32.totalorder %s22, 0
    %p172 = por %p170, %p171
    %p173 = scmp.ne.s32.totalorder %s161, %s162
    %p174 = scmp.eq.s32.totalorder %s23, 1
    %p175 = por %p173, %p174
    %p177 = scmp.ne.s32.totalorder %s162, %s176
    %p178 = scmp.eq.s32.totalorder %s23, 0
    %p179 = por %p177, %p178
    %s181 = sadd.s32 %s180, 1
    %p184 = scmp.eq.s32.totalorder %s17, 1
    %p185 = scmp.ne.s32.totalorder %s180, %s182
    %p186 = scmp.eq.s32.totalorder %s17, 0
    %p187 = por %p185, %p186
    %p188 = scmp.ne.s32.totalorder %s180, %s182
    %p189 = scmp.eq.s32.totalorder %s22, 1
    %p190 = por %p188, %p189
    %p191 = scmp.ne.s32.totalorder %s182, %s183
    %p192 = scmp.eq.s32.totalorder %s22, 0
    %p193 = por %p191, %p192
    %p194 = scmp.ne.s32.totalorder %s182, %s183
    %p195 = scmp.eq.s32.totalorder %s23, 1
    %p196 = por %p194, %p195
    %p198 = scmp.ne.s32.totalorder %s183, %s197
    %p199 = scmp.eq.s32.totalorder %s23, 0
    %p200 = por %p198, %p199
    %s202 = sadd.s32 %s201, 1
    %p205 = scmp.eq.s32.totalorder %s17, 1
    %p206 = scmp.ne.s32.totalorder %s201, %s203
    %p207 = scmp.eq.s32.totalorder %s17, 0
    %p208 = por %p206, %p207
    %p209 = scmp.ne.s32.totalorder %s201, %s203
    %p210 = scmp.eq.s32.totalorder %s22, 1
    %p211 = por %p209, %p210
    %p212 = scmp.ne.s32.totalorder %s203, %s204
    %p213 = scmp.eq.s32.totalorder %s22, 0
    %p214 = por %p212, %p213
    %p215 = scmp.ne.s32.totalorder %s203, %s204
    %p216 = scmp.eq.s32.totalorder %s23, 1
    %p217 = por %p215, %p216
    %p219 = scmp.ne.s32.totalorder %s204, %s218
    %p220 = scmp.eq.s32.totalorder %s23, 0
    %p221 = por %p219, %p220
    %s223 = sadd.s32 %s222, 1
    %p226 = scmp.eq.s32.totalorder %s17, 1
    %p227 = scmp.ne.s32.totalorder %s222, %s224
    %p228 = scmp.eq.s32.totalorder %s17, 0
    %p229 = por %p227, %p228
    %p230 = scmp.ne.s32.totalorder %s222, %s224
    %p231 = scmp.eq.s32.totalorder %s22, 1
    %p232 = por %p230, %p231
    %p233 = scmp.ne.s32.totalorder %s224, %s225
    %p234 = scmp.eq.s32.totalorder %s22, 0
    %p235 = por %p233, %p234
    %p236 = scmp.ne.s32.totalorder %s224, %s225
    %p237 = scmp.eq.s32.totalorder %s23, 1
    %p238 = por %p236, %p237
    %p240 = scmp.ne.s32.totalorder %s225, %s239
    %p241 = scmp.eq.s32.totalorder %s23, 0
    %p242 = por %p240, %p241
    %s244 = sadd.s32 %s243, 1
    %p247 = scmp.eq.s32.totalorder %s17, 1
    %p248 = scmp.ne.s32.totalorder %s243, %s245
    %p249 = scmp.eq.s32.totalorder %s17, 0
    %p250 = por %p248, %p249
    %p251 = scmp.ne.s32.totalorder %s243, %s245
    %p252 = scmp.eq.s32.totalorder %s22, 1
    %p253 = por %p251, %p252
    %p254 = scmp.ne.s32.totalorder %s245, %s246
    %p255 = scmp.eq.s32.totalorder %s22, 0
    %p256 = por %p254, %p255
    %p257 = scmp.ne.s32.totalorder %s245, %s246
    %p258 = scmp.eq.s32.totalorder %s23, 1
    %p259 = por %p257, %p258
    %p261 = scmp.ne.s32.totalorder %s246, %s260
    %p262 = scmp.eq.s32.totalorder %s23, 0
    %p263 = por %p261, %p262
    %s265 = sadd.s32 %s264, 1
    %p268 = scmp.eq.s32.totalorder %s17, 1
    %p269 = scmp.ne.s32.totalorder %s264, %s266
    %p270 = scmp.eq.s32.totalorder %s17, 0
    %p271 = por %p269, %p270
    %p272 = scmp.ne.s32.totalorder %s264, %s266
    %p273 = scmp.eq.s32.totalorder %s22, 1
    %p274 = por %p272, %p273
    %p275 = scmp.ne.s32.totalorder %s266, %s267
    %p276 = scmp.eq.s32.totalorder %s22, 0
    %p277 = por %p275, %p276
    %p278 = scmp.ne.s32.totalorder %s266, %s267
    %p279 = scmp.eq.s32.totalorder %s23, 1
    %p280 = por %p278, %p279
    %p282 = scmp.ne.s32.totalorder %s267, %s281
    %p283 = scmp.eq.s32.totalorder %s23, 0
    %p284 = por %p282, %p283
    %s285 = ssub.s32 %s24, %s36
    %s286 = ssub.s32 %s25, %s32
    %s287 = sor.u32 %s285, %s286
    %p288 = scmp.eq.s32.totalorder %s287, 0
    %s290 = sadd.s32 %s289, 1
    %s291 = scalar_select %p288, %s289, %s290
    %p294 = pneg %p288
    %p295 = scmp.eq.s32.totalorder %s17, 1
    %p296 = por %p294, %p295
    %p297 = scmp.ne.s32.totalorder %s289, %s292
    %p298 = scmp.eq.s32.totalorder %s17, 0
    %p299 = por %p297, %p298
    %p300 = scmp.ne.s32.totalorder %s289, %s292
    %p301 = scmp.eq.s32.totalorder %s22, 1
    %p302 = por %p300, %p301
    %p303 = scmp.ne.s32.totalorder %s292, %s293
    %p304 = scmp.eq.s32.totalorder %s22, 0
    %p305 = por %p303, %p304
    %p306 = scmp.ne.s32.totalorder %s292, %s293
    %p307 = scmp.eq.s32.totalorder %s23, 1
    %p308 = por %p306, %p307
    %p310 = scmp.ne.s32.totalorder %s293, %s309
    %p311 = scmp.eq.s32.totalorder %s23, 0
    %p312 = por %p310, %p311
    %p313 = scmp.le.s32.totalorder 1, %s17
    %p314 = scmp.lt.s32.totalorder %s17, 3
    %p315 = pnand %p313, %p314
    %p316 = pneg %p315
    // Predicated region
    $region9: #{transformer_forward.9} parent=5 // pred_check
      _
    $region10: #{transformer_forward.9} parent=5 // pred_check_branch
      %318 = sbr.rel (%p315) target = $region12
    $region11: #{transformer_forward.9} parent=5 // pred_region
      %s319 = ssub.s32 %s17, 1
      // Predicated region
      $region13: #{transformer_forward.9} parent=11 // pred_check
        %p320 = pneg %p130
      $region14: #{transformer_forward.9} parent=11 // pred_check_branch
        %322 = sbr.rel (%p320) target = $region16
      $region15: #{transformer_forward.9} parent=11 // pred_region
        _
      $region16: #{transformer_forward.9} parent=11 // pred_fallthru
        _
      // Predicated region
      $region17: #{transformer_forward.9} parent=11 // pred_check
        %p323 = pneg %p151
      $region18: #{transformer_forward.9} parent=11 // pred_check_branch
        %325 = sbr.rel (%p323) target = $region20
      $region19: #{transformer_forward.9} parent=11 // pred_region
        _
      $region20: #{transformer_forward.9} parent=11 // pred_fallthru
        _
      // Predicated region
      $region21: #{transformer_forward.9} parent=11 // pred_check
        %p326 = pneg %p172
      $region22: #{transformer_forward.9} parent=11 // pred_check_branch
        %328 = sbr.rel (%p326) target = $region24
      $region23: #{transformer_forward.9} parent=11 // pred_region
        _
      $region24: #{transformer_forward.9} parent=11 // pred_fallthru
        _
      // Predicated region
      $region25: #{transformer_forward.9} parent=11 // pred_check
        %p329 = pneg %p193
      $region26: #{transformer_forward.9} parent=11 // pred_check_branch
        %331 = sbr.rel (%p329) target = $region28
      $region27: #{transformer_forward.9} parent=11 // pred_region
        _
      $region28: #{transformer_forward.9} parent=11 // pred_fallthru
        _
      // Predicated region
      $region29: #{transformer_forward.9} parent=11 // pred_check
        %p332 = pneg %p214
      $region30: #{transformer_forward.9} parent=11 // pred_check_branch
        %334 = sbr.rel (%p332) target = $region32
      $region31: #{transformer_forward.9} parent=11 // pred_region
        _
      $region32: #{transformer_forward.9} parent=11 // pred_fallthru
        _
      // Predicated region
      $region33: #{transformer_forward.9} parent=11 // pred_check
        %p335 = pneg %p235
      $region34: #{transformer_forward.9} parent=11 // pred_check_branch
        %337 = sbr.rel (%p335) target = $region36
      $region35: #{transformer_forward.9} parent=11 // pred_region
        _
      $region36: #{transformer_forward.9} parent=11 // pred_fallthru
        _
      // Predicated region
      $region37: #{transformer_forward.9} parent=11 // pred_check
        %p338 = pneg %p256
      $region38: #{transformer_forward.9} parent=11 // pred_check_branch
        %340 = sbr.rel (%p338) target = $region40
      $region39: #{transformer_forward.9} parent=11 // pred_region
        _
      $region40: #{transformer_forward.9} parent=11 // pred_fallthru
        _
      // Predicated region
      $region41: #{transformer_forward.9} parent=11 // pred_check
        %p341 = pneg %p277
      $region42: #{transformer_forward.9} parent=11 // pred_check_branch
        %343 = sbr.rel (%p341) target = $region44
      $region43: #{transformer_forward.9} parent=11 // pred_region
        _
      $region44: #{transformer_forward.9} parent=11 // pred_fallthru
        _
    $region12: #{transformer_forward.9} parent=5 // pred_fallthru
      _
    %p344 = scmp.lt.s32.totalorder %s17, 2
    // Predicated region
    $region45: #{transformer_forward.9} parent=5 // pred_check
      %p345 = pneg %p344
    $region46: #{transformer_forward.9} parent=5 // pred_check_branch
      %347 = sbr.rel (%p345) target = $region48
    $region47: #{transformer_forward.9} parent=5 // pred_region
      // Predicated region
      $region49: #{transformer_forward.9} parent=47 // pred_check
        %p348 = pneg %p51
      $region50: #{transformer_forward.9} parent=47 // pred_check_branch
        %350 = sbr.rel (%p348) target = $region52
      $region51: #{transformer_forward.9} parent=47 // pred_region
        %p351 = scmp.lt.s32.totalorder %s24, 1
        %s352 = scalar_select %p351, %s24, 1
        %p353 = scmp.lt.s32.totalorder %s25, 0
        %s354 = scalar_select %p353, %s25, 0
        %s355 = sadd.s32 %s354, %s352
        %s356 = smul.addr %s355, 8
        %s357 = scalar_lea.vmem %s0, %s356
      $region52: #{transformer_forward.9} parent=47 // pred_fallthru
        _
      // Predicated region
      $region53: #{transformer_forward.9} parent=47 // pred_check
        %p358 = pneg %p77
      $region54: #{transformer_forward.9} parent=47 // pred_check_branch
        %360 = sbr.rel (%p358) target = $region56
      $region55: #{transformer_forward.9} parent=47 // pred_region
        %p361 = scmp.lt.s32.totalorder %s24, 1
        %s362 = scalar_select %p361, %s24, 1
        %s363 = smul.addr %s362, 8
        %s364 = scalar_lea.vmem %s1, %s363
      $region56: #{transformer_forward.9} parent=47 // pred_fallthru
        _
      // Predicated region
      $region57: #{transformer_forward.9} parent=47 // pred_check
        %p365 = pneg %p103
      $region58: #{transformer_forward.9} parent=47 // pred_check_branch
        %367 = sbr.rel (%p365) target = $region60
      $region59: #{transformer_forward.9} parent=47 // pred_region
        %p368 = scmp.lt.s32.totalorder %s24, 1
        %s369 = scalar_select %p368, %s24, 1
        %s370 = scalar_lea.vmem %s2, %s369
      $region60: #{transformer_forward.9} parent=47 // pred_fallthru
        _
    $region48: #{transformer_forward.9} parent=5 // pred_fallthru
      _
    %p371 = scmp.le.s32.totalorder 1, %s17
    %p372 = scmp.lt.s32.totalorder %s17, 3
    %p373 = pnand %p371, %p372
    %p374 = pneg %p373
    // Predicated region
    $region61: #{transformer_forward.9} parent=5 // pred_check
      _
    $region62: #{transformer_forward.9} parent=5 // pred_check_branch
      %376 = sbr.rel (%p373) target = $region64
    $region63: #{transformer_forward.9} parent=5 // pred_region
      %s377 = ssub.s32 %s17, 1
      %p378 = scmp.lt.s32.totalorder %s26, 1
      %s379 = scalar_select %p378, %s26, 1
      %p380 = scmp.lt.s32.totalorder %s27, 0
      %s381 = scalar_select %p380, %s27, 0
      %s382 = sadd.s32 %s381, %s379
      %s383 = smul.addr %s382, 8
      %s384 = scalar_lea.vmem %s0, %s383
      %p385 = pneg %p57
      %p386 = pneg %p54
      %p387 = scmp.lt.s32.totalorder %s26, 1
      %s388 = scalar_select %p387, %s26, 1
      %s389 = smul.addr %s388, 8
      %s390 = scalar_lea.vmem %s1, %s389
      %p391 = pneg %p83
      %p392 = pneg %p80
      %p393 = scmp.lt.s32.totalorder %s26, 1
      %s394 = scalar_select %p393, %s26, 1
      %s395 = scalar_lea.vmem %s2, %s394
      %p396 = pneg %p109
      %p397 = pneg %p106
      %p398 = pneg %p130
      %p399 = pneg %p127
      %p400 = pneg %p151
      %p401 = pneg %p148
      %p402 = pneg %p172
      %p403 = pneg %p169
      %p404 = pneg %p193
      %p405 = pneg %p190
      %p406 = pneg %p214
      %p407 = pneg %p211
      %p408 = pneg %p235
      %p409 = pneg %p232
      %p410 = pneg %p256
      %p411 = pneg %p253
      %p412 = pneg %p277
      %p413 = pneg %p274
      %p414 = pneg %p305
      %p415 = pneg %p302
      %p416 = scmp.lt.s32.totalorder %s26, 1
      %s417 = scalar_select %p416, %s26, 1
      %p418 = scmp.lt.s32.totalorder %s27, 0
      %s419 = scalar_select %p418, %s27, 0
      %s420 = sadd.s32 %s419, %s417
      %s421 = smul.addr %s420, 8
      %s422 = scalar_lea.vmem %s11, %s421
      %p423 = scmp.lt.s32.totalorder %s26, 1
      %s424 = scalar_select %p423, %s26, 1
      %p425 = scmp.lt.s32.totalorder %s27, 0
      %s426 = scalar_select %p425, %s27, 0
      %s427 = sadd.s32 %s426, %s424
      %s428 = smul.addr %s427, 8
      %s429 = scalar_lea.vmem %s0, %s428
      %p430 = scmp.lt.s32.totalorder %s26, 1
      %s431 = scalar_select %p430, %s26, 1
      %s432 = smul.addr %s431, 8
      %s433 = scalar_lea.vmem %s1, %s432
      %p434 = scmp.lt.s32.totalorder %s26, 1
      %s435 = scalar_select %p434, %s26, 1
      %s436 = scalar_lea.vmem %s2, %s435
      %p437 = scmp.lt.s32.totalorder %s26, 1
      %s438 = scalar_select %p437, %s26, 1
      %p439 = scmp.lt.s32.totalorder %s27, 0
      %s440 = scalar_select %p439, %s27, 0
      %s441 = sadd.s32 %s440, %s438
      %s442 = smul.addr %s441, 8
      %s443 = scalar_lea.vmem %s11, %s442
      %v444 = vld [vmem:[%s429] sm:$0xff]
      %v445 = vld [vmem:[%s433] sm:$0xff]
      %v446 = vld [vmem:[%s3] sm:$0xff]
      %v447 = vld [vmem:[%s3 + $0x8] sm:$0xff]
      %v448 = vld [vmem:[%s3 + $0x10] sm:$0xff]
      %v449 = vld [vmem:[%s3 + $0x18] sm:$0xff]
      %v450 = vld [vmem:[%s4] sm:$0x1]
      %v452 = vlaneseq
      %v453 = vshrl.u32 %v452, 7
      %v454 = vsub.s32 0, %v453
      %v455 = vrot.slane %v450, %v454
      %vm457 = vcmask 261120
      %v459 = vsel %vm457, %v444, 0
      %461 = vmatprep.subr.mxu0 0.0
      %462 = vmatpush1.msra.mxu0 0.0
      %463 = vmatprep.subr.mxu0 0.0
      %464 = vmatpush1.msra.mxu0 0.0
      %465 = vmatprep.subr.mxu0 0.0
      %466 = vmatpush1.msra.mxu0 0.0
      %467 = vmatprep.subr.mxu0 0.0
      %468 = vmatpush1.msra.mxu0 0.0
      %469 = vmatprep.subr.mxu0 0.0
      %470 = vmatpush1.msra.mxu0 0.0
      %471 = vmatprep.subr.mxu0 0.0
      %472 = vmatpush1.msra.mxu0 0.0
      %473 = vmatprep.subr.mxu0 0.0
      %474 = vmatpush1.msra.mxu0 0.0
      %475 = vmatprep.subr.mxu0 0.0
      %476 = vmatpush1.msra.mxu0 0.0
      %477 = vmatprep.subr.mxu0 0.0
      %478 = vmatpush1.msra.mxu0 0.0
      %479 = vmatprep.subr.mxu0 0.0
      %480 = vmatpush1.msra.mxu0 0.0
      %481 = vmatprep.subr.mxu0 0.0
      %482 = vmatpush1.msra.mxu0 0.0
      %483 = vmatprep.subr.mxu0 0.0
      %484 = vmatpush1.msra.mxu0 0.0
      %485 = vmatprep.subr.mxu0 0.0
      %486 = vmatpush1.msra.mxu0 %v449
      %487 = vmatprep.subr.mxu0 0.0
      %488 = vmatpush1.msra.mxu0 %v448
      %489 = vmatprep.subr.mxu0 0.0
      %490 = vmatpush1.msra.mxu0 %v447
      %491 = vmatprep.subr.mxu0 0.0
      %492 = vmatpush1.msra.mxu0 %v446
      %493 = vmatprep.subr.mxu0 0.0
      %494 = vmatpush2.msra.mxu0 0.0
      %495 = vmatprep.subr.mxu0 0.0
      %496 = vmatpush2.msra.mxu0 0.0
      %497 = vmatprep.subr.mxu0 0.0
      %498 = vmatpush2.msra.mxu0 0.0
      %499 = vmatprep.subr.mxu0 0.0
      %500 = vmatpush2.msra.mxu0 0.0
      %501 = vmatprep.subr.mxu0 0.0
      %502 = vmatpush2.msra.mxu0 0.0
      %503 = vmatprep.subr.mxu0 0.0
      %504 = vmatpush2.msra.mxu0 0.0
      %505 = vmatprep.subr.mxu0 0.0
      %506 = vmatpush2.msra.mxu0 0.0
      %507 = vmatprep.subr.mxu0 0.0
      %508 = vmatpush2.msra.mxu0 0.0
      %509 = vmatprep.subr.mxu0 0.0
      %510 = vmatpush2.msra.mxu0 0.0
      %511 = vmatprep.subr.mxu0 0.0
      %512 = vmatpush2.msra.mxu0 0.0
      %513 = vmatprep.subr.mxu0 0.0
      %514 = vmatpush2.msra.mxu0 0.0
      %515 = vmatprep.subr.mxu0 0.0
      %516 = vmatpush2.msra.mxu0 0.0
      %517 = vmatprep.subr.mxu0 0.0
      %518 = vmatpush2.msra.mxu0 0.0
      %519 = vmatprep.subr.mxu0 0.0
      %520 = vmatpush2.msra.mxu0 0.0
      %521 = vmatprep.subr.mxu0 0.0
      %522 = vmatpush2.msra.mxu0 0.0
      %523 = vmatprep.subr.mxu0 0.0
      %524 = vmatpush2.msra.mxu0 0.0
      %525 = vmatprep.mubr.f32.mxu0 0.0
      %526 = vmatmul.mubr.f32.gmra.mxu0 %v459
      %v527 = vpop.f32.mrf.mxu0
      %v528 = vadd.f32 %v455, %v527
      %v529 = vpop.f32.mrf.mxu0
      %530 = vdwg.mxu0
      %v531 = vld [vmem:[%s5] sm:$0xff]
      %v532 = vld [vmem:[%s5 + $0x8] sm:$0xff]
      %v533 = vld [vmem:[%s5 + $0x10] sm:$0xff]
      %v534 = vld [vmem:[%s5 + $0x18] sm:$0xff]
      %v535 = vld [vmem:[%s6] sm:$0x1]
      %v537 = vlaneseq
      %v538 = vshrl.u32 %v537, 7
      %v539 = vsub.s32 0, %v538
      %v540 = vrot.slane %v535, %v539
      %v543 = vsel %vm457, %v445, 0
      %545 = vmatprep.subr.mxu0 0.0
      %546 = vmatpush1.msra.mxu0 0.0
      %547 = vmatprep.subr.mxu0 0.0
      %548 = vmatpush1.msra.mxu0 0.0
      %549 = vmatprep.subr.mxu0 0.0
      %550 = vmatpush1.msra.mxu0 0.0
      %551 = vmatprep.subr.mxu0 0.0
      %552 = vmatpush1.msra.mxu0 0.0
      %553 = vmatprep.subr.mxu0 0.0
      %554 = vmatpush1.msra.mxu0 0.0
      %555 = vmatprep.subr.mxu0 0.0
      %556 = vmatpush1.msra.mxu0 0.0
      %557 = vmatprep.subr.mxu0 0.0
      %558 = vmatpush1.msra.mxu0 0.0
      %559 = vmatprep.subr.mxu0 0.0
      %560 = vmatpush1.msra.mxu0 0.0
      %561 = vmatprep.subr.mxu0 0.0
      %562 = vmatpush1.msra.mxu0 0.0
      %563 = vmatprep.subr.mxu0 0.0
      %564 = vmatpush1.msra.mxu0 0.0
      %565 = vmatprep.subr.mxu0 0.0
      %566 = vmatpush1.msra.mxu0 0.0
      %567 = vmatprep.subr.mxu0 0.0
      %568 = vmatpush1.msra.mxu0 0.0
      %569 = vmatprep.subr.mxu0 0.0
      %570 = vmatpush1.msra.mxu0 %v534
      %571 = vmatprep.subr.mxu0 0.0
      %572 = vmatpush1.msra.mxu0 %v533
      %573 = vmatprep.subr.mxu0 0.0
      %574 = vmatpush1.msra.mxu0 %v532
      %575 = vmatprep.subr.mxu0 0.0
      %576 = vmatpush1.msra.mxu0 %v531
      %577 = vmatprep.subr.mxu0 0.0
      %578 = vmatpush2.msra.mxu0 0.0
      %579 = vmatprep.subr.mxu0 0.0
      %580 = vmatpush2.msra.mxu0 0.0
      %581 = vmatprep.subr.mxu0 0.0
      %582 = vmatpush2.msra.mxu0 0.0
      %583 = vmatprep.subr.mxu0 0.0
      %584 = vmatpush2.msra.mxu0 0.0
      %585 = vmatprep.subr.mxu0 0.0
      %586 = vmatpush2.msra.mxu0 0.0
      %587 = vmatprep.subr.mxu0 0.0
      %588 = vmatpush2.msra.mxu0 0.0
      %589 = vmatprep.subr.mxu0 0.0
      %590 = vmatpush2.msra.mxu0 0.0
      %591 = vmatprep.subr.mxu0 0.0
      %592 = vmatpush2.msra.mxu0 0.0
      %593 = vmatprep.subr.mxu0 0.0
      %594 = vmatpush2.msra.mxu0 0.0
      %595 = vmatprep.subr.mxu0 0.0
      %596 = vmatpush2.msra.mxu0 0.0
      %597 = vmatprep.subr.mxu0 0.0
      %598 = vmatpush2.msra.mxu0 0.0
      %599 = vmatprep.subr.mxu0 0.0
      %600 = vmatpush2.msra.mxu0 0.0
      %601 = vmatprep.subr.mxu0 0.0
      %602 = vmatpush2.msra.mxu0 0.0
      %603 = vmatprep.subr.mxu0 0.0
      %604 = vmatpush2.msra.mxu0 0.0
      %605 = vmatprep.subr.mxu0 0.0
      %606 = vmatpush2.msra.mxu0 0.0
      %607 = vmatprep.subr.mxu0 0.0
      %608 = vmatpush2.msra.mxu0 0.0
      %609 = vmatprep.mubr.f32.mxu0 0.0
      %610 = vmatmul.mubr.f32.gmra.mxu0 %v543
      %v611 = vpop.f32.mrf.mxu0
      %v612 = vadd.f32 %v540, %v611
      %v613 = vpop.f32.mrf.mxu0
      %614 = vdwg.mxu0
      %s615 = smul.u32 %s27, 8
      %v616 = vlaneseq
      %v617 = vshrl.u32 %v616, 7
      %v618 = vstv %s615
      %v619 = vadd.s32 %v617, %v618
      %v620 = vlaneseq
      %v621 = vand.u32 %v620, 127
      %vm622 = vcmp.gt.s32.totalorder %v621, %v619
      %v623 = vsel %vm622, -1e+09, 0.0
      %v624 = vld [vmem:[%s436] sm:$0x1]
      %v626 = vlaneseq
      %v627 = vshrl.u32 %v626, 7
      %v628 = vsub.s32 0, %v627
      %v629 = vrot.slane %v624, %v628
      %v631 = vadd.f32 %v623, %v629
      %v632 = vmul.f32 %v528, 0.35355338
      %vm633 = vcmask 64512
      %v635 = vsel %vm633, %v632, 0
      %v638 = vsel %vm633, %v612, 0
      %640 = vmatprep.subr.mxu0 0.0
      %641 = vmatpush1.xpose.msra.mxu0 0.0
      %642 = vmatprep.subr.mxu0 0.0
      %643 = vmatpush1.xpose.msra.mxu0 0.0
      %644 = vmatprep.subr.mxu0 0.0
      %645 = vmatpush1.xpose.msra.mxu0 0.0
      %646 = vmatprep.subr.mxu0 0.0
      %647 = vmatpush1.xpose.msra.mxu0 0.0
      %648 = vmatprep.subr.mxu0 0.0
      %649 = vmatpush1.xpose.msra.mxu0 0.0
      %650 = vmatprep.subr.mxu0 0.0
      %651 = vmatpush1.xpose.msra.mxu0 0.0
      %652 = vmatprep.subr.mxu0 0.0
      %653 = vmatpush1.xpose.msra.mxu0 0.0
      %654 = vmatprep.subr.mxu0 0.0
      %655 = vmatpush1.xpose.msra.mxu0 0.0
      %656 = vmatprep.subr.mxu0 0.0
      %657 = vmatpush1.xpose.msra.mxu0 0.0
      %658 = vmatprep.subr.mxu0 0.0
      %659 = vmatpush1.xpose.msra.mxu0 0.0
      %660 = vmatprep.subr.mxu0 0.0
      %661 = vmatpush1.xpose.msra.mxu0 0.0
      %662 = vmatprep.subr.mxu0 0.0
      %663 = vmatpush1.xpose.msra.mxu0 0.0
      %664 = vmatprep.subr.mxu0 0.0
      %665 = vmatpush1.xpose.msra.mxu0 0.0
      %666 = vmatprep.subr.mxu0 0.0
      %667 = vmatpush1.xpose.msra.mxu0 0.0
      %668 = vmatprep.subr.mxu0 0.0
      %669 = vmatpush1.xpose.msra.mxu0 0.0
      %670 = vmatprep.subr.mxu0 0.0
      %671 = vmatpush1.xpose.msra.mxu0 %v638
      %672 = vmatprep.subr.mxu0 0.0
      %673 = vmatpush2.xpose.msra.mxu0 0.0
      %674 = vmatprep.subr.mxu0 0.0
      %675 = vmatpush2.xpose.msra.mxu0 0.0
      %676 = vmatprep.subr.mxu0 0.0
      %677 = vmatpush2.xpose.msra.mxu0 0.0
      %678 = vmatprep.subr.mxu0 0.0
      %679 = vmatpush2.xpose.msra.mxu0 0.0
      %680 = vmatprep.subr.mxu0 0.0
      %681 = vmatpush2.xpose.msra.mxu0 0.0
      %682 = vmatprep.subr.mxu0 0.0
      %683 = vmatpush2.xpose.msra.mxu0 0.0
      %684 = vmatprep.subr.mxu0 0.0
      %685 = vmatpush2.xpose.msra.mxu0 0.0
      %686 = vmatprep.subr.mxu0 0.0
      %687 = vmatpush2.xpose.msra.mxu0 0.0
      %688 = vmatprep.subr.mxu0 0.0
      %689 = vmatpush2.xpose.msra.mxu0 0.0
      %690 = vmatprep.subr.mxu0 0.0
      %691 = vmatpush2.xpose.msra.mxu0 0.0
      %692 = vmatprep.subr.mxu0 0.0
      %693 = vmatpush2.xpose.msra.mxu0 0.0
      %694 = vmatprep.subr.mxu0 0.0
      %695 = vmatpush2.xpose.msra.mxu0 0.0
      %696 = vmatprep.subr.mxu0 0.0
      %697 = vmatpush2.xpose.msra.mxu0 0.0
      %698 = vmatprep.subr.mxu0 0.0
      %699 = vmatpush2.xpose.msra.mxu0 0.0
      %700 = vmatprep.subr.mxu0 0.0
      %701 = vmatpush2.xpose.msra.mxu0 0.0
      %702 = vmatprep.subr.mxu0 0.0
      %703 = vmatpush2.xpose.msra.mxu0 0.0
      %704 = vmatprep.mubr.f32.mxu0 0.0
      %705 = vmatmul.mubr.f32.gmra.mxu0 %v635
      %v706 = vpop.f32.mrf.mxu0
      %v707 = vadd.f32 %v631, %v706
      %v708 = vpop.f32.mrf.mxu0
      %709 = vdwg.mxu0
      %v710 = vsel %vm633, %v707, -inf
      %711 = vmax.xlane.f32.xlu0 %v710
      %v712 = vpop.xlane.xlu0 %711
      %v713 = vsub.f32 %v707, %v712
      %v714 = vmul.f32 %v713, 1.442695
      %v715 = vpow.pop %v714
      %v716 = vsel %vm633, %v715, 0.0
      %717 = vadd.xlane.f32.xlu0 %v716
      %v718 = vpop.xlane.xlu0 %717
      %v719 = vrcp.pop %v718
      %v720 = vmul.f32 %v715, %v719
      %721 = vrot.lane.b32.xlu0 %v612, 96
      %v722 = vpop.permute.xlu0 %721
      %v725 = vsel %vm633, %v720, 0
      %727 = vmatprep.subr.mxu0 0.0
      %728 = vmatpush1.msra.mxu0 0.0
      %729 = vmatprep.subr.mxu0 0.0
      %730 = vmatpush1.msra.mxu0 0.0
      %731 = vmatprep.subr.mxu0 0.0
      %732 = vmatpush1.msra.mxu0 0.0
      %733 = vmatprep.subr.mxu0 0.0
      %734 = vmatpush1.msra.mxu0 0.0
      %735 = vmatprep.subr.mxu0 0.0
      %736 = vmatpush1.msra.mxu0 0.0
      %737 = vmatprep.subr.mxu0 0.0
      %738 = vmatpush1.msra.mxu0 0.0
      %739 = vmatprep.subr.mxu0 0.0
      %740 = vmatpush1.msra.mxu0 0.0
      %741 = vmatprep.subr.mxu0 0.0
      %742 = vmatpush1.msra.mxu0 0.0
      %743 = vmatprep.subr.mxu0 0.0
      %744 = vmatpush1.msra.mxu0 0.0
      %745 = vmatprep.subr.mxu0 0.0
      %746 = vmatpush1.msra.mxu0 0.0
      %747 = vmatprep.subr.mxu0 0.0
      %748 = vmatpush1.msra.mxu0 0.0
      %749 = vmatprep.subr.mxu0 0.0
      %750 = vmatpush1.msra.mxu0 0.0
      %751 = vmatprep.subr.mxu0 0.0
      %752 = vmatpush1.msra.mxu0 0.0
      %753 = vmatprep.subr.mxu0 0.0
      %754 = vmatpush1.msra.mxu0 0.0
      %755 = vmatprep.subr.mxu0 0.0
      %756 = vmatpush1.msra.mxu0 0.0
      %757 = vmatprep.subr.mxu0 0.0
      %758 = vmatpush1.msra.mxu0 %v722
      %759 = vmatprep.subr.mxu0 0.0
      %760 = vmatpush2.msra.mxu0 0.0
      %761 = vmatprep.subr.mxu0 0.0
      %762 = vmatpush2.msra.mxu0 0.0
      %763 = vmatprep.subr.mxu0 0.0
      %764 = vmatpush2.msra.mxu0 0.0
      %765 = vmatprep.subr.mxu0 0.0
      %766 = vmatpush2.msra.mxu0 0.0
      %767 = vmatprep.subr.mxu0 0.0
      %768 = vmatpush2.msra.mxu0 0.0
      %769 = vmatprep.subr.mxu0 0.0
      %770 = vmatpush2.msra.mxu0 0.0
      %771 = vmatprep.subr.mxu0 0.0
      %772 = vmatpush2.msra.mxu0 0.0
      %773 = vmatprep.subr.mxu0 0.0
      %774 = vmatpush2.msra.mxu0 0.0
      %775 = vmatprep.subr.mxu0 0.0
      %776 = vmatpush2.msra.mxu0 0.0
      %777 = vmatprep.subr.mxu0 0.0
      %778 = vmatpush2.msra.mxu0 0.0
      %779 = vmatprep.subr.mxu0 0.0
      %780 = vmatpush2.msra.mxu0 0.0
      %781 = vmatprep.subr.mxu0 0.0
      %782 = vmatpush2.msra.mxu0 0.0
      %783 = vmatprep.subr.mxu0 0.0
      %784 = vmatpush2.msra.mxu0 0.0
      %785 = vmatprep.subr.mxu0 0.0
      %786 = vmatpush2.msra.mxu0 0.0
      %787 = vmatprep.subr.mxu0 0.0
      %788 = vmatpush2.msra.mxu0 0.0
      %789 = vmatprep.subr.mxu0 0.0
      %790 = vmatpush2.msra.mxu0 0.0
      %791 = vmatprep.mubr.f32.mxu0 0.0
      %792 = vmatmul.mubr.f32.gmra.mxu0 %v725
      %v793 = vpop.f32.mrf.mxu0
      %v794 = vadd.f32 0.0, %v793
      %v795 = vpop.f32.mrf.mxu0
      %796 = vdwg.mxu0
      %v797 = vld [vmem:[%s7] sm:$0xff]
      %798 = vrot.lane.b32.xlu0 %v632, 120
      %v799 = vpop.permute.xlu0 %798
      %800 = vrot.lane.b32.xlu0 %v612, 120
      %v801 = vpop.permute.xlu0 %800
      %v802 = vsel %vm633, %v799, 0
      %v804 = vsel %vm633, %v801, 0
      %806 = vmatprep.subr.mxu0 0.0
      %807 = vmatpush1.xpose.msra.mxu0 0.0
      %808 = vmatprep.subr.mxu0 0.0
      %809 = vmatpush1.xpose.msra.mxu0 0.0
      %810 = vmatprep.subr.mxu0 0.0
      %811 = vmatpush1.xpose.msra.mxu0 0.0
      %812 = vmatprep.subr.mxu0 0.0
      %813 = vmatpush1.xpose.msra.mxu0 0.0
      %814 = vmatprep.subr.mxu0 0.0
      %815 = vmatpush1.xpose.msra.mxu0 0.0
      %816 = vmatprep.subr.mxu0 0.0
      %817 = vmatpush1.xpose.msra.mxu0 0.0
      %818 = vmatprep.subr.mxu0 0.0
      %819 = vmatpush1.xpose.msra.mxu0 0.0
      %820 = vmatprep.subr.mxu0 0.0
      %821 = vmatpush1.xpose.msra.mxu0 0.0
      %822 = vmatprep.subr.mxu0 0.0
      %823 = vmatpush1.xpose.msra.mxu0 0.0
      %824 = vmatprep.subr.mxu0 0.0
      %825 = vmatpush1.xpose.msra.mxu0 0.0
      %826 = vmatprep.subr.mxu0 0.0
      %827 = vmatpush1.xpose.msra.mxu0 0.0
      %828 = vmatprep.subr.mxu0 0.0
      %829 = vmatpush1.xpose.msra.mxu0 0.0
      %830 = vmatprep.subr.mxu0 0.0
      %831 = vmatpush1.xpose.msra.mxu0 0.0
      %832 = vmatprep.subr.mxu0 0.0
      %833 = vmatpush1.xpose.msra.mxu0 0.0
      %834 = vmatprep.subr.mxu0 0.0
      %835 = vmatpush1.xpose.msra.mxu0 0.0
      %836 = vmatprep.subr.mxu0 0.0
      %837 = vmatpush1.xpose.msra.mxu0 %v804
      %838 = vmatprep.subr.mxu0 0.0
      %839 = vmatpush2.xpose.msra.mxu0 0.0
      %840 = vmatprep.subr.mxu0 0.0
      %841 = vmatpush2.xpose.msra.mxu0 0.0
      %842 = vmatprep.subr.mxu0 0.0
      %843 = vmatpush2.xpose.msra.mxu0 0.0
      %844 = vmatprep.subr.mxu0 0.0
      %845 = vmatpush2.xpose.msra.mxu0 0.0
      %846 = vmatprep.subr.mxu0 0.0
      %847 = vmatpush2.xpose.msra.mxu0 0.0
      %848 = vmatprep.subr.mxu0 0.0
      %849 = vmatpush2.xpose.msra.mxu0 0.0
      %850 = vmatprep.subr.mxu0 0.0
      %851 = vmatpush2.xpose.msra.mxu0 0.0
      %852 = vmatprep.subr.mxu0 0.0
      %853 = vmatpush2.xpose.msra.mxu0 0.0
      %854 = vmatprep.subr.mxu0 0.0
      %855 = vmatpush2.xpose.msra.mxu0 0.0
      %856 = vmatprep.subr.mxu0 0.0
      %857 = vmatpush2.xpose.msra.mxu0 0.0
      %858 = vmatprep.subr.mxu0 0.0
      %859 = vmatpush2.xpose.msra.mxu0 0.0
      %860 = vmatprep.subr.mxu0 0.0
      %861 = vmatpush2.xpose.msra.mxu0 0.0
      %862 = vmatprep.subr.mxu0 0.0
      %863 = vmatpush2.xpose.msra.mxu0 0.0
      %864 = vmatprep.subr.mxu0 0.0
      %865 = vmatpush2.xpose.msra.mxu0 0.0
      %866 = vmatprep.subr.mxu0 0.0
      %867 = vmatpush2.xpose.msra.mxu0 0.0
      %868 = vmatprep.subr.mxu0 0.0
      %869 = vmatpush2.xpose.msra.mxu0 0.0
      %870 = vmatprep.mubr.f32.mxu0 0.0
      %871 = vmatmul.mubr.f32.gmra.mxu0 %v802
      %v872 = vpop.f32.mrf.mxu0
      %v873 = vadd.f32 %v631, %v872
      %v874 = vpop.f32.mrf.mxu0
      %875 = vdwg.mxu0
      %v876 = vsel %vm633, %v873, -inf
      %877 = vmax.xlane.f32.xlu0 %v876
      %v878 = vpop.xlane.xlu0 %877
      %v879 = vsub.f32 %v873, %v878
      %v880 = vmul.f32 %v879, 1.442695
      %v881 = vpow.pop %v880
      %v882 = vsel %vm633, %v881, 0.0
      %883 = vadd.xlane.f32.xlu0 %v882
      %v884 = vpop.xlane.xlu0 %883
      %v885 = vrcp.pop %v884
      %v886 = vmul.f32 %v881, %v885
      %887 = vrot.lane.b32.xlu0 %v612, 88
      %v888 = vpop.permute.xlu0 %887
      %v891 = vsel %vm633, %v886, 0
      %893 = vmatprep.subr.mxu0 0.0
      %894 = vmatpush1.msra.mxu0 0.0
      %895 = vmatprep.subr.mxu0 0.0
      %896 = vmatpush1.msra.mxu0 0.0
      %897 = vmatprep.subr.mxu0 0.0
      %898 = vmatpush1.msra.mxu0 0.0
      %899 = vmatprep.subr.mxu0 0.0
      %900 = vmatpush1.msra.mxu0 0.0
      %901 = vmatprep.subr.mxu0 0.0
      %902 = vmatpush1.msra.mxu0 0.0
      %903 = vmatprep.subr.mxu0 0.0
      %904 = vmatpush1.msra.mxu0 0.0
      %905 = vmatprep.subr.mxu0 0.0
      %906 = vmatpush1.msra.mxu0 0.0
      %907 = vmatprep.subr.mxu0 0.0
      %908 = vmatpush1.msra.mxu0 0.0
      %909 = vmatprep.subr.mxu0 0.0
      %910 = vmatpush1.msra.mxu0 0.0
      %911 = vmatprep.subr.mxu0 0.0
      %912 = vmatpush1.msra.mxu0 0.0
      %913 = vmatprep.subr.mxu0 0.0
      %914 = vmatpush1.msra.mxu0 0.0
      %915 = vmatprep.subr.mxu0 0.0
      %916 = vmatpush1.msra.mxu0 0.0
      %917 = vmatprep.subr.mxu0 0.0
      %918 = vmatpush1.msra.mxu0 0.0
      %919 = vmatprep.subr.mxu0 0.0
      %920 = vmatpush1.msra.mxu0 0.0
      %921 = vmatprep.subr.mxu0 0.0
      %922 = vmatpush1.msra.mxu0 0.0
      %923 = vmatprep.subr.mxu0 0.0
      %924 = vmatpush1.msra.mxu0 %v888
      %925 = vmatprep.subr.mxu0 0.0
      %926 = vmatpush2.msra.mxu0 0.0
      %927 = vmatprep.subr.mxu0 0.0
      %928 = vmatpush2.msra.mxu0 0.0
      %929 = vmatprep.subr.mxu0 0.0
      %930 = vmatpush2.msra.mxu0 0.0
      %931 = vmatprep.subr.mxu0 0.0
      %932 = vmatpush2.msra.mxu0 0.0
      %933 = vmatprep.subr.mxu0 0.0
      %934 = vmatpush2.msra.mxu0 0.0
      %935 = vmatprep.subr.mxu0 0.0
      %936 = vmatpush2.msra.mxu0 0.0
      %937 = vmatprep.subr.mxu0 0.0
      %938 = vmatpush2.msra.mxu0 0.0
      %939 = vmatprep.subr.mxu0 0.0
      %940 = vmatpush2.msra.mxu0 0.0
      %941 = vmatprep.subr.mxu0 0.0
      %942 = vmatpush2.msra.mxu0 0.0
      %943 = vmatprep.subr.mxu0 0.0
      %944 = vmatpush2.msra.mxu0 0.0
      %945 = vmatprep.subr.mxu0 0.0
      %946 = vmatpush2.msra.mxu0 0.0
      %947 = vmatprep.subr.mxu0 0.0
      %948 = vmatpush2.msra.mxu0 0.0
      %949 = vmatprep.subr.mxu0 0.0
      %950 = vmatpush2.msra.mxu0 0.0
      %951 = vmatprep.subr.mxu0 0.0
      %952 = vmatpush2.msra.mxu0 0.0
      %953 = vmatprep.subr.mxu0 0.0
      %954 = vmatpush2.msra.mxu0 0.0
      %955 = vmatprep.subr.mxu0 0.0
      %956 = vmatpush2.msra.mxu0 0.0
      %957 = vmatprep.mubr.f32.mxu0 0.0
      %958 = vmatmul.mubr.f32.gmra.mxu0 %v891
      %v959 = vpop.f32.mrf.mxu0
      %v960 = vadd.f32 0.0, %v959
      %v961 = vpop.f32.mrf.mxu0
      %962 = vdwg.mxu0
      %v963 = vld [vmem:[%s7 + $0x8] sm:$0xff]
      %v965 = vsel %vm633, %v960, 0
      %967 = vmatprep.subr.mxu0 0.0
      %968 = vmatpush1.msra.mxu0 0.0
      %969 = vmatprep.subr.mxu0 0.0
      %970 = vmatpush1.msra.mxu0 0.0
      %971 = vmatprep.subr.mxu0 0.0
      %972 = vmatpush1.msra.mxu0 0.0
      %973 = vmatprep.subr.mxu0 0.0
      %974 = vmatpush1.msra.mxu0 0.0
      %975 = vmatprep.subr.mxu0 0.0
      %976 = vmatpush1.msra.mxu0 0.0
      %977 = vmatprep.subr.mxu0 0.0
      %978 = vmatpush1.msra.mxu0 0.0
      %979 = vmatprep.subr.mxu0 0.0
      %980 = vmatpush1.msra.mxu0 0.0
      %981 = vmatprep.subr.mxu0 0.0
      %982 = vmatpush1.msra.mxu0 0.0
      %983 = vmatprep.subr.mxu0 0.0
      %984 = vmatpush1.msra.mxu0 0.0
      %985 = vmatprep.subr.mxu0 0.0
      %986 = vmatpush1.msra.mxu0 0.0
      %987 = vmatprep.subr.mxu0 0.0
      %988 = vmatpush1.msra.mxu0 0.0
      %989 = vmatprep.subr.mxu0 0.0
      %990 = vmatpush1.msra.mxu0 0.0
      %991 = vmatprep.subr.mxu0 0.0
      %992 = vmatpush1.msra.mxu0 0.0
      %993 = vmatprep.subr.mxu0 0.0
      %994 = vmatpush1.msra.mxu0 0.0
      %995 = vmatprep.subr.mxu0 0.0
      %996 = vmatpush1.msra.mxu0 0.0
      %997 = vmatprep.subr.mxu0 0.0
      %998 = vmatpush1.msra.mxu0 %v963
      %999 = vmatprep.subr.mxu0 0.0
      %1000 = vmatpush2.msra.mxu0 0.0
      %1001 = vmatprep.subr.mxu0 0.0
      %1002 = vmatpush2.msra.mxu0 0.0
      %1003 = vmatprep.subr.mxu0 0.0
      %1004 = vmatpush2.msra.mxu0 0.0
      %1005 = vmatprep.subr.mxu0 0.0
      %1006 = vmatpush2.msra.mxu0 0.0
      %1007 = vmatprep.subr.mxu0 0.0
      %1008 = vmatpush2.msra.mxu0 0.0
      %1009 = vmatprep.subr.mxu0 0.0
      %1010 = vmatpush2.msra.mxu0 0.0
      %1011 = vmatprep.subr.mxu0 0.0
      %1012 = vmatpush2.msra.mxu0 0.0
      %1013 = vmatprep.subr.mxu0 0.0
      %1014 = vmatpush2.msra.mxu0 0.0
      %1015 = vmatprep.subr.mxu0 0.0
      %1016 = vmatpush2.msra.mxu0 0.0
      %1017 = vmatprep.subr.mxu0 0.0
      %1018 = vmatpush2.msra.mxu0 0.0
      %1019 = vmatprep.subr.mxu0 0.0
      %1020 = vmatpush2.msra.mxu0 0.0
      %1021 = vmatprep.subr.mxu0 0.0
      %1022 = vmatpush2.msra.mxu0 0.0
      %1023 = vmatprep.subr.mxu0 0.0
      %1024 = vmatpush2.msra.mxu0 0.0
      %1025 = vmatprep.subr.mxu0 0.0
      %1026 = vmatpush2.msra.mxu0 0.0
      %1027 = vmatprep.subr.mxu0 0.0
      %1028 = vmatpush2.msra.mxu0 0.0
      %1029 = vmatprep.subr.mxu0 0.0
      %1030 = vmatpush2.msra.mxu0 0.0
      %1031 = vmatprep.mubr.f32.mxu0 0.0
      %1032 = vmatmul.mubr.f32.gmra.mxu0 %v965
      %v1033 = vpop.f32.mrf.mxu0
      %v1034 = vadd.f32 0.0, %v1033
      %v1035 = vpop.f32.mrf.mxu0
      %1036 = vdwg.mxu0
      %v1038 = vsel %vm633, %v794, 0
      %1040 = vmatprep.subr.mxu0 0.0
      %1041 = vmatpush1.msra.mxu0 0.0
      %1042 = vmatprep.subr.mxu0 0.0
      %1043 = vmatpush1.msra.mxu0 0.0
      %1044 = vmatprep.subr.mxu0 0.0
      %1045 = vmatpush1.msra.mxu0 0.0
      %1046 = vmatprep.subr.mxu0 0.0
      %1047 = vmatpush1.msra.mxu0 0.0
      %1048 = vmatprep.subr.mxu0 0.0
      %1049 = vmatpush1.msra.mxu0 0.0
      %1050 = vmatprep.subr.mxu0 0.0
      %1051 = vmatpush1.msra.mxu0 0.0
      %1052 = vmatprep.subr.mxu0 0.0
      %1053 = vmatpush1.msra.mxu0 0.0
      %1054 = vmatprep.subr.mxu0 0.0
      %1055 = vmatpush1.msra.mxu0 0.0
      %1056 = vmatprep.subr.mxu0 0.0
      %1057 = vmatpush1.msra.mxu0 0.0
      %1058 = vmatprep.subr.mxu0 0.0
      %1059 = vmatpush1.msra.mxu0 0.0
      %1060 = vmatprep.subr.mxu0 0.0
      %1061 = vmatpush1.msra.mxu0 0.0
      %1062 = vmatprep.subr.mxu0 0.0
      %1063 = vmatpush1.msra.mxu0 0.0
      %1064 = vmatprep.subr.mxu0 0.0
      %1065 = vmatpush1.msra.mxu0 0.0
      %1066 = vmatprep.subr.mxu0 0.0
      %1067 = vmatpush1.msra.mxu0 0.0
      %1068 = vmatprep.subr.mxu0 0.0
      %1069 = vmatpush1.msra.mxu0 0.0
      %1070 = vmatprep.subr.mxu0 0.0
      %1071 = vmatpush1.msra.mxu0 %v797
      %1072 = vmatprep.subr.mxu0 0.0
      %1073 = vmatpush2.msra.mxu0 0.0
      %1074 = vmatprep.subr.mxu0 0.0
      %1075 = vmatpush2.msra.mxu0 0.0
      %1076 = vmatprep.subr.mxu0 0.0
      %1077 = vmatpush2.msra.mxu0 0.0
      %1078 = vmatprep.subr.mxu0 0.0
      %1079 = vmatpush2.msra.mxu0 0.0
      %1080 = vmatprep.subr.mxu0 0.0
      %1081 = vmatpush2.msra.mxu0 0.0
      %1082 = vmatprep.subr.mxu0 0.0
      %1083 = vmatpush2.msra.mxu0 0.0
      %1084 = vmatprep.subr.mxu0 0.0
      %1085 = vmatpush2.msra.mxu0 0.0
      %1086 = vmatprep.subr.mxu0 0.0
      %1087 = vmatpush2.msra.mxu0 0.0
      %1088 = vmatprep.subr.mxu0 0.0
      %1089 = vmatpush2.msra.mxu0 0.0
      %1090 = vmatprep.subr.mxu0 0.0
      %1091 = vmatpush2.msra.mxu0 0.0
      %1092 = vmatprep.subr.mxu0 0.0
      %1093 = vmatpush2.msra.mxu0 0.0
      %1094 = vmatprep.subr.mxu0 0.0
      %1095 = vmatpush2.msra.mxu0 0.0
      %1096 = vmatprep.subr.mxu0 0.0
      %1097 = vmatpush2.msra.mxu0 0.0
      %1098 = vmatprep.subr.mxu0 0.0
      %1099 = vmatpush2.msra.mxu0 0.0
      %1100 = vmatprep.subr.mxu0 0.0
      %1101 = vmatpush2.msra.mxu0 0.0
      %1102 = vmatprep.subr.mxu0 0.0
      %1103 = vmatpush2.msra.mxu0 0.0
      %1104 = vmatprep.mubr.f32.mxu0 0.0
      %1105 = vmatmul.mubr.f32.gmra.mxu0 %v1038
      %v1106 = vpop.f32.mrf.mxu0
      %v1107 = vadd.f32 %v1034, %v1106
      %v1108 = vpop.f32.mrf.mxu0
      %1109 = vdwg.mxu0
      %1110 = vrot.lane.b32.xlu0 %v632, 112
      %v1111 = vpop.permute.xlu0 %1110
      %1112 = vrot.lane.b32.xlu0 %v612, 112
      %v1113 = vpop.permute.xlu0 %1112
      %v1114 = vsel %vm633, %v1111, 0
      %v1116 = vsel %vm633, %v1113, 0
      %1118 = vmatprep.subr.mxu0 0.0
      %1119 = vmatpush1.xpose.msra.mxu0 0.0
      %1120 = vmatprep.subr.mxu0 0.0
      %1121 = vmatpush1.xpose.msra.mxu0 0.0
      %1122 = vmatprep.subr.mxu0 0.0
      %1123 = vmatpush1.xpose.msra.mxu0 0.0
      %1124 = vmatprep.subr.mxu0 0.0
      %1125 = vmatpush1.xpose.msra.mxu0 0.0
      %1126 = vmatprep.subr.mxu0 0.0
      %1127 = vmatpush1.xpose.msra.mxu0 0.0
      %1128 = vmatprep.subr.mxu0 0.0
      %1129 = vmatpush1.xpose.msra.mxu0 0.0
      %1130 = vmatprep.subr.mxu0 0.0
      %1131 = vmatpush1.xpose.msra.mxu0 0.0
      %1132 = vmatprep.subr.mxu0 0.0
      %1133 = vmatpush1.xpose.msra.mxu0 0.0
      %1134 = vmatprep.subr.mxu0 0.0
      %1135 = vmatpush1.xpose.msra.mxu0 0.0
      %1136 = vmatprep.subr.mxu0 0.0
      %1137 = vmatpush1.xpose.msra.mxu0 0.0
      %1138 = vmatprep.subr.mxu0 0.0
      %1139 = vmatpush1.xpose.msra.mxu0 0.0
      %1140 = vmatprep.subr.mxu0 0.0
      %1141 = vmatpush1.xpose.msra.mxu0 0.0
      %1142 = vmatprep.subr.mxu0 0.0
      %1143 = vmatpush1.xpose.msra.mxu0 0.0
      %1144 = vmatprep.subr.mxu0 0.0
      %1145 = vmatpush1.xpose.msra.mxu0 0.0
      %1146 = vmatprep.subr.mxu0 0.0
      %1147 = vmatpush1.xpose.msra.mxu0 0.0
      %1148 = vmatprep.subr.mxu0 0.0
      %1149 = vmatpush1.xpose.msra.mxu0 %v1116
      %1150 = vmatprep.subr.mxu0 0.0
      %1151 = vmatpush2.xpose.msra.mxu0 0.0
      %1152 = vmatprep.subr.mxu0 0.0
      %1153 = vmatpush2.xpose.msra.mxu0 0.0
      %1154 = vmatprep.subr.mxu0 0.0
      %1155 = vmatpush2.xpose.msra.mxu0 0.0
      %1156 = vmatprep.subr.mxu0 0.0
      %1157 = vmatpush2.xpose.msra.mxu0 0.0
      %1158 = vmatprep.subr.mxu0 0.0
      %1159 = vmatpush2.xpose.msra.mxu0 0.0
      %1160 = vmatprep.subr.mxu0 0.0
      %1161 = vmatpush2.xpose.msra.mxu0 0.0
      %1162 = vmatprep.subr.mxu0 0.0
      %1163 = vmatpush2.xpose.msra.mxu0 0.0
      %1164 = vmatprep.subr.mxu0 0.0
      %1165 = vmatpush2.xpose.msra.mxu0 0.0
      %1166 = vmatprep.subr.mxu0 0.0
      %1167 = vmatpush2.xpose.msra.mxu0 0.0
      %1168 = vmatprep.subr.mxu0 0.0
      %1169 = vmatpush2.xpose.msra.mxu0 0.0
      %1170 = vmatprep.subr.mxu0 0.0
      %1171 = vmatpush2.xpose.msra.mxu0 0.0
      %1172 = vmatprep.subr.mxu0 0.0
      %1173 = vmatpush2.xpose.msra.mxu0 0.0
      %1174 = vmatprep.subr.mxu0 0.0
      %1175 = vmatpush2.xpose.msra.mxu0 0.0
      %1176 = vmatprep.subr.mxu0 0.0
      %1177 = vmatpush2.xpose.msra.mxu0 0.0
      %1178 = vmatprep.subr.mxu0 0.0
      %1179 = vmatpush2.xpose.msra.mxu0 0.0
      %1180 = vmatprep.subr.mxu0 0.0
      %1181 = vmatpush2.xpose.msra.mxu0 0.0
      %1182 = vmatprep.mubr.f32.mxu0 0.0
      %1183 = vmatmul.mubr.f32.gmra.mxu0 %v1114
      %v1184 = vpop.f32.mrf.mxu0
      %v1185 = vadd.f32 %v631, %v1184
      %v1186 = vpop.f32.mrf.mxu0
      %1187 = vdwg.mxu0
      %v1188 = vsel %vm633, %v1185, -inf
      %1189 = vmax.xlane.f32.xlu0 %v1188
      %v1190 = vpop.xlane.xlu0 %1189
      %v1191 = vsub.f32 %v1185, %v1190
      %v1192 = vmul.f32 %v1191, 1.442695
      %v1193 = vpow.pop %v1192
      %v1194 = vsel %vm633, %v1193, 0.0
      %1195 = vadd.xlane.f32.xlu0 %v1194
      %v1196 = vpop.xlane.xlu0 %1195
      %v1197 = vrcp.pop %v1196
      %v1198 = vmul.f32 %v1193, %v1197
      %1199 = vrot.lane.b32.xlu0 %v612, 80
      %v1200 = vpop.permute.xlu0 %1199
      %v1203 = vsel %vm633, %v1198, 0
      %1205 = vmatprep.subr.mxu0 0.0
      %1206 = vmatpush1.msra.mxu0 0.0
      %1207 = vmatprep.subr.mxu0 0.0
      %1208 = vmatpush1.msra.mxu0 0.0
      %1209 = vmatprep.subr.mxu0 0.0
      %1210 = vmatpush1.msra.mxu0 0.0
      %1211 = vmatprep.subr.mxu0 0.0
      %1212 = vmatpush1.msra.mxu0 0.0
      %1213 = vmatprep.subr.mxu0 0.0
      %1214 = vmatpush1.msra.mxu0 0.0
      %1215 = vmatprep.subr.mxu0 0.0
      %1216 = vmatpush1.msra.mxu0 0.0
      %1217 = vmatprep.subr.mxu0 0.0
      %1218 = vmatpush1.msra.mxu0 0.0
      %1219 = vmatprep.subr.mxu0 0.0
      %1220 = vmatpush1.msra.mxu0 0.0
      %1221 = vmatprep.subr.mxu0 0.0
      %1222 = vmatpush1.msra.mxu0 0.0
      %1223 = vmatprep.subr.mxu0 0.0
      %1224 = vmatpush1.msra.mxu0 0.0
      %1225 = vmatprep.subr.mxu0 0.0
      %1226 = vmatpush1.msra.mxu0 0.0
      %1227 = vmatprep.subr.mxu0 0.0
      %1228 = vmatpush1.msra.mxu0 0.0
      %1229 = vmatprep.subr.mxu0 0.0
      %1230 = vmatpush1.msra.mxu0 0.0
      %1231 = vmatprep.subr.mxu0 0.0
      %1232 = vmatpush1.msra.mxu0 0.0
      %1233 = vmatprep.subr.mxu0 0.0
      %1234 = vmatpush1.msra.mxu0 0.0
      %1235 = vmatprep.subr.mxu0 0.0
      %1236 = vmatpush1.msra.mxu0 %v1200
      %1237 = vmatprep.subr.mxu0 0.0
      %1238 = vmatpush2.msra.mxu0 0.0
      %1239 = vmatprep.subr.mxu0 0.0
      %1240 = vmatpush2.msra.mxu0 0.0
      %1241 = vmatprep.subr.mxu0 0.0
      %1242 = vmatpush2.msra.mxu0 0.0
      %1243 = vmatprep.subr.mxu0 0.0
      %1244 = vmatpush2.msra.mxu0 0.0
      %1245 = vmatprep.subr.mxu0 0.0
      %1246 = vmatpush2.msra.mxu0 0.0
      %1247 = vmatprep.subr.mxu0 0.0
      %1248 = vmatpush2.msra.mxu0 0.0
      %1249 = vmatprep.subr.mxu0 0.0
      %1250 = vmatpush2.msra.mxu0 0.0
      %1251 = vmatprep.subr.mxu0 0.0
      %1252 = vmatpush2.msra.mxu0 0.0
      %1253 = vmatprep.subr.mxu0 0.0
      %1254 = vmatpush2.msra.mxu0 0.0
      %1255 = vmatprep.subr.mxu0 0.0
      %1256 = vmatpush2.msra.mxu0 0.0
      %1257 = vmatprep.subr.mxu0 0.0
      %1258 = vmatpush2.msra.mxu0 0.0
      %1259 = vmatprep.subr.mxu0 0.0
      %1260 = vmatpush2.msra.mxu0 0.0
      %1261 = vmatprep.subr.mxu0 0.0
      %1262 = vmatpush2.msra.mxu0 0.0
      %1263 = vmatprep.subr.mxu0 0.0
      %1264 = vmatpush2.msra.mxu0 0.0
      %1265 = vmatprep.subr.mxu0 0.0
      %1266 = vmatpush2.msra.mxu0 0.0
      %1267 = vmatprep.subr.mxu0 0.0
      %1268 = vmatpush2.msra.mxu0 0.0
      %1269 = vmatprep.mubr.f32.mxu0 0.0
      %1270 = vmatmul.mubr.f32.gmra.mxu0 %v1203
      %v1271 = vpop.f32.mrf.mxu0
      %v1272 = vadd.f32 0.0, %v1271
      %v1273 = vpop.f32.mrf.mxu0
      %1274 = vdwg.mxu0
      %v1275 = vld [vmem:[%s7 + $0x10] sm:$0xff]
      %v1277 = vsel %vm633, %v1272, 0
      %1279 = vmatprep.subr.mxu0 0.0
      %1280 = vmatpush1.msra.mxu0 0.0
      %1281 = vmatprep.subr.mxu0 0.0
      %1282 = vmatpush1.msra.mxu0 0.0
      %1283 = vmatprep.subr.mxu0 0.0
      %1284 = vmatpush1.msra.mxu0 0.0
      %1285 = vmatprep.subr.mxu0 0.0
      %1286 = vmatpush1.msra.mxu0 0.0
      %1287 = vmatprep.subr.mxu0 0.0
      %1288 = vmatpush1.msra.mxu0 0.0
      %1289 = vmatprep.subr.mxu0 0.0
      %1290 = vmatpush1.msra.mxu0 0.0
      %1291 = vmatprep.subr.mxu0 0.0
      %1292 = vmatpush1.msra.mxu0 0.0
      %1293 = vmatprep.subr.mxu0 0.0
      %1294 = vmatpush1.msra.mxu0 0.0
      %1295 = vmatprep.subr.mxu0 0.0
      %1296 = vmatpush1.msra.mxu0 0.0
      %1297 = vmatprep.subr.mxu0 0.0
      %1298 = vmatpush1.msra.mxu0 0.0
      %1299 = vmatprep.subr.mxu0 0.0
      %1300 = vmatpush1.msra.mxu0 0.0
      %1301 = vmatprep.subr.mxu0 0.0
      %1302 = vmatpush1.msra.mxu0 0.0
      %1303 = vmatprep.subr.mxu0 0.0
      %1304 = vmatpush1.msra.mxu0 0.0
      %1305 = vmatprep.subr.mxu0 0.0
      %1306 = vmatpush1.msra.mxu0 0.0
      %1307 = vmatprep.subr.mxu0 0.0
      %1308 = vmatpush1.msra.mxu0 0.0
      %1309 = vmatprep.subr.mxu0 0.0
      %1310 = vmatpush1.msra.mxu0 %v1275
      %1311 = vmatprep.subr.mxu0 0.0
      %1312 = vmatpush2.msra.mxu0 0.0
      %1313 = vmatprep.subr.mxu0 0.0
      %1314 = vmatpush2.msra.mxu0 0.0
      %1315 = vmatprep.subr.mxu0 0.0
      %1316 = vmatpush2.msra.mxu0 0.0
      %1317 = vmatprep.subr.mxu0 0.0
      %1318 = vmatpush2.msra.mxu0 0.0
      %1319 = vmatprep.subr.mxu0 0.0
      %1320 = vmatpush2.msra.mxu0 0.0
      %1321 = vmatprep.subr.mxu0 0.0
      %1322 = vmatpush2.msra.mxu0 0.0
      %1323 = vmatprep.subr.mxu0 0.0
      %1324 = vmatpush2.msra.mxu0 0.0
      %1325 = vmatprep.subr.mxu0 0.0
      %1326 = vmatpush2.msra.mxu0 0.0
      %1327 = vmatprep.subr.mxu0 0.0
      %1328 = vmatpush2.msra.mxu0 0.0
      %1329 = vmatprep.subr.mxu0 0.0
      %1330 = vmatpush2.msra.mxu0 0.0
      %1331 = vmatprep.subr.mxu0 0.0
      %1332 = vmatpush2.msra.mxu0 0.0
      %1333 = vmatprep.subr.mxu0 0.0
      %1334 = vmatpush2.msra.mxu0 0.0
      %1335 = vmatprep.subr.mxu0 0.0
      %1336 = vmatpush2.msra.mxu0 0.0
      %1337 = vmatprep.subr.mxu0 0.0
      %1338 = vmatpush2.msra.mxu0 0.0
      %1339 = vmatprep.subr.mxu0 0.0
      %1340 = vmatpush2.msra.mxu0 0.0
      %1341 = vmatprep.subr.mxu0 0.0
      %1342 = vmatpush2.msra.mxu0 0.0
      %1343 = vmatprep.mubr.f32.mxu0 0.0
      %1344 = vmatmul.mubr.f32.gmra.mxu0 %v1277
      %v1345 = vpop.f32.mrf.mxu0
      %v1346 = vadd.f32 0.0, %v1345
      %v1347 = vpop.f32.mrf.mxu0
      %1348 = vdwg.mxu0
      %v1349 = vadd.f32 %v1107, %v1346
      %1350 = vrot.lane.b32.xlu0 %v632, 104
      %v1351 = vpop.permute.xlu0 %1350
      %1352 = vrot.lane.b32.xlu0 %v612, 104
      %v1353 = vpop.permute.xlu0 %1352
      %v1354 = vsel %vm633, %v1351, 0
      %v1356 = vsel %vm633, %v1353, 0
      %1358 = vmatprep.subr.mxu0 0.0
      %1359 = vmatpush1.xpose.msra.mxu0 0.0
      %1360 = vmatprep.subr.mxu0 0.0
      %1361 = vmatpush1.xpose.msra.mxu0 0.0
      %1362 = vmatprep.subr.mxu0 0.0
      %1363 = vmatpush1.xpose.msra.mxu0 0.0
      %1364 = vmatprep.subr.mxu0 0.0
      %1365 = vmatpush1.xpose.msra.mxu0 0.0
      %1366 = vmatprep.subr.mxu0 0.0
      %1367 = vmatpush1.xpose.msra.mxu0 0.0
      %1368 = vmatprep.subr.mxu0 0.0
      %1369 = vmatpush1.xpose.msra.mxu0 0.0
      %1370 = vmatprep.subr.mxu0 0.0
      %1371 = vmatpush1.xpose.msra.mxu0 0.0
      %1372 = vmatprep.subr.mxu0 0.0
      %1373 = vmatpush1.xpose.msra.mxu0 0.0
      %1374 = vmatprep.subr.mxu0 0.0
      %1375 = vmatpush1.xpose.msra.mxu0 0.0
      %1376 = vmatprep.subr.mxu0 0.0
      %1377 = vmatpush1.xpose.msra.mxu0 0.0
      %1378 = vmatprep.subr.mxu0 0.0
      %1379 = vmatpush1.xpose.msra.mxu0 0.0
      %1380 = vmatprep.subr.mxu0 0.0
      %1381 = vmatpush1.xpose.msra.mxu0 0.0
      %1382 = vmatprep.subr.mxu0 0.0
      %1383 = vmatpush1.xpose.msra.mxu0 0.0
      %1384 = vmatprep.subr.mxu0 0.0
      %1385 = vmatpush1.xpose.msra.mxu0 0.0
      %1386 = vmatprep.subr.mxu0 0.0
      %1387 = vmatpush1.xpose.msra.mxu0 0.0
      %1388 = vmatprep.subr.mxu0 0.0
      %1389 = vmatpush1.xpose.msra.mxu0 %v1356
      %1390 = vmatprep.subr.mxu0 0.0
      %1391 = vmatpush2.xpose.msra.mxu0 0.0
      %1392 = vmatprep.subr.mxu0 0.0
      %1393 = vmatpush2.xpose.msra.mxu0 0.0
      %1394 = vmatprep.subr.mxu0 0.0
      %1395 = vmatpush2.xpose.msra.mxu0 0.0
      %1396 = vmatprep.subr.mxu0 0.0
      %1397 = vmatpush2.xpose.msra.mxu0 0.0
      %1398 = vmatprep.subr.mxu0 0.0
      %1399 = vmatpush2.xpose.msra.mxu0 0.0
      %1400 = vmatprep.subr.mxu0 0.0
      %1401 = vmatpush2.xpose.msra.mxu0 0.0
      %1402 = vmatprep.subr.mxu0 0.0
      %1403 = vmatpush2.xpose.msra.mxu0 0.0
      %1404 = vmatprep.subr.mxu0 0.0
      %1405 = vmatpush2.xpose.msra.mxu0 0.0
      %1406 = vmatprep.subr.mxu0 0.0
      %1407 = vmatpush2.xpose.msra.mxu0 0.0
      %1408 = vmatprep.subr.mxu0 0.0
      %1409 = vmatpush2.xpose.msra.mxu0 0.0
      %1410 = vmatprep.subr.mxu0 0.0
      %1411 = vmatpush2.xpose.msra.mxu0 0.0
      %1412 = vmatprep.subr.mxu0 0.0
      %1413 = vmatpush2.xpose.msra.mxu0 0.0
      %1414 = vmatprep.subr.mxu0 0.0
      %1415 = vmatpush2.xpose.msra.mxu0 0.0
      %1416 = vmatprep.subr.mxu0 0.0
      %1417 = vmatpush2.xpose.msra.mxu0 0.0
      %1418 = vmatprep.subr.mxu0 0.0
      %1419 = vmatpush2.xpose.msra.mxu0 0.0
      %1420 = vmatprep.subr.mxu0 0.0
      %1421 = vmatpush2.xpose.msra.mxu0 0.0
      %1422 = vmatprep.mubr.f32.mxu0 0.0
      %1423 = vmatmul.mubr.f32.gmra.mxu0 %v1354
      %v1424 = vpop.f32.mrf.mxu0
      %v1425 = vadd.f32 %v631, %v1424
      %v1426 = vpop.f32.mrf.mxu0
      %1427 = vdwg.mxu0
      %v1428 = vsel %vm633, %v1425, -inf
      %1429 = vmax.xlane.f32.xlu0 %v1428
      %v1430 = vpop.xlane.xlu0 %1429
      %v1431 = vsub.f32 %v1425, %v1430
      %v1432 = vmul.f32 %v1431, 1.442695
      %v1433 = vpow.pop %v1432
      %v1434 = vsel %vm633, %v1433, 0.0
      %1435 = vadd.xlane.f32.xlu0 %v1434
      %v1436 = vpop.xlane.xlu0 %1435
      %v1437 = vrcp.pop %v1436
      %v1438 = vmul.f32 %v1433, %v1437
      %1439 = vrot.lane.b32.xlu0 %v612, 72
      %v1440 = vpop.permute.xlu0 %1439
      %v1443 = vsel %vm633, %v1438, 0
      %1445 = vmatprep.subr.mxu0 0.0
      %1446 = vmatpush1.msra.mxu0 0.0
      %1447 = vmatprep.subr.mxu0 0.0
      %1448 = vmatpush1.msra.mxu0 0.0
      %1449 = vmatprep.subr.mxu0 0.0
      %1450 = vmatpush1.msra.mxu0 0.0
      %1451 = vmatprep.subr.mxu0 0.0
      %1452 = vmatpush1.msra.mxu0 0.0
      %1453 = vmatprep.subr.mxu0 0.0
      %1454 = vmatpush1.msra.mxu0 0.0
      %1455 = vmatprep.subr.mxu0 0.0
      %1456 = vmatpush1.msra.mxu0 0.0
      %1457 = vmatprep.subr.mxu0 0.0
      %1458 = vmatpush1.msra.mxu0 0.0
      %1459 = vmatprep.subr.mxu0 0.0
      %1460 = vmatpush1.msra.mxu0 0.0
      %1461 = vmatprep.subr.mxu0 0.0
      %1462 = vmatpush1.msra.mxu0 0.0
      %1463 = vmatprep.subr.mxu0 0.0
      %1464 = vmatpush1.msra.mxu0 0.0
      %1465 = vmatprep.subr.mxu0 0.0
      %1466 = vmatpush1.msra.mxu0 0.0
      %1467 = vmatprep.subr.mxu0 0.0
      %1468 = vmatpush1.msra.mxu0 0.0
      %1469 = vmatprep.subr.mxu0 0.0
      %1470 = vmatpush1.msra.mxu0 0.0
      %1471 = vmatprep.subr.mxu0 0.0
      %1472 = vmatpush1.msra.mxu0 0.0
      %1473 = vmatprep.subr.mxu0 0.0
      %1474 = vmatpush1.msra.mxu0 0.0
      %1475 = vmatprep.subr.mxu0 0.0
      %1476 = vmatpush1.msra.mxu0 %v1440
      %1477 = vmatprep.subr.mxu0 0.0
      %1478 = vmatpush2.msra.mxu0 0.0
      %1479 = vmatprep.subr.mxu0 0.0
      %1480 = vmatpush2.msra.mxu0 0.0
      %1481 = vmatprep.subr.mxu0 0.0
      %1482 = vmatpush2.msra.mxu0 0.0
      %1483 = vmatprep.subr.mxu0 0.0
      %1484 = vmatpush2.msra.mxu0 0.0
      %1485 = vmatprep.subr.mxu0 0.0
      %1486 = vmatpush2.msra.mxu0 0.0
      %1487 = vmatprep.subr.mxu0 0.0
      %1488 = vmatpush2.msra.mxu0 0.0
      %1489 = vmatprep.subr.mxu0 0.0
      %1490 = vmatpush2.msra.mxu0 0.0
      %1491 = vmatprep.subr.mxu0 0.0
      %1492 = vmatpush2.msra.mxu0 0.0
      %1493 = vmatprep.subr.mxu0 0.0
      %1494 = vmatpush2.msra.mxu0 0.0
      %1495 = vmatprep.subr.mxu0 0.0
      %1496 = vmatpush2.msra.mxu0 0.0
      %1497 = vmatprep.subr.mxu0 0.0
      %1498 = vmatpush2.msra.mxu0 0.0
      %1499 = vmatprep.subr.mxu0 0.0
      %1500 = vmatpush2.msra.mxu0 0.0
      %1501 = vmatprep.subr.mxu0 0.0
      %1502 = vmatpush2.msra.mxu0 0.0
      %1503 = vmatprep.subr.mxu0 0.0
      %1504 = vmatpush2.msra.mxu0 0.0
      %1505 = vmatprep.subr.mxu0 0.0
      %1506 = vmatpush2.msra.mxu0 0.0
      %1507 = vmatprep.subr.mxu0 0.0
      %1508 = vmatpush2.msra.mxu0 0.0
      %1509 = vmatprep.mubr.f32.mxu0 0.0
      %1510 = vmatmul.mubr.f32.gmra.mxu0 %v1443
      %v1511 = vpop.f32.mrf.mxu0
      %v1512 = vadd.f32 0.0, %v1511
      %v1513 = vpop.f32.mrf.mxu0
      %1514 = vdwg.mxu0
      %v1515 = vld [vmem:[%s7 + $0x18] sm:$0xff]
      %v1517 = vsel %vm633, %v1512, 0
      %1519 = vmatprep.subr.mxu0 0.0
      %1520 = vmatpush1.msra.mxu0 0.0
      %1521 = vmatprep.subr.mxu0 0.0
      %1522 = vmatpush1.msra.mxu0 0.0
      %1523 = vmatprep.subr.mxu0 0.0
      %1524 = vmatpush1.msra.mxu0 0.0
      %1525 = vmatprep.subr.mxu0 0.0
      %1526 = vmatpush1.msra.mxu0 0.0
      %1527 = vmatprep.subr.mxu0 0.0
      %1528 = vmatpush1.msra.mxu0 0.0
      %1529 = vmatprep.subr.mxu0 0.0
      %1530 = vmatpush1.msra.mxu0 0.0
      %1531 = vmatprep.subr.mxu0 0.0
      %1532 = vmatpush1.msra.mxu0 0.0
      %1533 = vmatprep.subr.mxu0 0.0
      %1534 = vmatpush1.msra.mxu0 0.0
      %1535 = vmatprep.subr.mxu0 0.0
      %1536 = vmatpush1.msra.mxu0 0.0
      %1537 = vmatprep.subr.mxu0 0.0
      %1538 = vmatpush1.msra.mxu0 0.0
      %1539 = vmatprep.subr.mxu0 0.0
      %1540 = vmatpush1.msra.mxu0 0.0
      %1541 = vmatprep.subr.mxu0 0.0
      %1542 = vmatpush1.msra.mxu0 0.0
      %1543 = vmatprep.subr.mxu0 0.0
      %1544 = vmatpush1.msra.mxu0 0.0
      %1545 = vmatprep.subr.mxu0 0.0
      %1546 = vmatpush1.msra.mxu0 0.0
      %1547 = vmatprep.subr.mxu0 0.0
      %1548 = vmatpush1.msra.mxu0 0.0
      %1549 = vmatprep.subr.mxu0 0.0
      %1550 = vmatpush1.msra.mxu0 %v1515
      %1551 = vmatprep.subr.mxu0 0.0
      %1552 = vmatpush2.msra.mxu0 0.0
      %1553 = vmatprep.subr.mxu0 0.0
      %1554 = vmatpush2.msra.mxu0 0.0
      %1555 = vmatprep.subr.mxu0 0.0
      %1556 = vmatpush2.msra.mxu0 0.0
      %1557 = vmatprep.subr.mxu0 0.0
      %1558 = vmatpush2.msra.mxu0 0.0
      %1559 = vmatprep.subr.mxu0 0.0
      %1560 = vmatpush2.msra.mxu0 0.0
      %1561 = vmatprep.subr.mxu0 0.0
      %1562 = vmatpush2.msra.mxu0 0.0
      %1563 = vmatprep.subr.mxu0 0.0
      %1564 = vmatpush2.msra.mxu0 0.0
      %1565 = vmatprep.subr.mxu0 0.0
      %1566 = vmatpush2.msra.mxu0 0.0
      %1567 = vmatprep.subr.mxu0 0.0
      %1568 = vmatpush2.msra.mxu0 0.0
      %1569 = vmatprep.subr.mxu0 0.0
      %1570 = vmatpush2.msra.mxu0 0.0
      %1571 = vmatprep.subr.mxu0 0.0
      %1572 = vmatpush2.msra.mxu0 0.0
      %1573 = vmatprep.subr.mxu0 0.0
      %1574 = vmatpush2.msra.mxu0 0.0
      %1575 = vmatprep.subr.mxu0 0.0
      %1576 = vmatpush2.msra.mxu0 0.0
      %1577 = vmatprep.subr.mxu0 0.0
      %1578 = vmatpush2.msra.mxu0 0.0
      %1579 = vmatprep.subr.mxu0 0.0
      %1580 = vmatpush2.msra.mxu0 0.0
      %1581 = vmatprep.subr.mxu0 0.0
      %1582 = vmatpush2.msra.mxu0 0.0
      %1583 = vmatprep.mubr.f32.mxu0 0.0
      %1584 = vmatmul.mubr.f32.gmra.mxu0 %v1517
      %v1585 = vpop.f32.mrf.mxu0
      %v1586 = vadd.f32 0.0, %v1585
      %v1587 = vpop.f32.mrf.mxu0
      %1588 = vdwg.mxu0
      %v1589 = vadd.f32 %v1349, %v1586
      %v1590 = vld [vmem:[%s8] sm:$0x1]
      %v1592 = vlaneseq
      %v1593 = vshrl.u32 %v1592, 7
      %v1594 = vsub.s32 0, %v1593
      %v1595 = vrot.slane %v1590, %v1594
      %v1597 = vadd.f32 %v1589, %v1595
      %v1598 = vadd.f32 %v1597, %v444
      %v1599 = vsel %vm457, %v1598, 0.0
      %1600 = vadd.xlane.f32.xlu0 %v1599
      %v1601 = vpop.xlane.xlu0 %1600
      %v1602 = vrcp.pop 32.0
      %v1603 = vmul.f32 %v1601, %v1602
      %v1604 = vsub.f32 %v1598, %v1603
      %v1605 = vmul.f32 %v1604, %v1604
      %v1606 = vsel %vm457, %v1605, 0.0
      %1607 = vadd.xlane.f32.xlu0 %v1606
      %v1608 = vpop.xlane.xlu0 %1607
      %v1609 = vmul.f32 %v1608, %v1602
      %v1610 = vadd.f32 %v1609, 1e-05
      %v1611 = vrsqrt.pop %v1610
      %v1612 = vmul.f32 %v1604, %v1611
      %v1613 = vld [vmem:[%s9] sm:$0x1]
      %v1615 = vlaneseq
      %v1616 = vshrl.u32 %v1615, 7
      %v1617 = vsub.s32 0, %v1616
      %v1618 = vrot.slane %v1613, %v1617
      %v1620 = vmul.f32 %v1612, %v1618
      %v1621 = vld [vmem:[%s10] sm:$0x1]
      %v1623 = vlaneseq
      %v1624 = vshrl.u32 %v1623, 7
      %v1625 = vsub.s32 0, %v1624
      %v1626 = vrot.slane %v1621, %v1625
      %v1628 = vadd.f32 %v1620, %v1626
      %1629 = vst.msk [vmem:[%s443] sm:$0xff] %vm457, %v1628
      %p1630 = scmp.lt.s32.totalorder %s26, 1
      %s1631 = scalar_select %p1630, %s26, 1
      %p1632 = scmp.lt.s32.totalorder %s27, 0
      %s1633 = scalar_select %p1632, %s27, 0
      %s1634 = sadd.s32 %s1633, %s1631
      %s1635 = smul.addr %s1634, 8
      %s1636 = scalar_lea.vmem %s11, %s1635
      // Predicated region
      $region65: #{transformer_forward.9} parent=63 // pred_check
        %p1637 = pneg %p302
      $region66: #{transformer_forward.9} parent=63 // pred_check_branch
        %1639 = sbr.rel (%p1637) target = $region68
      $region67: #{transformer_forward.9} parent=63 // pred_region
        _
      $region68: #{transformer_forward.9} parent=63 // pred_fallthru
        _
    $region64: #{transformer_forward.9} parent=5 // pred_fallthru
      _
    %p1640 = scmp.le.s32.totalorder 2, %s17
    // Predicated region
    $region69: #{transformer_forward.9} parent=5 // pred_check
      %p1641 = pneg %p1640
    $region70: #{transformer_forward.9} parent=5 // pred_check_branch
      %1643 = sbr.rel (%p1641) target = $region72
    $region71: #{transformer_forward.9} parent=5 // pred_region
      %s1644 = ssub.s32 %s17, 2
      // Predicated region
      $region73: #{transformer_forward.9} parent=71 // pred_check
        %p1645 = pneg %p308
      $region74: #{transformer_forward.9} parent=71 // pred_check_branch
        %1647 = sbr.rel (%p1645) target = $region76
      $region75: #{transformer_forward.9} parent=71 // pred_region
        %p1648 = scmp.lt.s32.totalorder %s28, 1
        %s1649 = scalar_select %p1648, %s28, 1
        %p1650 = scmp.lt.s32.totalorder %s29, 0
        %s1651 = scalar_select %p1650, %s29, 0
        %s1652 = sadd.s32 %s1651, %s1649
        %s1653 = smul.addr %s1652, 8
        %s1654 = scalar_lea.vmem %s11, %s1653
      $region76: #{transformer_forward.9} parent=71 // pred_fallthru
        _
    $region72: #{transformer_forward.9} parent=5 // pred_fallthru
      _
  $region6: #{transformer_forward.9} parent=0 // loop_footer
    %s21 = sadd.s32 1, %s17
  $region7: #{transformer_forward.9} parent=0 // loop_footer_branch
    %16 = sbr.rel target = $region3
  $region8: #{transformer_forward.9} parent=0 // loop_exit
    _

// kernel: transformer_forward.15
$region0: #{transformer_forward.15}
  #allocation0 [shape = 'u32[]', space=smem, size = 0x4, offset = 0x4, fixed_abs, tag = 'smem constant byte address 0x4 - core index']
  #allocation1 [shape = 'u32[144,128]{1,0:T(1,128)}', space=vmem, size = 0x12000, scoped, tag = 'internal scratch']
  #allocation2 [shape = 'f32[16,128]{1,0:T(8,128)}', space=vmem, size = 0x2000, scoped, tag = 'scratch operand']
  %s0 = inlined_call_operand.vmem [shape: f32[16,32], index: 0, kind: input, shape index: {}]
  %s1 = inlined_call_operand.vmem [shape: f32[32,128], index: 1, kind: input, shape index: {}]
  %s2 = inlined_call_operand.vmem [shape: f32[1,128], index: 2, kind: input, shape index: {}]
  %s3 = inlined_call_operand.vmem [shape: f32[16,128], index: 3, kind: output, shape index: {}]
  %s4 = sld [smem:[#allocation0]]
  $region30: #{transformer_forward.15} parent=0
    _
  %s6 = ssub.s32 1, %s4
  %s7 = scalar_select 0, %s6, %s4
  // Predicated region
  $region2: #{transformer_forward.15} parent=0 // pred_check
    _
  $region3: #{transformer_forward.15} parent=0 // pred_check_branch
    %9 = sbr.rel (0) target = $region5
  $region4: #{transformer_forward.15} parent=0 // pred_region
    _
  $region5: #{transformer_forward.15} parent=0 // pred_fallthru
    _
  // Predicated region
  $region6: #{transformer_forward.15} parent=0 // pred_check
    _
  $region7: #{transformer_forward.15} parent=0 // pred_check_branch
    %11 = sbr.rel (0) target = $region9
  $region8: #{transformer_forward.15} parent=0 // pred_region
    _
  $region9: #{transformer_forward.15} parent=0 // pred_fallthru
    _
  // Predicated region
  $region10: #{transformer_forward.15} parent=0 // pred_check
    _
  $region11: #{transformer_forward.15} parent=0 // pred_check_branch
    %13 = sbr.rel (0) target = $region13
  $region12: #{transformer_forward.15} parent=0 // pred_region
    _
  $region13: #{transformer_forward.15} parent=0 // pred_fallthru
    _
  %p14 = scmp.eq.s32.totalorder 0, 0
  // Predicated region
  $region14: #{transformer_forward.15} parent=0 // pred_check
    %p15 = pneg %p14
  $region15: #{transformer_forward.15} parent=0 // pred_check_branch
    %17 = sbr.rel (%p15) target = $region17
  $region16: #{transformer_forward.15} parent=0 // pred_region
    %18 = vst [vmem:[#allocation2] sm:$0xff] 0.0
    %19 = vst [vmem:[#allocation2 + $0x8] sm:$0xff] 0.0
  $region17: #{transformer_forward.15} parent=0 // pred_fallthru
    _
  %v20 = vld [vmem:[#allocation2] sm:$0xff]
  %v21 = vld [vmem:[#allocation2 + $0x8] sm:$0xff]
  %v22 = vld [vmem:[%s0] sm:$0xff]
  %v23 = vld [vmem:[%s0 + $0x8] sm:$0xff]
  %v24 = vld [vmem:[%s1] sm:$0xff]
  %v25 = vld [vmem:[%s1 + $0x8] sm:$0xff]
  %v26 = vld [vmem:[%s1 + $0x10] sm:$0xff]
  %v27 = vld [vmem:[%s1 + $0x18] sm:$0xff]
  %vm28 = vcmask 261120
  %v30 = vsel %vm28, %v22, 0
  %v33 = vsel %vm28, %v23, 0
  %35 = vmatprep.subr.mxu0 0.0
  %36 = vmatpush1.msra.mxu0 0.0
  %37 = vmatprep.subr.mxu0 0.0
  %38 = vmatpush1.msra.mxu0 0.0
  %39 = vmatprep.subr.mxu0 0.0
  %40 = vmatpush1.msra.mxu0 0.0
  %41 = vmatprep.subr.mxu0 0.0
  %42 = vmatpush1.msra.mxu0 0.0
  %43 = vmatprep.subr.mxu0 0.0
  %44 = vmatpush1.msra.mxu0 0.0
  %45 = vmatprep.subr.mxu0 0.0
  %46 = vmatpush1.msra.mxu0 0.0
  %47 = vmatprep.subr.mxu0 0.0
  %48 = vmatpush1.msra.mxu0 0.0
  %49 = vmatprep.subr.mxu0 0.0
  %50 = vmatpush1.msra.mxu0 0.0
  %51 = vmatprep.subr.mxu0 0.0
  %52 = vmatpush1.msra.mxu0 0.0
  %53 = vmatprep.subr.mxu0 0.0
  %54 = vmatpush1.msra.mxu0 0.0
  %55 = vmatprep.subr.mxu0 0.0
  %56 = vmatpush1.msra.mxu0 0.0
  %57 = vmatprep.subr.mxu0 0.0
  %58 = vmatpush1.msra.mxu0 0.0
  %59 = vmatprep.subr.mxu0 0.0
  %60 = vmatpush1.msra.mxu0 %v27
  %61 = vmatprep.subr.mxu0 0.0
  %62 = vmatpush1.msra.mxu0 %v26
  %63 = vmatprep.subr.mxu0 0.0
  %64 = vmatpush1.msra.mxu0 %v25
  %65 = vmatprep.subr.mxu0 0.0
  %66 = vmatpush1.msra.mxu0 %v24
  %67 = vmatprep.subr.mxu0 0.0
  %68 = vmatpush2.msra.mxu0 0.0
  %69 = vmatprep.subr.mxu0 0.0
  %70 = vmatpush2.msra.mxu0 0.0
  %71 = vmatprep.subr.mxu0 0.0
  %72 = vmatpush2.msra.mxu0 0.0
  %73 = vmatprep.subr.mxu0 0.0
  %74 = vmatpush2.msra.mxu0 0.0
  %75 = vmatprep.subr.mxu0 0.0
  %76 = vmatpush2.msra.mxu0 0.0
  %77 = vmatprep.subr.mxu0 0.0
  %78 = vmatpush2.msra.mxu0 0.0
  %79 = vmatprep.subr.mxu0 0.0
  %80 = vmatpush2.msra.mxu0 0.0
  %81 = vmatprep.subr.mxu0 0.0
  %82 = vmatpush2.msra.mxu0 0.0
  %83 = vmatprep.subr.mxu0 0.0
  %84 = vmatpush2.msra.mxu0 0.0
  %85 = vmatprep.subr.mxu0 0.0
  %86 = vmatpush2.msra.mxu0 0.0
  %87 = vmatprep.subr.mxu0 0.0
  %88 = vmatpush2.msra.mxu0 0.0
  %89 = vmatprep.subr.mxu0 0.0
  %90 = vmatpush2.msra.mxu0 0.0
  %91 = vmatprep.subr.mxu0 0.0
  %92 = vmatpush2.msra.mxu0 0.0
  %93 = vmatprep.subr.mxu0 0.0
  %94 = vmatpush2.msra.mxu0 0.0
  %95 = vmatprep.subr.mxu0 0.0
  %96 = vmatpush2.msra.mxu0 0.0
  %97 = vmatprep.subr.mxu0 0.0
  %98 = vmatpush2.msra.mxu0 0.0
  %99 = vmatprep.mubr.f32.mxu0 0.0
  %100 = vmatmul.mubr.f32.gmra.mxu0 %v30
  %v101 = vpop.f32.mrf.mxu0
  %v102 = vadd.f32 0.0, %v101
  %v103 = vpop.f32.mrf.mxu0
  %104 = vmatprep.mubr.f32.mxu0 0.0
  %105 = vmatmul.mubr.f32.gmra.mxu0 %v33
  %v106 = vpop.f32.mrf.mxu0
  %v107 = vadd.f32 0.0, %v106
  %v108 = vpop.f32.mrf.mxu0
  %109 = vdwg.mxu0
  %v110 = vadd.f32 %v20, %v102
  %v111 = vadd.f32 %v21, %v107
  %112 = vst [vmem:[#allocation2] sm:$0xff] %v110
  %113 = vst [vmem:[#allocation2 + $0x8] sm:$0xff] %v111
  // Predicated region
  $region18: #{transformer_forward.15} parent=0 // pred_check
    %p114 = pneg %p14
  $region19: #{transformer_forward.15} parent=0 // pred_check_branch
    %116 = sbr.rel (%p114) target = $region21
  $region20: #{transformer_forward.15} parent=0 // pred_region
    %v117 = vld [vmem:[#allocation2] sm:$0xff]
    %v118 = vld [vmem:[#allocation2 + $0x8] sm:$0xff]
    %v119 = vld [vmem:[%s2] sm:$0x1]
    %v121 = vlaneseq
    %v122 = vshrl.u32 %v121, 7
    %v123 = vsub.s32 0, %v122
    %v124 = vrot.slane %v119, %v123
    %v126 = vadd.f32 %v117, %v124
    %v127 = vadd.f32 %v118, %v124
    %128 = vst [vmem:[%s3] sm:$0xff] %v126
    %129 = vst [vmem:[%s3 + $0x8] sm:$0xff] %v127
  $region21: #{transformer_forward.15} parent=0 // pred_fallthru
    _
  // Predicated region
  $region22: #{transformer_forward.15} parent=0 // pred_check
    _
  $region23: #{transformer_forward.15} parent=0 // pred_check_branch
    %131 = sbr.rel (0) target = $region25
  $region24: #{transformer_forward.15} parent=0 // pred_region
    _
  $region25: #{transformer_forward.15} parent=0 // pred_fallthru
    _
  // Predicated region
  $region26: #{transformer_forward.15} parent=0 // pred_check
    _
  $region27: #{transformer_forward.15} parent=0 // pred_check_branch
    %133 = sbr.rel (0) target = $region29
  $region28: #{transformer_forward.15} parent=0 // pred_region
    _
  $region29: #{transformer_forward.15} parent=0 // pred_fallthru
    _

</llo_original>
